<compile_context>
chip_gen: v6e
topology: v6e:2x2x1
jax: 0.10.0
libtpu: 0.0.40
codegen_flags: <defaults>
</compile_context>

<pallas_src>
import jax
import jax.numpy as jnp
import numpy as np
from jax.experimental import pallas as pl
from jax.experimental.pallas import tpu as pltpu

# ---------------- module hyper-parameters (small but shape-consistent) -------
PLANES = 8
BASE_WIDTH = 64
CARDINALITY = 4
D = int(np.floor(PLANES * (BASE_WIDTH / 64.0)))   # 8
C = CARDINALITY                                   # 4
DC = D * C                                        # 32  (branch-1 width)
DC2 = D * C // 2                                  # 16  (branch-2 width)
CCAT = DC + DC2                                   # 48  (concat width)
COUT = PLANES * 4                                 # 32  (expansion * planes)
INPLANES = COUT                                   # residual add requires this

N, H, W = 2, 8, 8                                 # batch, spatial
M = N * H * W                                     # 128 pixel rows
HALO = 16                                         # scratch halo (>= W+1, mult of 8)

assert H & (H - 1) == 0 and W & (W - 1) == 0      # in-kernel shift/and index math
LOG2_W = int(np.log2(W))


# ---------------------------- Pallas kernel ----------------------------------
def aligned_bottleneck_kernel(x_ref, w_in_ref, taps_a_ref, taps_b_ref,
                              wf_ref, aff_ref, o_ref, scr_ref):
    m = x_ref.shape[0]
    xf = x_ref[...]                                          # (M, INPLANES) f32

    # Zero only the halo rows once (the data region is fully overwritten by
    # every conv3x3 call). Protects against stale VMEM bits ever reaching the
    # masking/cast path.
    scr_ref[0:HALO, :] = jnp.zeros((HALO, CCAT), jnp.float32)
    scr_ref[HALO + m:HALO + m + HALO, :] = jnp.zeros((HALO, CCAT), jnp.float32)

    def conv3x3(act, taps_ref):
        """3x3/s1/p1 conv of act (M, CCAT) as 9 (CCAT, CCAT) bf16 tap matmuls."""
        scr_ref[HALO:HALO + m, :] = act          # single aligned store
        # Border predicates rebuilt per conv: only 4 (M, CCAT) masks live at a
        # time (vs. 9 precomputed masks before), combined per tap with one AND.
        idx = jax.lax.broadcasted_iota(jnp.int32, (m, CCAT), 0)
        hh = (idx >> LOG2_W) & (H - 1)           # row h of each pixel row
        ww = idx & (W - 1)                       # col w of each pixel row
        h_pred = {-1: hh > 0, 0: None, 1: hh < H - 1}
        w_pred = {-1: ww > 0, 0: None, 1: ww < W - 1}

        acc = None
        for k in range(9):
            dh, dw = k // 3 - 1, k % 3 - 1
            off = HALO + dh * W + dw             # static row offset
            patch = scr_ref[off:off + m, :]
            mh, mw = h_pred[dh], w_pred[dw]
            mask = mh if mw is None else (mw if mh is None else mh & mw)
            if mask is not None:                 # center tap (k=4) is unmasked
                patch = jnp.where(mask, patch, 0.0)
            contrib = jnp.dot(patch.astype(jnp.bfloat16), taps_ref[k],
                              preferred_element_type=jnp.float32)
            acc = contrib if acc is None else acc + contrib
        return acc

    # Both branch-entry 1x1 convs as one bf16 matmul; BN + ReLU via packed affine.
    pre = jnp.dot(xf.astype(jnp.bfloat16), w_in_ref[...],
                  preferred_element_type=jnp.float32)
    act1 = jnp.maximum(pre * aff_ref[0:1, :] + aff_ref[1:2, :], 0.0)

    # Joint 3x3: block-diagonal taps compute conv1_2 (cols :DC) and conv2_2
    # (cols DC:) in one pass over shared shifted patches.
    j = conv3x3(act1, taps_a_ref)                # [branch1 | branch2_mid]

    # bn2_2 + ReLU (identity on cols :DC, whose taps_b rows are zero anyway).
    act2 = jnp.maximum(j * aff_ref[2:3, :] + aff_ref[3:4, :], 0.0)
    b2 = conv3x3(act2, taps_b_ref)               # [0 | branch2]

    # concat(branch1, branch2) == j * sel + b2, then bn_concat + ReLU.
    cat = j * aff_ref[4:5, :] + b2
    cat = jnp.maximum(cat * aff_ref[5:6, :] + aff_ref[6:7, :], 0.0)

    # Final 1x1 conv (single 48->32 bf16 matmul), BN, residual add, ReLU.
    out = jnp.dot(cat.astype(jnp.bfloat16), wf_ref[...],
                  preferred_element_type=jnp.float32)
    out = out * aff_ref[7:8, :COUT] + aff_ref[8:9, :COUT]
    o_ref[...] = jnp.maximum(out + xf, 0.0)


def aligned_bottleneck_pallas(x_nhwc, packed):
    n, h, w, cin = x_nhwc.shape
    m = n * h * w
    xf = x_nhwc.reshape(m, cin)                  # channels on lanes
    out = pl.pallas_call(
        aligned_bottleneck_kernel,
        out_shape=jax.ShapeDtypeStruct((m, COUT), jnp.float32),
        scratch_shapes=[pltpu.VMEM((m + 2 * HALO, CCAT), jnp.float32)],
    )(xf, packed["w_in"], packed["taps_a"], packed["taps_b"],
      packed["wf"], packed["aff"])
    return out.reshape(n, h, w, COUT)


# ---------------------------- parameter setup --------------------------------
def expand_grouped_3x3(w_g, groups):
    """(Cout, Cin/g, 3, 3) grouped weights -> (9, Cin, Cout) block-diag taps."""
    cout, cig, kh, kw = w_g.shape
    cin = cig * groups
    cog = cout // groups
    dense = jnp.zeros((cout, cin, kh, kw), w_g.dtype)
    for g in range(groups):
        dense = dense.at[g * cog:(g + 1) * cog,
                         g * cig:(g + 1) * cig].set(w_g[g * cog:(g + 1) * cog])
    return jnp.transpose(dense, (2, 3, 1, 0)).reshape(kh * kw, cin, cout)


def make_params(key):
    ks = jax.random.split(key, 11)

    def nrm(k, shape, scale=0.1):
        return jax.random.normal(k, shape, dtype=jnp.float32) * scale

    def bn_fold(k, c):
        k1, k2, k3, k4 = jax.random.split(k, 4)
        gamma = jax.random.uniform(k1, (c,), minval=0.5, maxval=1.5)
        beta = nrm(k2, (c,))
        mean = nrm(k3, (c,))
        var = jax.random.uniform(k4, (c,), minval=0.5, maxval=1.5)
        scale = gamma / jnp.sqrt(var + 1e-5)
        bias = beta - mean * scale
        return (scale.reshape(1, c).astype(jnp.float32),
                bias.reshape(1, c).astype(jnp.float32))

    p = {}
    p["w11"] = nrm(ks[0], (INPLANES, DC))                     # conv1_1 (in,out)
    p["s11"], p["b11"] = bn_fold(ks[1], DC)                   # bn1_1
    p["w12_g"] = nrm(ks[2], (DC, DC // C, 3, 3))              # conv1_2 groups=C
    p["w21"] = nrm(ks[3], (INPLANES, DC2))                    # conv2_1
    p["s21"], p["b21"] = bn_fold(ks[4], DC2)                  # bn2_1
    p["w22_g"] = nrm(ks[5], (DC2, DC2 // (C // 2), 3, 3))     # conv2_2 g=C//2
    p["s22"], p["b22"] = bn_fold(ks[6], DC2)                  # bn2_2
    p["w23_g"] = nrm(ks[7], (DC2, DC2 // (C // 2), 3, 3))     # conv2_3 g=C//2
    scat, bcat = bn_fold(ks[8], CCAT)                         # bn_concat
    p["scat1"], p["bcat1"] = scat[:, :DC], bcat[:, :DC]
    p["scat2"], p["bcat2"] = scat[:, DC:], bcat[:, DC:]
    p["wf"] = nrm(ks[9], (CCAT, COUT))                        # conv (1x1)
    p["sf"], p["bf"] = bn_fold(ks[10], COUT)                  # bn
    return p


def pack_params(p):
    """Pack raw module parameters into the kernel's fused operand layout."""
    taps12 = expand_grouped_3x3(p["w12_g"], C)          # (9, DC, DC)
    taps22 = expand_grouped_3x3(p["w22_g"], C // 2)     # (9, DC2, DC2)
    taps23 = expand_grouped_3x3(p["w23_g"], C // 2)     # (9, DC2, DC2)

    # conv1_2 and conv2_2 share their input tensor -> block-diagonal taps.
    taps_a = jnp.zeros((9, CCAT, CCAT), jnp.float32)
    taps_a = taps_a.at[:, :DC, :DC].set(taps12)
    taps_a = taps_a.at[:, DC:, DC:].set(taps22)
    # conv2_3 reads cols DC: and writes cols DC: (makes the concat free).
    taps_b = jnp.zeros((9, CCAT, CCAT), jnp.float32)
    taps_b = taps_b.at[:, DC:, DC:].set(taps23)

    w_in = jnp.concatenate([p["w11"], p["w21"]], axis=1)        # (Cin, CCAT)

    ones_dc = jnp.ones((1, DC), jnp.float32)
    zeros_dc = jnp.zeros((1, DC), jnp.float32)
    zeros_dc2 = jnp.zeros((1, DC2), jnp.float32)
    aff = jnp.concatenate([
        jnp.concatenate([p["s11"], p["s21"]], axis=1),          # 0: entry scale
        jnp.concatenate([p["b11"], p["b21"]], axis=1),          # 1: entry bias
        jnp.concatenate([ones_dc, p["s22"]], axis=1),           # 2: bn2_2 scale
        jnp.concatenate([zeros_dc, p["b22"]], axis=1),          # 3: bn2_2 bias
        jnp.concatenate([ones_dc, zeros_dc2], axis=1),          # 4: branch1 select
        jnp.concatenate([p["scat1"], p["scat2"]], axis=1),      # 5: bn_concat scale
        jnp.concatenate([p["bcat1"], p["bcat2"]], axis=1),      # 6: bn_concat bias
        jnp.concatenate([p["sf"], zeros_dc2], axis=1),          # 7: final bn scale
        jnp.concatenate([p["bf"], zeros_dc2], axis=1),          # 8: final bn bias
    ], axis=0)                                                  # (9, CCAT) f32

    # Weights shipped as bf16 (halves the dominant DMA; f32 accumulation in
    # the kernel).  Element-wise affine table stays f32.
    return {"w_in": w_in.astype(jnp.bfloat16),
            "taps_a": taps_a.astype(jnp.bfloat16),
            "taps_b": taps_b.astype(jnp.bfloat16),
            "wf": p["wf"].astype(jnp.bfloat16),
            "aff": aff}


# --------------------------- pure-JAX reference ------------------------------
def aligned_bottleneck_ref(x, p):
    relu = lambda v: jnp.maximum(v, 0.0)

    def c1x1(v, wm):
        return jnp.einsum('nhwc,cd->nhwd', v, wm)

    def g3x3(v, w_g, groups):
        w_hwio = jnp.transpose(w_g, (2, 3, 1, 0))
        return jax.lax.conv_general_dilated(
            v, w_hwio, window_strides=(1, 1), padding=((1, 1), (1, 1)),
            dimension_numbers=('NHWC', 'HWIO', 'NHWC'),
            feature_group_count=groups)

    b1 = relu(c1x1(x, p["w11"]) * p["s11"] + p["b11"])
    b1 = g3x3(b1, p["w12_g"], C)
    b2 = relu(c1x1(x, p["w21"]) * p["s21"] + p["b21"])
    b2 = relu(g3x3(b2, p["w22_g"], C // 2) * p["s22"] + p["b22"])
    b2 = g3x3(b2, p["w23_g"], C // 2)
    out = jnp.concatenate([b1, b2], axis=-1)
    scat = jnp.concatenate([p["scat1"], p["scat2"]], axis=-1)
    bcat = jnp.concatenate([p["bcat1"], p["bcat2"]], axis=-1)
    out = relu(out * scat + bcat)
    out = c1x1(out, p["wf"]) * p["sf"] + p["bf"]
    return relu(out + x)


# ---------------------------------- main --------------------------------------
if __name__ == "__main__":
    key = jax.random.PRNGKey(0)
    kp, kx = jax.random.split(key)
    params = make_params(kp)
    packed = pack_params(params)

    # PyTorch-style NCHW input, transposed to the kernel's NHWC layout.
    x_nchw = jax.random.normal(kx, (N, INPLANES, H, W), dtype=jnp.float32)
    x_nhwc = jnp.transpose(x_nchw, (0, 2, 3, 1))

    out = aligned_bottleneck_pallas(x_nhwc, packed)
    out = jax.block_until_ready(out)

    ref = aligned_bottleneck_ref(x_nhwc, params)
    assert out.shape == (N, H, W, COUT), out.shape
    max_err = float(np.max(np.abs(np.asarray(out) - np.asarray(ref))))
    # bf16 weights/activations at the MXU (f32 accumulation, K <= 48 per dot,
    # four chained matmul stages) -> bf16-appropriate tolerance vs f32 reference.
    assert np.allclose(np.asarray(out), np.asarray(ref),
                       atol=2e-2, rtol=2e-2), f"max abs err = {max_err}"
    print("KERNEL_OK")
</pallas_src>

<mosaic_0001>
module attributes {stable_mosaic.version = 11 : i64} {
  func.func @aligned_bottleneck_kernel(%arg0: memref<128x32xf32, #tpu.memory_space<vmem>>, %arg1: memref<32x48xbf16, #tpu.memory_space<vmem>>, %arg2: memref<9x48x48xbf16, #tpu.memory_space<vmem>>, %arg3: memref<9x48x48xbf16, #tpu.memory_space<vmem>>, %arg4: memref<48x32xbf16, #tpu.memory_space<vmem>>, %arg5: memref<9x48xf32, #tpu.memory_space<vmem>>, %arg6: memref<128x32xf32, #tpu.memory_space<vmem>>, %arg7: memref<160x48xf32, #tpu.memory_space<vmem>>) attributes {dimension_semantics = [], scalar_prefetch = 0 : i64, scratch_operands = 1 : i64, tpu.core_type = #tpu.core_type<tc>} {
    %c0 = arith.constant 0 : index
    %c0_0 = arith.constant 0 : index
    %0 = vector.load %arg0[%c0, %c0_0] : memref<128x32xf32, #tpu.memory_space<vmem>>, vector<128x32xf32>
    %cst = arith.constant 0.000000e+00 : f32
    %1 = vector.broadcast %cst : f32 to vector<16x48xf32>
    %c0_1 = arith.constant 0 : index
    %c0_2 = arith.constant 0 : index
    %2 = vector.load %arg7[%c0_1, %c0_2] : memref<160x48xf32, #tpu.memory_space<vmem>>, vector<16x48xf32>
    tpu.vector_store %arg7[%c0_1, %c0_2], %1 {strides = array<i32>} : memref<160x48xf32, #tpu.memory_space<vmem>>, vector<16x48xf32>,
    %cst_3 = arith.constant 0.000000e+00 : f32
    %3 = vector.broadcast %cst_3 : f32 to vector<16x48xf32>
    %c144 = arith.constant 144 : index
    %c0_4 = arith.constant 0 : index
    %4 = vector.load %arg7[%c144, %c0_4] : memref<160x48xf32, #tpu.memory_space<vmem>>, vector<16x48xf32>
    tpu.vector_store %arg7[%c144, %c0_4], %3 {strides = array<i32>} : memref<160x48xf32, #tpu.memory_space<vmem>>, vector<16x48xf32>,
    %5 = arith.truncf %0 : vector<128x32xf32> to vector<128x32xbf16>
    %c0_5 = arith.constant 0 : index
    %c0_6 = arith.constant 0 : index
    %6 = vector.load %arg1[%c0_5, %c0_6] : memref<32x48xbf16, #tpu.memory_space<vmem>>, vector<32x48xbf16>
    %cst_7 = arith.constant dense<0.000000e+00> : vector<128x48xf32>
    %7 = tpu.matmul %5, %6, %cst_7 {dimension_numbers = #tpu.dot_dimension_numbers<[1], [0], [0], [1], [0, 0, 1, 1], [], []>} : vector<128x32xbf16>, vector<32x48xbf16>, vector<128x48xf32> -> vector<128x48xf32>
    %c0_8 = arith.constant 0 : index
    %c0_9 = arith.constant 0 : index
    %8 = vector.load %arg5[%c0_8, %c0_9] : memref<9x48xf32, #tpu.memory_space<vmem>>, vector<1x48xf32>
    %9 = vector.broadcast %8 : vector<1x48xf32> to vector<128x48xf32>
    %10 = arith.mulf %7, %9 : vector<128x48xf32>
    %c1 = arith.constant 1 : index
    %c0_10 = arith.constant 0 : index
    %11 = vector.load %arg5[%c1, %c0_10] : memref<9x48xf32, #tpu.memory_space<vmem>>, vector<1x48xf32>
    %12 = vector.broadcast %11 : vector<1x48xf32> to vector<128x48xf32>
    %13 = arith.addf %10, %12 : vector<128x48xf32>
    %cst_11 = arith.constant 0.000000e+00 : f32
    %14 = vector.broadcast %cst_11 : f32 to vector<128x48xf32>
    %15 = arith.maximumf %13, %14 : vector<128x48xf32>
    %c16 = arith.constant 16 : index
    %c0_12 = arith.constant 0 : index
    %16 = vector.load %arg7[%c16, %c0_12] : memref<160x48xf32, #tpu.memory_space<vmem>>, vector<128x48xf32>
    tpu.vector_store %arg7[%c16, %c0_12], %15 {strides = array<i32>} : memref<160x48xf32, #tpu.memory_space<vmem>>, vector<128x48xf32>,
    %17 = tpu.iota {dimensions = array<i32: 0>} : vector<128x48xi32>
    %c3_i32 = arith.constant 3 : i32
    %18 = vector.broadcast %c3_i32 : i32 to vector<128x48xi32>
    %19 = arith.shrsi %17, %18 : vector<128x48xi32>
    %c7_i32 = arith.constant 7 : i32
    %20 = vector.broadcast %c7_i32 : i32 to vector<128x48xi32>
    %21 = arith.andi %19, %20 : vector<128x48xi32>
    %c7_i32_13 = arith.constant 7 : i32
    %22 = vector.broadcast %c7_i32_13 : i32 to vector<128x48xi32>
    %23 = arith.andi %17, %22 : vector<128x48xi32>
    %c0_i32 = arith.constant 0 : i32
    %24 = vector.broadcast %c0_i32 : i32 to vector<128x48xi32>
    %25 = arith.cmpi sgt, %21, %24 : vector<128x48xi32>
    %c7_i32_14 = arith.constant 7 : i32
    %26 = vector.broadcast %c7_i32_14 : i32 to vector<128x48xi32>
    %27 = arith.cmpi slt, %21, %26 : vector<128x48xi32>
    %c0_i32_15 = arith.constant 0 : i32
    %28 = vector.broadcast %c0_i32_15 : i32 to vector<128x48xi32>
    %29 = arith.cmpi sgt, %23, %28 : vector<128x48xi32>
    %c7_i32_16 = arith.constant 7 : i32
    %30 = vector.broadcast %c7_i32_16 : i32 to vector<128x48xi32>
    %31 = arith.cmpi slt, %23, %30 : vector<128x48xi32>
    %c7 = arith.constant 7 : index
    %c0_17 = arith.constant 0 : index
    %32 = vector.load %arg7[%c7, %c0_17] : memref<160x48xf32, #tpu.memory_space<vmem>>, vector<128x48xf32>
    %33 = arith.andi %25, %29 : vector<128x48xi1>
    %cst_18 = arith.constant 0.000000e+00 : f32
    %34 = vector.broadcast %cst_18 : f32 to vector<128x48xf32>
    %35 = arith.select %33, %32, %34 : vector<128x48xi1>, vector<128x48xf32>
    %36 = arith.truncf %35 : vector<128x48xf32> to vector<128x48xbf16>
    %c0_19 = arith.constant 0 : index
    %c0_20 = arith.constant 0 : index
    %c0_21 = arith.constant 0 : index
    %37 = vector.load %arg2[%c0_19, %c0_20, %c0_21] : memref<9x48x48xbf16, #tpu.memory_space<vmem>>, vector<1x48x48xbf16>
    %38 = vector.shape_cast %37 : vector<1x48x48xbf16> to vector<48x48xbf16>
    %cst_22 = arith.constant dense<0.000000e+00> : vector<128x48xf32>
    %39 = tpu.matmul %36, %38, %cst_22 {dimension_numbers = #tpu.dot_dimension_numbers<[1], [0], [0], [1], [0, 0, 1, 1], [], []>} : vector<128x48xbf16>, vector<48x48xbf16>, vector<128x48xf32> -> vector<128x48xf32>
    %c8 = arith.constant 8 : index
    %c0_23 = arith.constant 0 : index
    %40 = vector.load %arg7[%c8, %c0_23] : memref<160x48xf32, #tpu.memory_space<vmem>>, vector<128x48xf32>
    %cst_24 = arith.constant 0.000000e+00 : f32
    %41 = vector.broadcast %cst_24 : f32 to vector<128x48xf32>
    %42 = arith.select %25, %40, %41 : vector<128x48xi1>, vector<128x48xf32>
    %43 = arith.truncf %42 : vector<128x48xf32> to vector<128x48xbf16>
    %c1_25 = arith.constant 1 : index
    %c0_26 = arith.constant 0 : index
    %c0_27 = arith.constant 0 : index
    %44 = vector.load %arg2[%c1_25, %c0_26, %c0_27] : memref<9x48x48xbf16, #tpu.memory_space<vmem>>, vector<1x48x48xbf16>
    %45 = vector.shape_cast %44 : vector<1x48x48xbf16> to vector<48x48xbf16>
    %cst_28 = arith.constant dense<0.000000e+00> : vector<128x48xf32>
    %46 = tpu.matmul %43, %45, %cst_28 {dimension_numbers = #tpu.dot_dimension_numbers<[1], [0], [0], [1], [0, 0, 1, 1], [], []>} : vector<128x48xbf16>, vector<48x48xbf16>, vector<128x48xf32> -> vector<128x48xf32>
    %47 = arith.addf %39, %46 : vector<128x48xf32>
    %c9 = arith.constant 9 : index
    %c0_29 = arith.constant 0 : index
    %48 = vector.load %arg7[%c9, %c0_29] : memref<160x48xf32, #tpu.memory_space<vmem>>, vector<128x48xf32>
    %49 = arith.andi %25, %31 : vector<128x48xi1>
    %cst_30 = arith.constant 0.000000e+00 : f32
    %50 = vector.broadcast %cst_30 : f32 to vector<128x48xf32>
    %51 = arith.select %49, %48, %50 : vector<128x48xi1>, vector<128x48xf32>
    %52 = arith.truncf %51 : vector<128x48xf32> to vector<128x48xbf16>
    %c2 = arith.constant 2 : index
    %c0_31 = arith.constant 0 : index
    %c0_32 = arith.constant 0 : index
    %53 = vector.load %arg2[%c2, %c0_31, %c0_32] : memref<9x48x48xbf16, #tpu.memory_space<vmem>>, vector<1x48x48xbf16>
    %54 = vector.shape_cast %53 : vector<1x48x48xbf16> to vector<48x48xbf16>
    %cst_33 = arith.constant dense<0.000000e+00> : vector<128x48xf32>
    %55 = tpu.matmul %52, %54, %cst_33 {dimension_numbers = #tpu.dot_dimension_numbers<[1], [0], [0], [1], [0, 0, 1, 1], [], []>} : vector<128x48xbf16>, vector<48x48xbf16>, vector<128x48xf32> -> vector<128x48xf32>
    %56 = arith.addf %47, %55 : vector<128x48xf32>
    %c15 = arith.constant 15 : index
    %c0_34 = arith.constant 0 : index
    %57 = vector.load %arg7[%c15, %c0_34] : memref<160x48xf32, #tpu.memory_space<vmem>>, vector<128x48xf32>
    %cst_35 = arith.constant 0.000000e+00 : f32
    %58 = vector.broadcast %cst_35 : f32 to vector<128x48xf32>
    %59 = arith.select %29, %57, %58 : vector<128x48xi1>, vector<128x48xf32>
    %60 = arith.truncf %59 : vector<128x48xf32> to vector<128x48xbf16>
    %c3 = arith.constant 3 : index
    %c0_36 = arith.constant 0 : index
    %c0_37 = arith.constant 0 : index
    %61 = vector.load %arg2[%c3, %c0_36, %c0_37] : memref<9x48x48xbf16, #tpu.memory_space<vmem>>, vector<1x48x48xbf16>
    %62 = vector.shape_cast %61 : vector<1x48x48xbf16> to vector<48x48xbf16>
    %cst_38 = arith.constant dense<0.000000e+00> : vector<128x48xf32>
    %63 = tpu.matmul %60, %62, %cst_38 {dimension_numbers = #tpu.dot_dimension_numbers<[1], [0], [0], [1], [0, 0, 1, 1], [], []>} : vector<128x48xbf16>, vector<48x48xbf16>, vector<128x48xf32> -> vector<128x48xf32>
    %64 = arith.addf %56, %63 : vector<128x48xf32>
    %c16_39 = arith.constant 16 : index
    %c0_40 = arith.constant 0 : index
    %65 = vector.load %arg7[%c16_39, %c0_40] : memref<160x48xf32, #tpu.memory_space<vmem>>, vector<128x48xf32>
    %66 = arith.truncf %65 : vector<128x48xf32> to vector<128x48xbf16>
    %c4 = arith.constant 4 : index
    %c0_41 = arith.constant 0 : index
    %c0_42 = arith.constant 0 : index
    %67 = vector.load %arg2[%c4, %c0_41, %c0_42] : memref<9x48x48xbf16, #tpu.memory_space<vmem>>, vector<1x48x48xbf16>
    %68 = vector.shape_cast %67 : vector<1x48x48xbf16> to vector<48x48xbf16>
    %cst_43 = arith.constant dense<0.000000e+00> : vector<128x48xf32>
    %69 = tpu.matmul %66, %68, %cst_43 {dimension_numbers = #tpu.dot_dimension_numbers<[1], [0], [0], [1], [0, 0, 1, 1], [], []>} : vector<128x48xbf16>, vector<48x48xbf16>, vector<128x48xf32> -> vector<128x48xf32>
    %70 = arith.addf %64, %69 : vector<128x48xf32>
    %c17 = arith.constant 17 : index
    %c0_44 = arith.constant 0 : index
    %71 = vector.load %arg7[%c17, %c0_44] : memref<160x48xf32, #tpu.memory_space<vmem>>, vector<128x48xf32>
    %cst_45 = arith.constant 0.000000e+00 : f32
    %72 = vector.broadcast %cst_45 : f32 to vector<128x48xf32>
    %73 = arith.select %31, %71, %72 : vector<128x48xi1>, vector<128x48xf32>
    %74 = arith.truncf %73 : vector<128x48xf32> to vector<128x48xbf16>
    %c5 = arith.constant 5 : index
    %c0_46 = arith.constant 0 : index
    %c0_47 = arith.constant 0 : index
    %75 = vector.load %arg2[%c5, %c0_46, %c0_47] : memref<9x48x48xbf16, #tpu.memory_space<vmem>>, vector<1x48x48xbf16>
    %76 = vector.shape_cast %75 : vector<1x48x48xbf16> to vector<48x48xbf16>
    %cst_48 = arith.constant dense<0.000000e+00> : vector<128x48xf32>
    %77 = tpu.matmul %74, %76, %cst_48 {dimension_numbers = #tpu.dot_dimension_numbers<[1], [0], [0], [1], [0, 0, 1, 1], [], []>} : vector<128x48xbf16>, vector<48x48xbf16>, vector<128x48xf32> -> vector<128x48xf32>
    %78 = arith.addf %70, %77 : vector<128x48xf32>
    %c23 = arith.constant 23 : index
    %c0_49 = arith.constant 0 : index
    %79 = vector.load %arg7[%c23, %c0_49] : memref<160x48xf32, #tpu.memory_space<vmem>>, vector<128x48xf32>
    %80 = arith.andi %27, %29 : vector<128x48xi1>
    %cst_50 = arith.constant 0.000000e+00 : f32
    %81 = vector.broadcast %cst_50 : f32 to vector<128x48xf32>
    %82 = arith.select %80, %79, %81 : vector<128x48xi1>, vector<128x48xf32>
    %83 = arith.truncf %82 : vector<128x48xf32> to vector<128x48xbf16>
    %c6 = arith.constant 6 : index
    %c0_51 = arith.constant 0 : index
    %c0_52 = arith.constant 0 : index
    %84 = vector.load %arg2[%c6, %c0_51, %c0_52] : memref<9x48x48xbf16, #tpu.memory_space<vmem>>, vector<1x48x48xbf16>
    %85 = vector.shape_cast %84 : vector<1x48x48xbf16> to vector<48x48xbf16>
    %cst_53 = arith.constant dense<0.000000e+00> : vector<128x48xf32>
    %86 = tpu.matmul %83, %85, %cst_53 {dimension_numbers = #tpu.dot_dimension_numbers<[1], [0], [0], [1], [0, 0, 1, 1], [], []>} : vector<128x48xbf16>, vector<48x48xbf16>, vector<128x48xf32> -> vector<128x48xf32>
    %87 = arith.addf %78, %86 : vector<128x48xf32>
    %c24 = arith.constant 24 : index
    %c0_54 = arith.constant 0 : index
    %88 = vector.load %arg7[%c24, %c0_54] : memref<160x48xf32, #tpu.memory_space<vmem>>, vector<128x48xf32>
    %cst_55 = arith.constant 0.000000e+00 : f32
    %89 = vector.broadcast %cst_55 : f32 to vector<128x48xf32>
    %90 = arith.select %27, %88, %89 : vector<128x48xi1>, vector<128x48xf32>
    %91 = arith.truncf %90 : vector<128x48xf32> to vector<128x48xbf16>
    %c7_56 = arith.constant 7 : index
    %c0_57 = arith.constant 0 : index
    %c0_58 = arith.constant 0 : index
    %92 = vector.load %arg2[%c7_56, %c0_57, %c0_58] : memref<9x48x48xbf16, #tpu.memory_space<vmem>>, vector<1x48x48xbf16>
    %93 = vector.shape_cast %92 : vector<1x48x48xbf16> to vector<48x48xbf16>
    %cst_59 = arith.constant dense<0.000000e+00> : vector<128x48xf32>
    %94 = tpu.matmul %91, %93, %cst_59 {dimension_numbers = #tpu.dot_dimension_numbers<[1], [0], [0], [1], [0, 0, 1, 1], [], []>} : vector<128x48xbf16>, vector<48x48xbf16>, vector<128x48xf32> -> vector<128x48xf32>
    %95 = arith.addf %87, %94 : vector<128x48xf32>
    %c25 = arith.constant 25 : index
    %c0_60 = arith.constant 0 : index
    %96 = vector.load %arg7[%c25, %c0_60] : memref<160x48xf32, #tpu.memory_space<vmem>>, vector<128x48xf32>
    %97 = arith.andi %27, %31 : vector<128x48xi1>
    %cst_61 = arith.constant 0.000000e+00 : f32
    %98 = vector.broadcast %cst_61 : f32 to vector<128x48xf32>
    %99 = arith.select %97, %96, %98 : vector<128x48xi1>, vector<128x48xf32>
    %100 = arith.truncf %99 : vector<128x48xf32> to vector<128x48xbf16>
    %c8_62 = arith.constant 8 : index
    %c0_63 = arith.constant 0 : index
    %c0_64 = arith.constant 0 : index
    %101 = vector.load %arg2[%c8_62, %c0_63, %c0_64] : memref<9x48x48xbf16, #tpu.memory_space<vmem>>, vector<1x48x48xbf16>
    %102 = vector.shape_cast %101 : vector<1x48x48xbf16> to vector<48x48xbf16>
    %cst_65 = arith.constant dense<0.000000e+00> : vector<128x48xf32>
    %103 = tpu.matmul %100, %102, %cst_65 {dimension_numbers = #tpu.dot_dimension_numbers<[1], [0], [0], [1], [0, 0, 1, 1], [], []>} : vector<128x48xbf16>, vector<48x48xbf16>, vector<128x48xf32> -> vector<128x48xf32>
    %104 = arith.addf %95, %103 : vector<128x48xf32>
    %c2_66 = arith.constant 2 : index
    %c0_67 = arith.constant 0 : index
    %105 = vector.load %arg5[%c2_66, %c0_67] : memref<9x48xf32, #tpu.memory_space<vmem>>, vector<1x48xf32>
    %106 = vector.broadcast %105 : vector<1x48xf32> to vector<128x48xf32>
    %107 = arith.mulf %104, %106 : vector<128x48xf32>
    %c3_68 = arith.constant 3 : index
    %c0_69 = arith.constant 0 : index
    %108 = vector.load %arg5[%c3_68, %c0_69] : memref<9x48xf32, #tpu.memory_space<vmem>>, vector<1x48xf32>
    %109 = vector.broadcast %108 : vector<1x48xf32> to vector<128x48xf32>
    %110 = arith.addf %107, %109 : vector<128x48xf32>
    %cst_70 = arith.constant 0.000000e+00 : f32
    %111 = vector.broadcast %cst_70 : f32 to vector<128x48xf32>
    %112 = arith.maximumf %110, %111 : vector<128x48xf32>
    %c16_71 = arith.constant 16 : index
    %c0_72 = arith.constant 0 : index
    %113 = vector.load %arg7[%c16_71, %c0_72] : memref<160x48xf32, #tpu.memory_space<vmem>>, vector<128x48xf32>
    tpu.vector_store %arg7[%c16_71, %c0_72], %112 {strides = array<i32>} : memref<160x48xf32, #tpu.memory_space<vmem>>, vector<128x48xf32>,
    %114 = tpu.iota {dimensions = array<i32: 0>} : vector<128x48xi32>
    %c3_i32_73 = arith.constant 3 : i32
    %115 = vector.broadcast %c3_i32_73 : i32 to vector<128x48xi32>
    %116 = arith.shrsi %114, %115 : vector<128x48xi32>
    %c7_i32_74 = arith.constant 7 : i32
    %117 = vector.broadcast %c7_i32_74 : i32 to vector<128x48xi32>
    %118 = arith.andi %116, %117 : vector<128x48xi32>
    %c7_i32_75 = arith.constant 7 : i32
    %119 = vector.broadcast %c7_i32_75 : i32 to vector<128x48xi32>
    %120 = arith.andi %114, %119 : vector<128x48xi32>
    %c0_i32_76 = arith.constant 0 : i32
    %121 = vector.broadcast %c0_i32_76 : i32 to vector<128x48xi32>
    %122 = arith.cmpi sgt, %118, %121 : vector<128x48xi32>
    %c7_i32_77 = arith.constant 7 : i32
    %123 = vector.broadcast %c7_i32_77 : i32 to vector<128x48xi32>
    %124 = arith.cmpi slt, %118, %123 : vector<128x48xi32>
    %c0_i32_78 = arith.constant 0 : i32
    %125 = vector.broadcast %c0_i32_78 : i32 to vector<128x48xi32>
    %126 = arith.cmpi sgt, %120, %125 : vector<128x48xi32>
    %c7_i32_79 = arith.constant 7 : i32
    %127 = vector.broadcast %c7_i32_79 : i32 to vector<128x48xi32>
    %128 = arith.cmpi slt, %120, %127 : vector<128x48xi32>
    %c7_80 = arith.constant 7 : index
    %c0_81 = arith.constant 0 : index
    %129 = vector.load %arg7[%c7_80, %c0_81] : memref<160x48xf32, #tpu.memory_space<vmem>>, vector<128x48xf32>
    %130 = arith.andi %122, %126 : vector<128x48xi1>
    %cst_82 = arith.constant 0.000000e+00 : f32
    %131 = vector.broadcast %cst_82 : f32 to vector<128x48xf32>
    %132 = arith.select %130, %129, %131 : vector<128x48xi1>, vector<128x48xf32>
    %133 = arith.truncf %132 : vector<128x48xf32> to vector<128x48xbf16>
    %c0_83 = arith.constant 0 : index
    %c0_84 = arith.constant 0 : index
    %c0_85 = arith.constant 0 : index
    %134 = vector.load %arg3[%c0_83, %c0_84, %c0_85] : memref<9x48x48xbf16, #tpu.memory_space<vmem>>, vector<1x48x48xbf16>
    %135 = vector.shape_cast %134 : vector<1x48x48xbf16> to vector<48x48xbf16>
    %cst_86 = arith.constant dense<0.000000e+00> : vector<128x48xf32>
    %136 = tpu.matmul %133, %135, %cst_86 {dimension_numbers = #tpu.dot_dimension_numbers<[1], [0], [0], [1], [0, 0, 1, 1], [], []>} : vector<128x48xbf16>, vector<48x48xbf16>, vector<128x48xf32> -> vector<128x48xf32>
    %c8_87 = arith.constant 8 : index
    %c0_88 = arith.constant 0 : index
    %137 = vector.load %arg7[%c8_87, %c0_88] : memref<160x48xf32, #tpu.memory_space<vmem>>, vector<128x48xf32>
    %cst_89 = arith.constant 0.000000e+00 : f32
    %138 = vector.broadcast %cst_89 : f32 to vector<128x48xf32>
    %139 = arith.select %122, %137, %138 : vector<128x48xi1>, vector<128x48xf32>
    %140 = arith.truncf %139 : vector<128x48xf32> to vector<128x48xbf16>
    %c1_90 = arith.constant 1 : index
    %c0_91 = arith.constant 0 : index
    %c0_92 = arith.constant 0 : index
    %141 = vector.load %arg3[%c1_90, %c0_91, %c0_92] : memref<9x48x48xbf16, #tpu.memory_space<vmem>>, vector<1x48x48xbf16>
    %142 = vector.shape_cast %141 : vector<1x48x48xbf16> to vector<48x48xbf16>
    %cst_93 = arith.constant dense<0.000000e+00> : vector<128x48xf32>
    %143 = tpu.matmul %140, %142, %cst_93 {dimension_numbers = #tpu.dot_dimension_numbers<[1], [0], [0], [1], [0, 0, 1, 1], [], []>} : vector<128x48xbf16>, vector<48x48xbf16>, vector<128x48xf32> -> vector<128x48xf32>
    %144 = arith.addf %136, %143 : vector<128x48xf32>
    %c9_94 = arith.constant 9 : index
    %c0_95 = arith.constant 0 : index
    %145 = vector.load %arg7[%c9_94, %c0_95] : memref<160x48xf32, #tpu.memory_space<vmem>>, vector<128x48xf32>
    %146 = arith.andi %122, %128 : vector<128x48xi1>
    %cst_96 = arith.constant 0.000000e+00 : f32
    %147 = vector.broadcast %cst_96 : f32 to vector<128x48xf32>
    %148 = arith.select %146, %145, %147 : vector<128x48xi1>, vector<128x48xf32>
    %149 = arith.truncf %148 : vector<128x48xf32> to vector<128x48xbf16>
    %c2_97 = arith.constant 2 : index
    %c0_98 = arith.constant 0 : index
    %c0_99 = arith.constant 0 : index
    %150 = vector.load %arg3[%c2_97, %c0_98, %c0_99] : memref<9x48x48xbf16, #tpu.memory_space<vmem>>, vector<1x48x48xbf16>
    %151 = vector.shape_cast %150 : vector<1x48x48xbf16> to vector<48x48xbf16>
    %cst_100 = arith.constant dense<0.000000e+00> : vector<128x48xf32>
    %152 = tpu.matmul %149, %151, %cst_100 {dimension_numbers = #tpu.dot_dimension_numbers<[1], [0], [0], [1], [0, 0, 1, 1], [], []>} : vector<128x48xbf16>, vector<48x48xbf16>, vector<128x48xf32> -> vector<128x48xf32>
    %153 = arith.addf %144, %152 : vector<128x48xf32>
    %c15_101 = arith.constant 15 : index
    %c0_102 = arith.constant 0 : index
    %154 = vector.load %arg7[%c15_101, %c0_102] : memref<160x48xf32, #tpu.memory_space<vmem>>, vector<128x48xf32>
    %cst_103 = arith.constant 0.000000e+00 : f32
    %155 = vector.broadcast %cst_103 : f32 to vector<128x48xf32>
    %156 = arith.select %126, %154, %155 : vector<128x48xi1>, vector<128x48xf32>
    %157 = arith.truncf %156 : vector<128x48xf32> to vector<128x48xbf16>
    %c3_104 = arith.constant 3 : index
    %c0_105 = arith.constant 0 : index
    %c0_106 = arith.constant 0 : index
    %158 = vector.load %arg3[%c3_104, %c0_105, %c0_106] : memref<9x48x48xbf16, #tpu.memory_space<vmem>>, vector<1x48x48xbf16>
    %159 = vector.shape_cast %158 : vector<1x48x48xbf16> to vector<48x48xbf16>
    %cst_107 = arith.constant dense<0.000000e+00> : vector<128x48xf32>
    %160 = tpu.matmul %157, %159, %cst_107 {dimension_numbers = #tpu.dot_dimension_numbers<[1], [0], [0], [1], [0, 0, 1, 1], [], []>} : vector<128x48xbf16>, vector<48x48xbf16>, vector<128x48xf32> -> vector<128x48xf32>
    %161 = arith.addf %153, %160 : vector<128x48xf32>
    %c16_108 = arith.constant 16 : index
    %c0_109 = arith.constant 0 : index
    %162 = vector.load %arg7[%c16_108, %c0_109] : memref<160x48xf32, #tpu.memory_space<vmem>>, vector<128x48xf32>
    %163 = arith.truncf %162 : vector<128x48xf32> to vector<128x48xbf16>
    %c4_110 = arith.constant 4 : index
    %c0_111 = arith.constant 0 : index
    %c0_112 = arith.constant 0 : index
    %164 = vector.load %arg3[%c4_110, %c0_111, %c0_112] : memref<9x48x48xbf16, #tpu.memory_space<vmem>>, vector<1x48x48xbf16>
    %165 = vector.shape_cast %164 : vector<1x48x48xbf16> to vector<48x48xbf16>
    %cst_113 = arith.constant dense<0.000000e+00> : vector<128x48xf32>
    %166 = tpu.matmul %163, %165, %cst_113 {dimension_numbers = #tpu.dot_dimension_numbers<[1], [0], [0], [1], [0, 0, 1, 1], [], []>} : vector<128x48xbf16>, vector<48x48xbf16>, vector<128x48xf32> -> vector<128x48xf32>
    %167 = arith.addf %161, %166 : vector<128x48xf32>
    %c17_114 = arith.constant 17 : index
    %c0_115 = arith.constant 0 : index
    %168 = vector.load %arg7[%c17_114, %c0_115] : memref<160x48xf32, #tpu.memory_space<vmem>>, vector<128x48xf32>
    %cst_116 = arith.constant 0.000000e+00 : f32
    %169 = vector.broadcast %cst_116 : f32 to vector<128x48xf32>
    %170 = arith.select %128, %168, %169 : vector<128x48xi1>, vector<128x48xf32>
    %171 = arith.truncf %170 : vector<128x48xf32> to vector<128x48xbf16>
    %c5_117 = arith.constant 5 : index
    %c0_118 = arith.constant 0 : index
    %c0_119 = arith.constant 0 : index
    %172 = vector.load %arg3[%c5_117, %c0_118, %c0_119] : memref<9x48x48xbf16, #tpu.memory_space<vmem>>, vector<1x48x48xbf16>
    %173 = vector.shape_cast %172 : vector<1x48x48xbf16> to vector<48x48xbf16>
    %cst_120 = arith.constant dense<0.000000e+00> : vector<128x48xf32>
    %174 = tpu.matmul %171, %173, %cst_120 {dimension_numbers = #tpu.dot_dimension_numbers<[1], [0], [0], [1], [0, 0, 1, 1], [], []>} : vector<128x48xbf16>, vector<48x48xbf16>, vector<128x48xf32> -> vector<128x48xf32>
    %175 = arith.addf %167, %174 : vector<128x48xf32>
    %c23_121 = arith.constant 23 : index
    %c0_122 = arith.constant 0 : index
    %176 = vector.load %arg7[%c23_121, %c0_122] : memref<160x48xf32, #tpu.memory_space<vmem>>, vector<128x48xf32>
    %177 = arith.andi %124, %126 : vector<128x48xi1>
    %cst_123 = arith.constant 0.000000e+00 : f32
    %178 = vector.broadcast %cst_123 : f32 to vector<128x48xf32>
    %179 = arith.select %177, %176, %178 : vector<128x48xi1>, vector<128x48xf32>
    %180 = arith.truncf %179 : vector<128x48xf32> to vector<128x48xbf16>
    %c6_124 = arith.constant 6 : index
    %c0_125 = arith.constant 0 : index
    %c0_126 = arith.constant 0 : index
    %181 = vector.load %arg3[%c6_124, %c0_125, %c0_126] : memref<9x48x48xbf16, #tpu.memory_space<vmem>>, vector<1x48x48xbf16>
    %182 = vector.shape_cast %181 : vector<1x48x48xbf16> to vector<48x48xbf16>
    %cst_127 = arith.constant dense<0.000000e+00> : vector<128x48xf32>
    %183 = tpu.matmul %180, %182, %cst_127 {dimension_numbers = #tpu.dot_dimension_numbers<[1], [0], [0], [1], [0, 0, 1, 1], [], []>} : vector<128x48xbf16>, vector<48x48xbf16>, vector<128x48xf32> -> vector<128x48xf32>
    %184 = arith.addf %175, %183 : vector<128x48xf32>
    %c24_128 = arith.constant 24 : index
    %c0_129 = arith.constant 0 : index
    %185 = vector.load %arg7[%c24_128, %c0_129] : memref<160x48xf32, #tpu.memory_space<vmem>>, vector<128x48xf32>
    %cst_130 = arith.constant 0.000000e+00 : f32
    %186 = vector.broadcast %cst_130 : f32 to vector<128x48xf32>
    %187 = arith.select %124, %185, %186 : vector<128x48xi1>, vector<128x48xf32>
    %188 = arith.truncf %187 : vector<128x48xf32> to vector<128x48xbf16>
    %c7_131 = arith.constant 7 : index
    %c0_132 = arith.constant 0 : index
    %c0_133 = arith.constant 0 : index
    %189 = vector.load %arg3[%c7_131, %c0_132, %c0_133] : memref<9x48x48xbf16, #tpu.memory_space<vmem>>, vector<1x48x48xbf16>
    %190 = vector.shape_cast %189 : vector<1x48x48xbf16> to vector<48x48xbf16>
    %cst_134 = arith.constant dense<0.000000e+00> : vector<128x48xf32>
    %191 = tpu.matmul %188, %190, %cst_134 {dimension_numbers = #tpu.dot_dimension_numbers<[1], [0], [0], [1], [0, 0, 1, 1], [], []>} : vector<128x48xbf16>, vector<48x48xbf16>, vector<128x48xf32> -> vector<128x48xf32>
    %192 = arith.addf %184, %191 : vector<128x48xf32>
    %c25_135 = arith.constant 25 : index
    %c0_136 = arith.constant 0 : index
    %193 = vector.load %arg7[%c25_135, %c0_136] : memref<160x48xf32, #tpu.memory_space<vmem>>, vector<128x48xf32>
    %194 = arith.andi %124, %128 : vector<128x48xi1>
    %cst_137 = arith.constant 0.000000e+00 : f32
    %195 = vector.broadcast %cst_137 : f32 to vector<128x48xf32>
    %196 = arith.select %194, %193, %195 : vector<128x48xi1>, vector<128x48xf32>
    %197 = arith.truncf %196 : vector<128x48xf32> to vector<128x48xbf16>
    %c8_138 = arith.constant 8 : index
    %c0_139 = arith.constant 0 : index
    %c0_140 = arith.constant 0 : index
    %198 = vector.load %arg3[%c8_138, %c0_139, %c0_140] : memref<9x48x48xbf16, #tpu.memory_space<vmem>>, vector<1x48x48xbf16>
    %199 = vector.shape_cast %198 : vector<1x48x48xbf16> to vector<48x48xbf16>
    %cst_141 = arith.constant dense<0.000000e+00> : vector<128x48xf32>
    %200 = tpu.matmul %197, %199, %cst_141 {dimension_numbers = #tpu.dot_dimension_numbers<[1], [0], [0], [1], [0, 0, 1, 1], [], []>} : vector<128x48xbf16>, vector<48x48xbf16>, vector<128x48xf32> -> vector<128x48xf32>
    %201 = arith.addf %192, %200 : vector<128x48xf32>
    %c4_142 = arith.constant 4 : index
    %c0_143 = arith.constant 0 : index
    %202 = vector.load %arg5[%c4_142, %c0_143] : memref<9x48xf32, #tpu.memory_space<vmem>>, vector<1x48xf32>
    %203 = vector.broadcast %202 : vector<1x48xf32> to vector<128x48xf32>
    %204 = arith.mulf %104, %203 : vector<128x48xf32>
    %205 = arith.addf %204, %201 : vector<128x48xf32>
    %c5_144 = arith.constant 5 : index
    %c0_145 = arith.constant 0 : index
    %206 = vector.load %arg5[%c5_144, %c0_145] : memref<9x48xf32, #tpu.memory_space<vmem>>, vector<1x48xf32>
    %207 = vector.broadcast %206 : vector<1x48xf32> to vector<128x48xf32>
    %208 = arith.mulf %205, %207 : vector<128x48xf32>
    %c6_146 = arith.constant 6 : index
    %c0_147 = arith.constant 0 : index
    %209 = vector.load %arg5[%c6_146, %c0_147] : memref<9x48xf32, #tpu.memory_space<vmem>>, vector<1x48xf32>
    %210 = vector.broadcast %209 : vector<1x48xf32> to vector<128x48xf32>
    %211 = arith.addf %208, %210 : vector<128x48xf32>
    %cst_148 = arith.constant 0.000000e+00 : f32
    %212 = vector.broadcast %cst_148 : f32 to vector<128x48xf32>
    %213 = arith.maximumf %211, %212 : vector<128x48xf32>
    %214 = arith.truncf %213 : vector<128x48xf32> to vector<128x48xbf16>
    %c0_149 = arith.constant 0 : index
    %c0_150 = arith.constant 0 : index
    %215 = vector.load %arg4[%c0_149, %c0_150] : memref<48x32xbf16, #tpu.memory_space<vmem>>, vector<48x32xbf16>
    %cst_151 = arith.constant dense<0.000000e+00> : vector<128x32xf32>
    %216 = tpu.matmul %214, %215, %cst_151 {dimension_numbers = #tpu.dot_dimension_numbers<[1], [0], [0], [1], [0, 0, 1, 1], [], []>} : vector<128x48xbf16>, vector<48x32xbf16>, vector<128x32xf32> -> vector<128x32xf32>
    %c7_152 = arith.constant 7 : index
    %c0_153 = arith.constant 0 : index
    %217 = vector.load %arg5[%c7_152, %c0_153] : memref<9x48xf32, #tpu.memory_space<vmem>>, vector<1x32xf32>
    %218 = vector.broadcast %217 : vector<1x32xf32> to vector<128x32xf32>
    %219 = arith.mulf %216, %218 : vector<128x32xf32>
    %c8_154 = arith.constant 8 : index
    %c0_155 = arith.constant 0 : index
    %220 = vector.load %arg5[%c8_154, %c0_155] : memref<9x48xf32, #tpu.memory_space<vmem>>, vector<1x32xf32>
    %221 = vector.broadcast %220 : vector<1x32xf32> to vector<128x32xf32>
    %222 = arith.addf %219, %221 : vector<128x32xf32>
    %223 = arith.addf %222, %0 : vector<128x32xf32>
    %cst_156 = arith.constant 0.000000e+00 : f32
    %224 = vector.broadcast %cst_156 : f32 to vector<128x32xf32>
    %225 = arith.maximumf %223, %224 : vector<128x32xf32>
    %c0_157 = arith.constant 0 : index
    %c0_158 = arith.constant 0 : index
    %226 = vector.load %arg6[%c0_157, %c0_158] : memref<128x32xf32, #tpu.memory_space<vmem>>, vector<128x32xf32>
    tpu.vector_store %arg6[%c0_157, %c0_158], %225 {strides = array<i32>} : memref<128x32xf32, #tpu.memory_space<vmem>>, vector<128x32xf32>,
    return
  }
}

</mosaic_0001>

<llo_original>
// kernel: tpu_custom_call.1
$region0: #{tpu_custom_call.1}
  #allocation0 [shape = 'u32[]', space=smem, size = 0x4, offset = 0x4, fixed_abs, tag = 'smem constant byte address 0x4 - core index']
  #allocation1 [shape = 'u32[144,128]{1,0:T(1,128)}', space=vmem, size = 0x12000, scoped, tag = 'internal scratch']
  #allocation2 [shape = 'f32[160,48]{1,0:T(8,128)}', space=vmem, size = 0x14000, scoped, tag = 'scratch operand']
  %s0 = inlined_call_operand.vmem [shape: f32[128,32], index: 0, kind: input, shape index: {}]
  %s1 = inlined_call_operand.vmem [shape: bf16[32,48], index: 1, kind: input, shape index: {}]
  %s2 = inlined_call_operand.hbm [shape: bf16[9,48,48], index: 2, kind: input, shape index: {}]
  %s3 = inlined_call_operand.hbm [shape: bf16[9,48,48], index: 3, kind: input, shape index: {}]
  %s4 = inlined_call_operand.vmem [shape: bf16[48,32], index: 4, kind: input, shape index: {}]
  %s5 = inlined_call_operand.vmem [shape: f32[9,48], index: 5, kind: input, shape index: {}]
  %s6 = inlined_call_operand.vmem [shape: f32[128,32], index: 6, kind: output, shape index: {}]
  %s7 = sld [smem:[#allocation0]]
  $region42: #{tpu_custom_call.1} parent=0
    _
  %s9 = ssub.s32 1, %s7
  %s10 = scalar_select 0, %s9, %s7
  $region1: #{tpu_custom_call.1} parent=0
    #allocation3 [shape = 'u8[110592]{0}', space=vmem, size = 0x1b000, scoped, tag = 'input window, operand 2, single buffered']
    #allocation4 [shape = 's32[1]{0}', space=sflag, size = 0x4, scoped, tag = 'scoped memory for tpu_custom_call.1']
    #allocation5 [shape = 'u8[110592]{0}', space=vmem, size = 0x1b000, scoped, tag = 'input window, operand 3, single buffered']
    #allocation6 [shape = 's32[1]{0}', space=sflag, size = 0x4, scoped, tag = 'scoped memory for tpu_custom_call.1']
    %11 = vsyncpa [#allocation4], 0
    %12 = vsyncpa [#allocation6], 0
    // Predicated region
    $region2: #{tpu_custom_call.1} parent=1 // pred_check
      _
    $region3: #{tpu_custom_call.1} parent=1 // pred_check_branch
      %14 = sbr.rel (0) target = $region5
    $region4: #{tpu_custom_call.1} parent=1 // pred_region
      _
    $region5: #{tpu_custom_call.1} parent=1 // pred_fallthru
      _
    // Predicated region
    $region6: #{tpu_custom_call.1} parent=1 // pred_check
      _
    $region7: #{tpu_custom_call.1} parent=1 // pred_check_branch
      %16 = sbr.rel (0) target = $region9
    $region8: #{tpu_custom_call.1} parent=1 // pred_region
      _
    $region9: #{tpu_custom_call.1} parent=1 // pred_fallthru
      _
    // Predicated region
    $region10: #{tpu_custom_call.1} parent=1 // pred_check
      _
    $region11: #{tpu_custom_call.1} parent=1 // pred_check_branch
      %18 = sbr.rel (0) target = $region13
    $region12: #{tpu_custom_call.1} parent=1 // pred_region
      %s20 = ssub.s32 3456, 3456
      %21 = vsyncadd [#allocation4], %s20
      %s22 = sshll.u32 [#allocation3], 4
      %s23 = int_to_ptr.vmem [resolvable:$true] %s22
      %28 = dma.hbm_to_vmem [thread:$0]  %s2, 3456, %s23, [#allocation4], 64, 64, 4
    $region13: #{tpu_custom_call.1} parent=1 // pred_fallthru
      _
    // Predicated region
    $region14: #{tpu_custom_call.1} parent=1 // pred_check
      _
    $region15: #{tpu_custom_call.1} parent=1 // pred_check_branch
      %30 = sbr.rel (0) target = $region17
    $region16: #{tpu_custom_call.1} parent=1 // pred_region
      %s32 = ssub.s32 3456, 3456
      %33 = vsyncadd [#allocation6], %s32
      %s34 = sshll.u32 [#allocation5], 4
      %s35 = int_to_ptr.vmem [resolvable:$true] %s34
      %40 = dma.hbm_to_vmem [thread:$0]  %s3, 3456, %s35, [#allocation6], 64, 64, 4
    $region17: #{tpu_custom_call.1} parent=1 // pred_fallthru
      _
    // Predicated region
    $region18: #{tpu_custom_call.1} parent=1 // pred_check
      _
    $region19: #{tpu_custom_call.1} parent=1 // pred_check_branch
      %42 = sbr.rel (0) target = $region21
    $region20: #{tpu_custom_call.1} parent=1 // pred_region
      _
    $region21: #{tpu_custom_call.1} parent=1 // pred_fallthru
      _
    // Predicated region
    $region22: #{tpu_custom_call.1} parent=1 // pred_check
      _
    $region23: #{tpu_custom_call.1} parent=1 // pred_check_branch
      %44 = sbr.rel (0) target = $region25
    $region24: #{tpu_custom_call.1} parent=1 // pred_region
      _
    $region25: #{tpu_custom_call.1} parent=1 // pred_fallthru
      _
    // Predicated region
    $region26: #{tpu_custom_call.1} parent=1 // pred_check
      _
    $region27: #{tpu_custom_call.1} parent=1 // pred_check_branch
      %46 = sbr.rel (0) target = $region29
    $region28: #{tpu_custom_call.1} parent=1 // pred_region
      %47 = dma.done [#allocation4], 3456
    $region29: #{tpu_custom_call.1} parent=1 // pred_fallthru
      _
    // Predicated region
    $region30: #{tpu_custom_call.1} parent=1 // pred_check
      _
    $region31: #{tpu_custom_call.1} parent=1 // pred_check_branch
      %49 = sbr.rel (0) target = $region33
    $region32: #{tpu_custom_call.1} parent=1 // pred_region
      %50 = dma.done [#allocation6], 3456
    $region33: #{tpu_custom_call.1} parent=1 // pred_fallthru
      _
    %v52 = vld [vmem:[%s0] sm:$0xff]
    %v53 = vld [vmem:[%s0 + $0x8] sm:$0xff]
    %v54 = vld [vmem:[%s0 + $0x10] sm:$0xff]
    %v55 = vld [vmem:[%s0 + $0x18] sm:$0xff]
    %v56 = vld [vmem:[%s0 + $0x20] sm:$0xff]
    %v57 = vld [vmem:[%s0 + $0x28] sm:$0xff]
    %v58 = vld [vmem:[%s0 + $0x30] sm:$0xff]
    %v59 = vld [vmem:[%s0 + $0x38] sm:$0xff]
    %v60 = vld [vmem:[%s0 + $0x40] sm:$0xff]
    %v61 = vld [vmem:[%s0 + $0x48] sm:$0xff]
    %v62 = vld [vmem:[%s0 + $0x50] sm:$0xff]
    %v63 = vld [vmem:[%s0 + $0x58] sm:$0xff]
    %v64 = vld [vmem:[%s0 + $0x60] sm:$0xff]
    %v65 = vld [vmem:[%s0 + $0x68] sm:$0xff]
    %v66 = vld [vmem:[%s0 + $0x70] sm:$0xff]
    %v67 = vld [vmem:[%s0 + $0x78] sm:$0xff]
    %vm68 = vcmask 392192
    %69 = vst.msk [vmem:[#allocation2] sm:$0xff] %vm68, 0.0
    %70 = vst.msk [vmem:[#allocation2 + $0x8] sm:$0xff] %vm68, 0.0
    %71 = vst.msk [vmem:[#allocation2 + $0x90] sm:$0xff] %vm68, 0.0
    %72 = vst.msk [vmem:[#allocation2 + $0x98] sm:$0xff] %vm68, 0.0
    %v73 = vpack.c.bf16 %v53, %v52
    %v74 = vpack.c.bf16 %v55, %v54
    %v75 = vpack.c.bf16 %v57, %v56
    %v76 = vpack.c.bf16 %v59, %v58
    %v77 = vpack.c.bf16 %v61, %v60
    %v78 = vpack.c.bf16 %v63, %v62
    %v79 = vpack.c.bf16 %v65, %v64
    %v80 = vpack.c.bf16 %v67, %v66
    %v81 = vld [vmem:[%s1] sm:$0xf]
    %v82 = vld [vmem:[%s1 + $0x4] sm:$0xf]
    %v83 = vld [vmem:[%s1 + $0x8] sm:$0xf]
    %v84 = vld [vmem:[%s1 + $0xc] sm:$0xf]
    %v89 = vunpack.c.l.b16 %v81
    %v90 = vunpack.c.l.b16 %v82
    %v91 = vunpack.c.l.b16 %v83
    %v92 = vunpack.c.l.b16 %v84
    %v93 = vpack.c.b16 %v90, %v89
    %v94 = vpack.c.b16 %v92, %v91
    %vm97 = vcmask 261120
    %v99 = vsel %vm97, %v73, 0
    %v102 = vsel %vm97, %v74, 0
    %v105 = vsel %vm97, %v75, 0
    %v108 = vsel %vm97, %v76, 0
    %v111 = vsel %vm97, %v77, 0
    %v114 = vsel %vm97, %v78, 0
    %v117 = vsel %vm97, %v79, 0
    %v120 = vsel %vm97, %v80, 0
    %122 = vmatprep.subr.bf16.mxu0 0
    %123 = vmatpush1.bf16.msra.mxu0 0
    %124 = vmatprep.subr.bf16.mxu0 0
    %125 = vmatpush1.bf16.msra.mxu0 0
    %126 = vmatprep.subr.bf16.mxu0 0
    %127 = vmatpush1.bf16.msra.mxu0 0
    %128 = vmatprep.subr.bf16.mxu0 0
    %129 = vmatpush1.bf16.msra.mxu0 0
    %130 = vmatprep.subr.bf16.mxu0 0
    %131 = vmatpush1.bf16.msra.mxu0 0
    %132 = vmatprep.subr.bf16.mxu0 0
    %133 = vmatpush1.bf16.msra.mxu0 0
    %134 = vmatprep.subr.bf16.mxu0 0
    %135 = vmatpush1.bf16.msra.mxu0 %v94
    %136 = vmatprep.subr.bf16.mxu0 0
    %137 = vmatpush1.bf16.msra.mxu0 %v93
    %138 = vmatprep.subr.bf16.mxu0 0
    %139 = vmatpush2.bf16.msra.mxu0 0
    %140 = vmatprep.subr.bf16.mxu0 0
    %141 = vmatpush2.bf16.msra.mxu0 0
    %142 = vmatprep.subr.bf16.mxu0 0
    %143 = vmatpush2.bf16.msra.mxu0 0
    %144 = vmatprep.subr.bf16.mxu0 0
    %145 = vmatpush2.bf16.msra.mxu0 0
    %146 = vmatprep.subr.bf16.mxu0 0
    %147 = vmatpush2.bf16.msra.mxu0 0
    %148 = vmatprep.subr.bf16.mxu0 0
    %149 = vmatpush2.bf16.msra.mxu0 0
    %150 = vmatprep.subr.bf16.mxu0 0
    %151 = vmatpush2.bf16.msra.mxu0 0
    %152 = vmatprep.subr.bf16.mxu0 0
    %153 = vmatpush2.bf16.msra.mxu0 0
    %154 = vmatprep.mubr.bf16.mxu0 0
    %155 = vmatmul.mubr.bf16.gmra.mxu0 %v99
    %v156 = vpop.f32.mrf.mxu0
    %v157 = vadd.f32 0.0, %v156
    %v158 = vpop.f32.mrf.mxu0
    %v159 = vpop.f32.mrf.mxu0
    %v160 = vadd.f32 0.0, %v159
    %v161 = vpop.f32.mrf.mxu0
    %162 = vmatprep.mubr.bf16.mxu0 0
    %163 = vmatmul.mubr.bf16.gmra.mxu0 %v102
    %v164 = vpop.f32.mrf.mxu0
    %v165 = vadd.f32 0.0, %v164
    %v166 = vpop.f32.mrf.mxu0
    %v167 = vpop.f32.mrf.mxu0
    %v168 = vadd.f32 0.0, %v167
    %v169 = vpop.f32.mrf.mxu0
    %170 = vmatprep.mubr.bf16.mxu0 0
    %171 = vmatmul.mubr.bf16.gmra.mxu0 %v105
    %v172 = vpop.f32.mrf.mxu0
    %v173 = vadd.f32 0.0, %v172
    %v174 = vpop.f32.mrf.mxu0
    %v175 = vpop.f32.mrf.mxu0
    %v176 = vadd.f32 0.0, %v175
    %v177 = vpop.f32.mrf.mxu0
    %178 = vmatprep.mubr.bf16.mxu0 0
    %179 = vmatmul.mubr.bf16.gmra.mxu0 %v108
    %v180 = vpop.f32.mrf.mxu0
    %v181 = vadd.f32 0.0, %v180
    %v182 = vpop.f32.mrf.mxu0
    %v183 = vpop.f32.mrf.mxu0
    %v184 = vadd.f32 0.0, %v183
    %v185 = vpop.f32.mrf.mxu0
    %186 = vmatprep.mubr.bf16.mxu0 0
    %187 = vmatmul.mubr.bf16.gmra.mxu0 %v111
    %v188 = vpop.f32.mrf.mxu0
    %v189 = vadd.f32 0.0, %v188
    %v190 = vpop.f32.mrf.mxu0
    %v191 = vpop.f32.mrf.mxu0
    %v192 = vadd.f32 0.0, %v191
    %v193 = vpop.f32.mrf.mxu0
    %194 = vmatprep.mubr.bf16.mxu0 0
    %195 = vmatmul.mubr.bf16.gmra.mxu0 %v114
    %v196 = vpop.f32.mrf.mxu0
    %v197 = vadd.f32 0.0, %v196
    %v198 = vpop.f32.mrf.mxu0
    %v199 = vpop.f32.mrf.mxu0
    %v200 = vadd.f32 0.0, %v199
    %v201 = vpop.f32.mrf.mxu0
    %202 = vmatprep.mubr.bf16.mxu0 0
    %203 = vmatmul.mubr.bf16.gmra.mxu0 %v117
    %v204 = vpop.f32.mrf.mxu0
    %v205 = vadd.f32 0.0, %v204
    %v206 = vpop.f32.mrf.mxu0
    %v207 = vpop.f32.mrf.mxu0
    %v208 = vadd.f32 0.0, %v207
    %v209 = vpop.f32.mrf.mxu0
    %210 = vmatprep.mubr.bf16.mxu0 0
    %211 = vmatmul.mubr.bf16.gmra.mxu0 %v120
    %v212 = vpop.f32.mrf.mxu0
    %v213 = vadd.f32 0.0, %v212
    %v214 = vpop.f32.mrf.mxu0
    %v215 = vpop.f32.mrf.mxu0
    %v216 = vadd.f32 0.0, %v215
    %v217 = vpop.f32.mrf.mxu0
    %218 = vdwg.mxu0
    %v219 = vld [vmem:[%s5] sm:$0x1]
    %v220 = vlaneseq
    %v221 = vshrl.u32 %v220, 7
    %v222 = vsub.s32 0, %v221
    %v223 = vrot.slane %v219, %v222
    %v224 = vmul.f32 %v157, %v223
    %v225 = vmul.f32 %v160, %v223
    %v226 = vmul.f32 %v165, %v223
    %v227 = vmul.f32 %v168, %v223
    %v228 = vmul.f32 %v173, %v223
    %v229 = vmul.f32 %v176, %v223
    %v230 = vmul.f32 %v181, %v223
    %v231 = vmul.f32 %v184, %v223
    %v232 = vmul.f32 %v189, %v223
    %v233 = vmul.f32 %v192, %v223
    %v234 = vmul.f32 %v197, %v223
    %v235 = vmul.f32 %v200, %v223
    %v236 = vmul.f32 %v205, %v223
    %v237 = vmul.f32 %v208, %v223
    %v238 = vmul.f32 %v213, %v223
    %v239 = vmul.f32 %v216, %v223
    %v240 = vld [vmem:[%s5 + $0x1] sm:$0x1]
    %v241 = vlaneseq
    %v242 = vshrl.u32 %v241, 7
    %v243 = vsub.s32 0, %v242
    %v244 = vrot.slane %v240, %v243
    %v245 = vadd.f32 %v224, %v244
    %v246 = vadd.f32 %v225, %v244
    %v247 = vadd.f32 %v226, %v244
    %v248 = vadd.f32 %v227, %v244
    %v249 = vadd.f32 %v228, %v244
    %v250 = vadd.f32 %v229, %v244
    %v251 = vadd.f32 %v230, %v244
    %v252 = vadd.f32 %v231, %v244
    %v253 = vadd.f32 %v232, %v244
    %v254 = vadd.f32 %v233, %v244
    %v255 = vadd.f32 %v234, %v244
    %v256 = vadd.f32 %v235, %v244
    %v257 = vadd.f32 %v236, %v244
    %v258 = vadd.f32 %v237, %v244
    %v259 = vadd.f32 %v238, %v244
    %v260 = vadd.f32 %v239, %v244
    %v261 = vmax.f32 %v245, 0.0
    %v262 = vmax.f32 %v246, 0.0
    %v263 = vmax.f32 %v247, 0.0
    %v264 = vmax.f32 %v248, 0.0
    %v265 = vmax.f32 %v249, 0.0
    %v266 = vmax.f32 %v250, 0.0
    %v267 = vmax.f32 %v251, 0.0
    %v268 = vmax.f32 %v252, 0.0
    %v269 = vmax.f32 %v253, 0.0
    %v270 = vmax.f32 %v254, 0.0
    %v271 = vmax.f32 %v255, 0.0
    %v272 = vmax.f32 %v256, 0.0
    %v273 = vmax.f32 %v257, 0.0
    %v274 = vmax.f32 %v258, 0.0
    %v275 = vmax.f32 %v259, 0.0
    %v276 = vmax.f32 %v260, 0.0
    %277 = vst.msk [vmem:[#allocation2 + $0x10] sm:$0xff] %vm68, %v261
    %278 = vst.msk [vmem:[#allocation2 + $0x18] sm:$0xff] %vm68, %v262
    %279 = vst.msk [vmem:[#allocation2 + $0x20] sm:$0xff] %vm68, %v263
    %280 = vst.msk [vmem:[#allocation2 + $0x28] sm:$0xff] %vm68, %v264
    %281 = vst.msk [vmem:[#allocation2 + $0x30] sm:$0xff] %vm68, %v265
    %282 = vst.msk [vmem:[#allocation2 + $0x38] sm:$0xff] %vm68, %v266
    %283 = vst.msk [vmem:[#allocation2 + $0x40] sm:$0xff] %vm68, %v267
    %284 = vst.msk [vmem:[#allocation2 + $0x48] sm:$0xff] %vm68, %v268
    %285 = vst.msk [vmem:[#allocation2 + $0x50] sm:$0xff] %vm68, %v269
    %286 = vst.msk [vmem:[#allocation2 + $0x58] sm:$0xff] %vm68, %v270
    %287 = vst.msk [vmem:[#allocation2 + $0x60] sm:$0xff] %vm68, %v271
    %288 = vst.msk [vmem:[#allocation2 + $0x68] sm:$0xff] %vm68, %v272
    %289 = vst.msk [vmem:[#allocation2 + $0x70] sm:$0xff] %vm68, %v273
    %290 = vst.msk [vmem:[#allocation2 + $0x78] sm:$0xff] %vm68, %v274
    %291 = vst.msk [vmem:[#allocation2 + $0x80] sm:$0xff] %vm68, %v275
    %292 = vst.msk [vmem:[#allocation2 + $0x88] sm:$0xff] %vm68, %v276
    %v293 = vlaneseq
    %v294 = vshrl.u32 %v293, 7
    %v295 = vadd.s32 %v294, 8
    %v296 = vadd.s32 %v294, 16
    %v297 = vadd.s32 %v294, 24
    %v298 = vadd.s32 %v294, 32
    %v299 = vadd.s32 %v294, 40
    %v300 = vadd.s32 %v294, 48
    %v301 = vadd.s32 %v294, 56
    %v302 = vadd.s32 %v294, 64
    %v303 = vadd.s32 %v294, 72
    %v304 = vadd.s32 %v294, 80
    %v305 = vadd.s32 %v294, 88
    %v306 = vadd.s32 %v294, 96
    %v307 = vadd.s32 %v294, 104
    %v308 = vadd.s32 %v294, 112
    %v309 = vadd.s32 %v294, 120
    %v310 = vshra.s32 %v294, 3
    %v311 = vshra.s32 %v295, 3
    %v312 = vshra.s32 %v296, 3
    %v313 = vshra.s32 %v297, 3
    %v314 = vshra.s32 %v298, 3
    %v315 = vshra.s32 %v299, 3
    %v316 = vshra.s32 %v300, 3
    %v317 = vshra.s32 %v301, 3
    %v318 = vshra.s32 %v302, 3
    %v319 = vshra.s32 %v303, 3
    %v320 = vshra.s32 %v304, 3
    %v321 = vshra.s32 %v305, 3
    %v322 = vshra.s32 %v306, 3
    %v323 = vshra.s32 %v307, 3
    %v324 = vshra.s32 %v308, 3
    %v325 = vshra.s32 %v309, 3
    %v326 = vand.u32 %v310, 7
    %v327 = vand.u32 %v311, 7
    %v328 = vand.u32 %v312, 7
    %v329 = vand.u32 %v313, 7
    %v330 = vand.u32 %v314, 7
    %v331 = vand.u32 %v315, 7
    %v332 = vand.u32 %v316, 7
    %v333 = vand.u32 %v317, 7
    %v334 = vand.u32 %v318, 7
    %v335 = vand.u32 %v319, 7
    %v336 = vand.u32 %v320, 7
    %v337 = vand.u32 %v321, 7
    %v338 = vand.u32 %v322, 7
    %v339 = vand.u32 %v323, 7
    %v340 = vand.u32 %v324, 7
    %v341 = vand.u32 %v325, 7
    %v342 = vand.u32 %v294, 7
    %v343 = vand.u32 %v295, 7
    %v344 = vand.u32 %v296, 7
    %v345 = vand.u32 %v297, 7
    %v346 = vand.u32 %v298, 7
    %v347 = vand.u32 %v299, 7
    %v348 = vand.u32 %v300, 7
    %v349 = vand.u32 %v301, 7
    %v350 = vand.u32 %v302, 7
    %v351 = vand.u32 %v303, 7
    %v352 = vand.u32 %v304, 7
    %v353 = vand.u32 %v305, 7
    %v354 = vand.u32 %v306, 7
    %v355 = vand.u32 %v307, 7
    %v356 = vand.u32 %v308, 7
    %v357 = vand.u32 %v309, 7
    %vm358 = vcmp.gt.s32.totalorder %v326, 0
    %vm359 = vcmp.gt.s32.totalorder %v327, 0
    %vm360 = vcmp.gt.s32.totalorder %v328, 0
    %vm361 = vcmp.gt.s32.totalorder %v329, 0
    %vm362 = vcmp.gt.s32.totalorder %v330, 0
    %vm363 = vcmp.gt.s32.totalorder %v331, 0
    %vm364 = vcmp.gt.s32.totalorder %v332, 0
    %vm365 = vcmp.gt.s32.totalorder %v333, 0
    %vm366 = vcmp.gt.s32.totalorder %v334, 0
    %vm367 = vcmp.gt.s32.totalorder %v335, 0
    %vm368 = vcmp.gt.s32.totalorder %v336, 0
    %vm369 = vcmp.gt.s32.totalorder %v337, 0
    %vm370 = vcmp.gt.s32.totalorder %v338, 0
    %vm371 = vcmp.gt.s32.totalorder %v339, 0
    %vm372 = vcmp.gt.s32.totalorder %v340, 0
    %vm373 = vcmp.gt.s32.totalorder %v341, 0
    %vm374 = vcmp.lt.s32.totalorder %v326, 7
    %vm375 = vcmp.lt.s32.totalorder %v327, 7
    %vm376 = vcmp.lt.s32.totalorder %v328, 7
    %vm377 = vcmp.lt.s32.totalorder %v329, 7
    %vm378 = vcmp.lt.s32.totalorder %v330, 7
    %vm379 = vcmp.lt.s32.totalorder %v331, 7
    %vm380 = vcmp.lt.s32.totalorder %v332, 7
    %vm381 = vcmp.lt.s32.totalorder %v333, 7
    %vm382 = vcmp.lt.s32.totalorder %v334, 7
    %vm383 = vcmp.lt.s32.totalorder %v335, 7
    %vm384 = vcmp.lt.s32.totalorder %v336, 7
    %vm385 = vcmp.lt.s32.totalorder %v337, 7
    %vm386 = vcmp.lt.s32.totalorder %v338, 7
    %vm387 = vcmp.lt.s32.totalorder %v339, 7
    %vm388 = vcmp.lt.s32.totalorder %v340, 7
    %vm389 = vcmp.lt.s32.totalorder %v341, 7
    %vm390 = vcmp.gt.s32.totalorder %v342, 0
    %vm391 = vcmp.gt.s32.totalorder %v343, 0
    %vm392 = vcmp.gt.s32.totalorder %v344, 0
    %vm393 = vcmp.gt.s32.totalorder %v345, 0
    %vm394 = vcmp.gt.s32.totalorder %v346, 0
    %vm395 = vcmp.gt.s32.totalorder %v347, 0
    %vm396 = vcmp.gt.s32.totalorder %v348, 0
    %vm397 = vcmp.gt.s32.totalorder %v349, 0
    %vm398 = vcmp.gt.s32.totalorder %v350, 0
    %vm399 = vcmp.gt.s32.totalorder %v351, 0
    %vm400 = vcmp.gt.s32.totalorder %v352, 0
    %vm401 = vcmp.gt.s32.totalorder %v353, 0
    %vm402 = vcmp.gt.s32.totalorder %v354, 0
    %vm403 = vcmp.gt.s32.totalorder %v355, 0
    %vm404 = vcmp.gt.s32.totalorder %v356, 0
    %vm405 = vcmp.gt.s32.totalorder %v357, 0
    %vm406 = vcmp.lt.s32.totalorder %v342, 7
    %vm407 = vcmp.lt.s32.totalorder %v343, 7
    %vm408 = vcmp.lt.s32.totalorder %v344, 7
    %vm409 = vcmp.lt.s32.totalorder %v345, 7
    %vm410 = vcmp.lt.s32.totalorder %v346, 7
    %vm411 = vcmp.lt.s32.totalorder %v347, 7
    %vm412 = vcmp.lt.s32.totalorder %v348, 7
    %vm413 = vcmp.lt.s32.totalorder %v349, 7
    %vm414 = vcmp.lt.s32.totalorder %v350, 7
    %vm415 = vcmp.lt.s32.totalorder %v351, 7
    %vm416 = vcmp.lt.s32.totalorder %v352, 7
    %vm417 = vcmp.lt.s32.totalorder %v353, 7
    %vm418 = vcmp.lt.s32.totalorder %v354, 7
    %vm419 = vcmp.lt.s32.totalorder %v355, 7
    %vm420 = vcmp.lt.s32.totalorder %v356, 7
    %vm421 = vcmp.lt.s32.totalorder %v357, 7
    %v422 = vld [vmem:[#allocation2 + $0x7] sm:$0xff]
    %v423 = vld [vmem:[#allocation2 + $0xf] sm:$0xff]
    %v424 = vld [vmem:[#allocation2 + $0x17] sm:$0xff]
    %v425 = vld [vmem:[#allocation2 + $0x1f] sm:$0xff]
    %v426 = vld [vmem:[#allocation2 + $0x27] sm:$0xff]
    %v427 = vld [vmem:[#allocation2 + $0x2f] sm:$0xff]
    %v428 = vld [vmem:[#allocation2 + $0x37] sm:$0xff]
    %v429 = vld [vmem:[#allocation2 + $0x3f] sm:$0xff]
    %v430 = vld [vmem:[#allocation2 + $0x47] sm:$0xff]
    %v431 = vld [vmem:[#allocation2 + $0x4f] sm:$0xff]
    %v432 = vld [vmem:[#allocation2 + $0x57] sm:$0xff]
    %v433 = vld [vmem:[#allocation2 + $0x5f] sm:$0xff]
    %v434 = vld [vmem:[#allocation2 + $0x67] sm:$0xff]
    %v435 = vld [vmem:[#allocation2 + $0x6f] sm:$0xff]
    %v436 = vld [vmem:[#allocation2 + $0x77] sm:$0xff]
    %v437 = vld [vmem:[#allocation2 + $0x7f] sm:$0xff]
    %vm438 = vmand %vm358, %vm390
    %vm439 = vmand %vm359, %vm391
    %vm440 = vmand %vm360, %vm392
    %vm441 = vmand %vm361, %vm393
    %vm442 = vmand %vm362, %vm394
    %vm443 = vmand %vm363, %vm395
    %vm444 = vmand %vm364, %vm396
    %vm445 = vmand %vm365, %vm397
    %vm446 = vmand %vm366, %vm398
    %vm447 = vmand %vm367, %vm399
    %vm448 = vmand %vm368, %vm400
    %vm449 = vmand %vm369, %vm401
    %vm450 = vmand %vm370, %vm402
    %vm451 = vmand %vm371, %vm403
    %vm452 = vmand %vm372, %vm404
    %vm453 = vmand %vm373, %vm405
    %v454 = vsel %vm438, %v422, 0.0
    %v455 = vsel %vm439, %v423, 0.0
    %v456 = vsel %vm440, %v424, 0.0
    %v457 = vsel %vm441, %v425, 0.0
    %v458 = vsel %vm442, %v426, 0.0
    %v459 = vsel %vm443, %v427, 0.0
    %v460 = vsel %vm444, %v428, 0.0
    %v461 = vsel %vm445, %v429, 0.0
    %v462 = vsel %vm446, %v430, 0.0
    %v463 = vsel %vm447, %v431, 0.0
    %v464 = vsel %vm448, %v432, 0.0
    %v465 = vsel %vm449, %v433, 0.0
    %v466 = vsel %vm450, %v434, 0.0
    %v467 = vsel %vm451, %v435, 0.0
    %v468 = vsel %vm452, %v436, 0.0
    %v469 = vsel %vm453, %v437, 0.0
    %v470 = vpack.c.bf16 %v455, %v454
    %v471 = vpack.c.bf16 %v457, %v456
    %v472 = vpack.c.bf16 %v459, %v458
    %v473 = vpack.c.bf16 %v461, %v460
    %v474 = vpack.c.bf16 %v463, %v462
    %v475 = vpack.c.bf16 %v465, %v464
    %v476 = vpack.c.bf16 %v467, %v466
    %v477 = vpack.c.bf16 %v469, %v468
    %v478 = vld [vmem:[#allocation3] sm:$0xf]
    %v479 = vld [vmem:[#allocation3 + $0x4] sm:$0xf]
    %v480 = vld [vmem:[#allocation3 + $0x8] sm:$0xf]
    %v481 = vld [vmem:[#allocation3 + $0xc] sm:$0xf]
    %v482 = vld [vmem:[#allocation3 + $0x10] sm:$0xf]
    %v483 = vld [vmem:[#allocation3 + $0x14] sm:$0xf]
    %v484 = vld [vmem:[#allocation2 + $0x8] sm:$0xff]
    %v485 = vld [vmem:[#allocation2 + $0x10] sm:$0xff]
    %v486 = vld [vmem:[#allocation2 + $0x18] sm:$0xff]
    %v487 = vld [vmem:[#allocation2 + $0x20] sm:$0xff]
    %v488 = vld [vmem:[#allocation2 + $0x28] sm:$0xff]
    %v489 = vld [vmem:[#allocation2 + $0x30] sm:$0xff]
    %v490 = vld [vmem:[#allocation2 + $0x38] sm:$0xff]
    %v491 = vld [vmem:[#allocation2 + $0x40] sm:$0xff]
    %v492 = vld [vmem:[#allocation2 + $0x48] sm:$0xff]
    %v493 = vld [vmem:[#allocation2 + $0x50] sm:$0xff]
    %v494 = vld [vmem:[#allocation2 + $0x58] sm:$0xff]
    %v495 = vld [vmem:[#allocation2 + $0x60] sm:$0xff]
    %v496 = vld [vmem:[#allocation2 + $0x68] sm:$0xff]
    %v497 = vld [vmem:[#allocation2 + $0x70] sm:$0xff]
    %v498 = vld [vmem:[#allocation2 + $0x78] sm:$0xff]
    %v499 = vld [vmem:[#allocation2 + $0x80] sm:$0xff]
    %v500 = vsel %vm358, %v484, 0.0
    %v501 = vsel %vm359, %v485, 0.0
    %v502 = vsel %vm360, %v486, 0.0
    %v503 = vsel %vm361, %v487, 0.0
    %v504 = vsel %vm362, %v488, 0.0
    %v505 = vsel %vm363, %v489, 0.0
    %v506 = vsel %vm364, %v490, 0.0
    %v507 = vsel %vm365, %v491, 0.0
    %v508 = vsel %vm366, %v492, 0.0
    %v509 = vsel %vm367, %v493, 0.0
    %v510 = vsel %vm368, %v494, 0.0
    %v511 = vsel %vm369, %v495, 0.0
    %v512 = vsel %vm370, %v496, 0.0
    %v513 = vsel %vm371, %v497, 0.0
    %v514 = vsel %vm372, %v498, 0.0
    %v515 = vsel %vm373, %v499, 0.0
    %v516 = vpack.c.bf16 %v501, %v500
    %v517 = vpack.c.bf16 %v503, %v502
    %v518 = vpack.c.bf16 %v505, %v504
    %v519 = vpack.c.bf16 %v507, %v506
    %v520 = vpack.c.bf16 %v509, %v508
    %v521 = vpack.c.bf16 %v511, %v510
    %v522 = vpack.c.bf16 %v513, %v512
    %v523 = vpack.c.bf16 %v515, %v514
    %s524 = scalar_lea.vmem [#allocation3], 24
    %v525 = vld [vmem:[%s524] sm:$0xf]
    %v526 = vld [vmem:[%s524 + $0x4] sm:$0xf]
    %v527 = vld [vmem:[%s524 + $0x8] sm:$0xf]
    %v528 = vld [vmem:[%s524 + $0xc] sm:$0xf]
    %v529 = vld [vmem:[%s524 + $0x10] sm:$0xf]
    %v530 = vld [vmem:[%s524 + $0x14] sm:$0xf]
    %v537 = vunpack.c.l.b16 %v525
    %v538 = vunpack.c.l.b16 %v526
    %v539 = vunpack.c.l.b16 %v527
    %v540 = vunpack.c.l.b16 %v528
    %v541 = vunpack.c.l.b16 %v529
    %v542 = vunpack.c.l.b16 %v530
    %v543 = vpack.c.b16 %v538, %v537
    %v544 = vpack.c.b16 %v540, %v539
    %v545 = vpack.c.b16 %v542, %v541
    %v550 = vsel %vm68, %v516, 0
    %v553 = vsel %vm68, %v517, 0
    %v556 = vsel %vm68, %v518, 0
    %v559 = vsel %vm68, %v519, 0
    %v562 = vsel %vm68, %v520, 0
    %v565 = vsel %vm68, %v521, 0
    %v568 = vsel %vm68, %v522, 0
    %v571 = vsel %vm68, %v523, 0
    %573 = vmatprep.subr.bf16.mxu0 0
    %574 = vmatpush1.bf16.msra.mxu0 0
    %575 = vmatprep.subr.bf16.mxu0 0
    %576 = vmatpush1.bf16.msra.mxu0 0
    %577 = vmatprep.subr.bf16.mxu0 0
    %578 = vmatpush1.bf16.msra.mxu0 0
    %579 = vmatprep.subr.bf16.mxu0 0
    %580 = vmatpush1.bf16.msra.mxu0 0
    %581 = vmatprep.subr.bf16.mxu0 0
    %582 = vmatpush1.bf16.msra.mxu0 0
    %583 = vmatprep.subr.bf16.mxu0 0
    %584 = vmatpush1.bf16.msra.mxu0 %v545
    %585 = vmatprep.subr.bf16.mxu0 0
    %586 = vmatpush1.bf16.msra.mxu0 %v544
    %587 = vmatprep.subr.bf16.mxu0 0
    %588 = vmatpush1.bf16.msra.mxu0 %v543
    %589 = vmatprep.subr.bf16.mxu0 0
    %590 = vmatpush2.bf16.msra.mxu0 0
    %591 = vmatprep.subr.bf16.mxu0 0
    %592 = vmatpush2.bf16.msra.mxu0 0
    %593 = vmatprep.subr.bf16.mxu0 0
    %594 = vmatpush2.bf16.msra.mxu0 0
    %595 = vmatprep.subr.bf16.mxu0 0
    %596 = vmatpush2.bf16.msra.mxu0 0
    %597 = vmatprep.subr.bf16.mxu0 0
    %598 = vmatpush2.bf16.msra.mxu0 0
    %599 = vmatprep.subr.bf16.mxu0 0
    %600 = vmatpush2.bf16.msra.mxu0 0
    %601 = vmatprep.subr.bf16.mxu0 0
    %602 = vmatpush2.bf16.msra.mxu0 0
    %603 = vmatprep.subr.bf16.mxu0 0
    %604 = vmatpush2.bf16.msra.mxu0 0
    %605 = vmatprep.mubr.bf16.mxu0 0
    %606 = vmatmul.mubr.bf16.gmra.mxu0 %v550
    %v607 = vpop.f32.mrf.mxu0
    %v608 = vadd.f32 0.0, %v607
    %v609 = vpop.f32.mrf.mxu0
    %v610 = vpop.f32.mrf.mxu0
    %v611 = vadd.f32 0.0, %v610
    %v612 = vpop.f32.mrf.mxu0
    %613 = vmatprep.mubr.bf16.mxu0 0
    %614 = vmatmul.mubr.bf16.gmra.mxu0 %v553
    %v615 = vpop.f32.mrf.mxu0
    %v616 = vadd.f32 0.0, %v615
    %v617 = vpop.f32.mrf.mxu0
    %v618 = vpop.f32.mrf.mxu0
    %v619 = vadd.f32 0.0, %v618
    %v620 = vpop.f32.mrf.mxu0
    %621 = vmatprep.mubr.bf16.mxu0 0
    %622 = vmatmul.mubr.bf16.gmra.mxu0 %v556
    %v623 = vpop.f32.mrf.mxu0
    %v624 = vadd.f32 0.0, %v623
    %v625 = vpop.f32.mrf.mxu0
    %v626 = vpop.f32.mrf.mxu0
    %v627 = vadd.f32 0.0, %v626
    %v628 = vpop.f32.mrf.mxu0
    %629 = vmatprep.mubr.bf16.mxu0 0
    %630 = vmatmul.mubr.bf16.gmra.mxu0 %v559
    %v631 = vpop.f32.mrf.mxu0
    %v632 = vadd.f32 0.0, %v631
    %v633 = vpop.f32.mrf.mxu0
    %v634 = vpop.f32.mrf.mxu0
    %v635 = vadd.f32 0.0, %v634
    %v636 = vpop.f32.mrf.mxu0
    %637 = vmatprep.mubr.bf16.mxu0 0
    %638 = vmatmul.mubr.bf16.gmra.mxu0 %v562
    %v639 = vpop.f32.mrf.mxu0
    %v640 = vadd.f32 0.0, %v639
    %v641 = vpop.f32.mrf.mxu0
    %v642 = vpop.f32.mrf.mxu0
    %v643 = vadd.f32 0.0, %v642
    %v644 = vpop.f32.mrf.mxu0
    %645 = vmatprep.mubr.bf16.mxu0 0
    %646 = vmatmul.mubr.bf16.gmra.mxu0 %v565
    %v647 = vpop.f32.mrf.mxu0
    %v648 = vadd.f32 0.0, %v647
    %v649 = vpop.f32.mrf.mxu0
    %v650 = vpop.f32.mrf.mxu0
    %v651 = vadd.f32 0.0, %v650
    %v652 = vpop.f32.mrf.mxu0
    %653 = vmatprep.mubr.bf16.mxu0 0
    %654 = vmatmul.mubr.bf16.gmra.mxu0 %v568
    %v655 = vpop.f32.mrf.mxu0
    %v656 = vadd.f32 0.0, %v655
    %v657 = vpop.f32.mrf.mxu0
    %v658 = vpop.f32.mrf.mxu0
    %v659 = vadd.f32 0.0, %v658
    %v660 = vpop.f32.mrf.mxu0
    %661 = vmatprep.mubr.bf16.mxu0 0
    %662 = vmatmul.mubr.bf16.gmra.mxu0 %v571
    %v663 = vpop.f32.mrf.mxu0
    %v664 = vadd.f32 0.0, %v663
    %v665 = vpop.f32.mrf.mxu0
    %v666 = vpop.f32.mrf.mxu0
    %v667 = vadd.f32 0.0, %v666
    %v668 = vpop.f32.mrf.mxu0
    %669 = vdwg.mxu0
    %v676 = vunpack.c.l.b16 %v478
    %v677 = vunpack.c.l.b16 %v479
    %v678 = vunpack.c.l.b16 %v480
    %v679 = vunpack.c.l.b16 %v481
    %v680 = vunpack.c.l.b16 %v482
    %v681 = vunpack.c.l.b16 %v483
    %v682 = vpack.c.b16 %v677, %v676
    %v683 = vpack.c.b16 %v679, %v678
    %v684 = vpack.c.b16 %v681, %v680
    %v689 = vsel %vm68, %v470, 0
    %v692 = vsel %vm68, %v471, 0
    %v695 = vsel %vm68, %v472, 0
    %v698 = vsel %vm68, %v473, 0
    %v701 = vsel %vm68, %v474, 0
    %v704 = vsel %vm68, %v475, 0
    %v707 = vsel %vm68, %v476, 0
    %v710 = vsel %vm68, %v477, 0
    %712 = vmatprep.subr.bf16.mxu0 0
    %713 = vmatpush1.bf16.msra.mxu0 0
    %714 = vmatprep.subr.bf16.mxu0 0
    %715 = vmatpush1.bf16.msra.mxu0 0
    %716 = vmatprep.subr.bf16.mxu0 0
    %717 = vmatpush1.bf16.msra.mxu0 0
    %718 = vmatprep.subr.bf16.mxu0 0
    %719 = vmatpush1.bf16.msra.mxu0 0
    %720 = vmatprep.subr.bf16.mxu0 0
    %721 = vmatpush1.bf16.msra.mxu0 0
    %722 = vmatprep.subr.bf16.mxu0 0
    %723 = vmatpush1.bf16.msra.mxu0 %v684
    %724 = vmatprep.subr.bf16.mxu0 0
    %725 = vmatpush1.bf16.msra.mxu0 %v683
    %726 = vmatprep.subr.bf16.mxu0 0
    %727 = vmatpush1.bf16.msra.mxu0 %v682
    %728 = vmatprep.subr.bf16.mxu0 0
    %729 = vmatpush2.bf16.msra.mxu0 0
    %730 = vmatprep.subr.bf16.mxu0 0
    %731 = vmatpush2.bf16.msra.mxu0 0
    %732 = vmatprep.subr.bf16.mxu0 0
    %733 = vmatpush2.bf16.msra.mxu0 0
    %734 = vmatprep.subr.bf16.mxu0 0
    %735 = vmatpush2.bf16.msra.mxu0 0
    %736 = vmatprep.subr.bf16.mxu0 0
    %737 = vmatpush2.bf16.msra.mxu0 0
    %738 = vmatprep.subr.bf16.mxu0 0
    %739 = vmatpush2.bf16.msra.mxu0 0
    %740 = vmatprep.subr.bf16.mxu0 0
    %741 = vmatpush2.bf16.msra.mxu0 0
    %742 = vmatprep.subr.bf16.mxu0 0
    %743 = vmatpush2.bf16.msra.mxu0 0
    %744 = vmatprep.mubr.bf16.mxu0 0
    %745 = vmatmul.mubr.bf16.gmra.mxu0 %v689
    %v746 = vpop.f32.mrf.mxu0
    %v747 = vadd.f32 %v608, %v746
    %v748 = vpop.f32.mrf.mxu0
    %v749 = vpop.f32.mrf.mxu0
    %v750 = vadd.f32 %v611, %v749
    %v751 = vpop.f32.mrf.mxu0
    %752 = vmatprep.mubr.bf16.mxu0 0
    %753 = vmatmul.mubr.bf16.gmra.mxu0 %v692
    %v754 = vpop.f32.mrf.mxu0
    %v755 = vadd.f32 %v616, %v754
    %v756 = vpop.f32.mrf.mxu0
    %v757 = vpop.f32.mrf.mxu0
    %v758 = vadd.f32 %v619, %v757
    %v759 = vpop.f32.mrf.mxu0
    %760 = vmatprep.mubr.bf16.mxu0 0
    %761 = vmatmul.mubr.bf16.gmra.mxu0 %v695
    %v762 = vpop.f32.mrf.mxu0
    %v763 = vadd.f32 %v624, %v762
    %v764 = vpop.f32.mrf.mxu0
    %v765 = vpop.f32.mrf.mxu0
    %v766 = vadd.f32 %v627, %v765
    %v767 = vpop.f32.mrf.mxu0
    %768 = vmatprep.mubr.bf16.mxu0 0
    %769 = vmatmul.mubr.bf16.gmra.mxu0 %v698
    %v770 = vpop.f32.mrf.mxu0
    %v771 = vadd.f32 %v632, %v770
    %v772 = vpop.f32.mrf.mxu0
    %v773 = vpop.f32.mrf.mxu0
    %v774 = vadd.f32 %v635, %v773
    %v775 = vpop.f32.mrf.mxu0
    %776 = vmatprep.mubr.bf16.mxu0 0
    %777 = vmatmul.mubr.bf16.gmra.mxu0 %v701
    %v778 = vpop.f32.mrf.mxu0
    %v779 = vadd.f32 %v640, %v778
    %v780 = vpop.f32.mrf.mxu0
    %v781 = vpop.f32.mrf.mxu0
    %v782 = vadd.f32 %v643, %v781
    %v783 = vpop.f32.mrf.mxu0
    %784 = vmatprep.mubr.bf16.mxu0 0
    %785 = vmatmul.mubr.bf16.gmra.mxu0 %v704
    %v786 = vpop.f32.mrf.mxu0
    %v787 = vadd.f32 %v648, %v786
    %v788 = vpop.f32.mrf.mxu0
    %v789 = vpop.f32.mrf.mxu0
    %v790 = vadd.f32 %v651, %v789
    %v791 = vpop.f32.mrf.mxu0
    %792 = vmatprep.mubr.bf16.mxu0 0
    %793 = vmatmul.mubr.bf16.gmra.mxu0 %v707
    %v794 = vpop.f32.mrf.mxu0
    %v795 = vadd.f32 %v656, %v794
    %v796 = vpop.f32.mrf.mxu0
    %v797 = vpop.f32.mrf.mxu0
    %v798 = vadd.f32 %v659, %v797
    %v799 = vpop.f32.mrf.mxu0
    %800 = vmatprep.mubr.bf16.mxu0 0
    %801 = vmatmul.mubr.bf16.gmra.mxu0 %v710
    %v802 = vpop.f32.mrf.mxu0
    %v803 = vadd.f32 %v664, %v802
    %v804 = vpop.f32.mrf.mxu0
    %v805 = vpop.f32.mrf.mxu0
    %v806 = vadd.f32 %v667, %v805
    %v807 = vpop.f32.mrf.mxu0
    %808 = vdwg.mxu0
    %v809 = vld [vmem:[#allocation2 + $0x9] sm:$0xff]
    %v810 = vld [vmem:[#allocation2 + $0x11] sm:$0xff]
    %v811 = vld [vmem:[#allocation2 + $0x19] sm:$0xff]
    %v812 = vld [vmem:[#allocation2 + $0x21] sm:$0xff]
    %v813 = vld [vmem:[#allocation2 + $0x29] sm:$0xff]
    %v814 = vld [vmem:[#allocation2 + $0x31] sm:$0xff]
    %v815 = vld [vmem:[#allocation2 + $0x39] sm:$0xff]
    %v816 = vld [vmem:[#allocation2 + $0x41] sm:$0xff]
    %v817 = vld [vmem:[#allocation2 + $0x49] sm:$0xff]
    %v818 = vld [vmem:[#allocation2 + $0x51] sm:$0xff]
    %v819 = vld [vmem:[#allocation2 + $0x59] sm:$0xff]
    %v820 = vld [vmem:[#allocation2 + $0x61] sm:$0xff]
    %v821 = vld [vmem:[#allocation2 + $0x69] sm:$0xff]
    %v822 = vld [vmem:[#allocation2 + $0x71] sm:$0xff]
    %v823 = vld [vmem:[#allocation2 + $0x79] sm:$0xff]
    %v824 = vld [vmem:[#allocation2 + $0x81] sm:$0xff]
    %vm825 = vmand %vm358, %vm406
    %vm826 = vmand %vm359, %vm407
    %vm827 = vmand %vm360, %vm408
    %vm828 = vmand %vm361, %vm409
    %vm829 = vmand %vm362, %vm410
    %vm830 = vmand %vm363, %vm411
    %vm831 = vmand %vm364, %vm412
    %vm832 = vmand %vm365, %vm413
    %vm833 = vmand %vm366, %vm414
    %vm834 = vmand %vm367, %vm415
    %vm835 = vmand %vm368, %vm416
    %vm836 = vmand %vm369, %vm417
    %vm837 = vmand %vm370, %vm418
    %vm838 = vmand %vm371, %vm419
    %vm839 = vmand %vm372, %vm420
    %vm840 = vmand %vm373, %vm421
    %v841 = vsel %vm825, %v809, 0.0
    %v842 = vsel %vm826, %v810, 0.0
    %v843 = vsel %vm827, %v811, 0.0
    %v844 = vsel %vm828, %v812, 0.0
    %v845 = vsel %vm829, %v813, 0.0
    %v846 = vsel %vm830, %v814, 0.0
    %v847 = vsel %vm831, %v815, 0.0
    %v848 = vsel %vm832, %v816, 0.0
    %v849 = vsel %vm833, %v817, 0.0
    %v850 = vsel %vm834, %v818, 0.0
    %v851 = vsel %vm835, %v819, 0.0
    %v852 = vsel %vm836, %v820, 0.0
    %v853 = vsel %vm837, %v821, 0.0
    %v854 = vsel %vm838, %v822, 0.0
    %v855 = vsel %vm839, %v823, 0.0
    %v856 = vsel %vm840, %v824, 0.0
    %v857 = vpack.c.bf16 %v842, %v841
    %v858 = vpack.c.bf16 %v844, %v843
    %v859 = vpack.c.bf16 %v846, %v845
    %v860 = vpack.c.bf16 %v848, %v847
    %v861 = vpack.c.bf16 %v850, %v849
    %v862 = vpack.c.bf16 %v852, %v851
    %v863 = vpack.c.bf16 %v854, %v853
    %v864 = vpack.c.bf16 %v856, %v855
    %s865 = scalar_lea.vmem [#allocation3], 48
    %v866 = vld [vmem:[%s865] sm:$0xf]
    %v867 = vld [vmem:[%s865 + $0x4] sm:$0xf]
    %v868 = vld [vmem:[%s865 + $0x8] sm:$0xf]
    %v869 = vld [vmem:[%s865 + $0xc] sm:$0xf]
    %v870 = vld [vmem:[%s865 + $0x10] sm:$0xf]
    %v871 = vld [vmem:[%s865 + $0x14] sm:$0xf]
    %v878 = vunpack.c.l.b16 %v866
    %v879 = vunpack.c.l.b16 %v867
    %v880 = vunpack.c.l.b16 %v868
    %v881 = vunpack.c.l.b16 %v869
    %v882 = vunpack.c.l.b16 %v870
    %v883 = vunpack.c.l.b16 %v871
    %v884 = vpack.c.b16 %v879, %v878
    %v885 = vpack.c.b16 %v881, %v880
    %v886 = vpack.c.b16 %v883, %v882
    %v891 = vsel %vm68, %v857, 0
    %v894 = vsel %vm68, %v858, 0
    %v897 = vsel %vm68, %v859, 0
    %v900 = vsel %vm68, %v860, 0
    %v903 = vsel %vm68, %v861, 0
    %v906 = vsel %vm68, %v862, 0
    %v909 = vsel %vm68, %v863, 0
    %v912 = vsel %vm68, %v864, 0
    %914 = vmatprep.subr.bf16.mxu0 0
    %915 = vmatpush1.bf16.msra.mxu0 0
    %916 = vmatprep.subr.bf16.mxu0 0
    %917 = vmatpush1.bf16.msra.mxu0 0
    %918 = vmatprep.subr.bf16.mxu0 0
    %919 = vmatpush1.bf16.msra.mxu0 0
    %920 = vmatprep.subr.bf16.mxu0 0
    %921 = vmatpush1.bf16.msra.mxu0 0
    %922 = vmatprep.subr.bf16.mxu0 0
    %923 = vmatpush1.bf16.msra.mxu0 0
    %924 = vmatprep.subr.bf16.mxu0 0
    %925 = vmatpush1.bf16.msra.mxu0 %v886
    %926 = vmatprep.subr.bf16.mxu0 0
    %927 = vmatpush1.bf16.msra.mxu0 %v885
    %928 = vmatprep.subr.bf16.mxu0 0
    %929 = vmatpush1.bf16.msra.mxu0 %v884
    %930 = vmatprep.subr.bf16.mxu0 0
    %931 = vmatpush2.bf16.msra.mxu0 0
    %932 = vmatprep.subr.bf16.mxu0 0
    %933 = vmatpush2.bf16.msra.mxu0 0
    %934 = vmatprep.subr.bf16.mxu0 0
    %935 = vmatpush2.bf16.msra.mxu0 0
    %936 = vmatprep.subr.bf16.mxu0 0
    %937 = vmatpush2.bf16.msra.mxu0 0
    %938 = vmatprep.subr.bf16.mxu0 0
    %939 = vmatpush2.bf16.msra.mxu0 0
    %940 = vmatprep.subr.bf16.mxu0 0
    %941 = vmatpush2.bf16.msra.mxu0 0
    %942 = vmatprep.subr.bf16.mxu0 0
    %943 = vmatpush2.bf16.msra.mxu0 0
    %944 = vmatprep.subr.bf16.mxu0 0
    %945 = vmatpush2.bf16.msra.mxu0 0
    %946 = vmatprep.mubr.bf16.mxu0 0
    %947 = vmatmul.mubr.bf16.gmra.mxu0 %v891
    %v948 = vpop.f32.mrf.mxu0
    %v949 = vadd.f32 0.0, %v948
    %v950 = vpop.f32.mrf.mxu0
    %v951 = vpop.f32.mrf.mxu0
    %v952 = vadd.f32 0.0, %v951
    %v953 = vpop.f32.mrf.mxu0
    %954 = vmatprep.mubr.bf16.mxu0 0
    %955 = vmatmul.mubr.bf16.gmra.mxu0 %v894
    %v956 = vpop.f32.mrf.mxu0
    %v957 = vadd.f32 0.0, %v956
    %v958 = vpop.f32.mrf.mxu0
    %v959 = vpop.f32.mrf.mxu0
    %v960 = vadd.f32 0.0, %v959
    %v961 = vpop.f32.mrf.mxu0
    %962 = vmatprep.mubr.bf16.mxu0 0
    %963 = vmatmul.mubr.bf16.gmra.mxu0 %v897
    %v964 = vpop.f32.mrf.mxu0
    %v965 = vadd.f32 0.0, %v964
    %v966 = vpop.f32.mrf.mxu0
    %v967 = vpop.f32.mrf.mxu0
    %v968 = vadd.f32 0.0, %v967
    %v969 = vpop.f32.mrf.mxu0
    %970 = vmatprep.mubr.bf16.mxu0 0
    %971 = vmatmul.mubr.bf16.gmra.mxu0 %v900
    %v972 = vpop.f32.mrf.mxu0
    %v973 = vadd.f32 0.0, %v972
    %v974 = vpop.f32.mrf.mxu0
    %v975 = vpop.f32.mrf.mxu0
    %v976 = vadd.f32 0.0, %v975
    %v977 = vpop.f32.mrf.mxu0
    %978 = vmatprep.mubr.bf16.mxu0 0
    %979 = vmatmul.mubr.bf16.gmra.mxu0 %v903
    %v980 = vpop.f32.mrf.mxu0
    %v981 = vadd.f32 0.0, %v980
    %v982 = vpop.f32.mrf.mxu0
    %v983 = vpop.f32.mrf.mxu0
    %v984 = vadd.f32 0.0, %v983
    %v985 = vpop.f32.mrf.mxu0
    %986 = vmatprep.mubr.bf16.mxu0 0
    %987 = vmatmul.mubr.bf16.gmra.mxu0 %v906
    %v988 = vpop.f32.mrf.mxu0
    %v989 = vadd.f32 0.0, %v988
    %v990 = vpop.f32.mrf.mxu0
    %v991 = vpop.f32.mrf.mxu0
    %v992 = vadd.f32 0.0, %v991
    %v993 = vpop.f32.mrf.mxu0
    %994 = vmatprep.mubr.bf16.mxu0 0
    %995 = vmatmul.mubr.bf16.gmra.mxu0 %v909
    %v996 = vpop.f32.mrf.mxu0
    %v997 = vadd.f32 0.0, %v996
    %v998 = vpop.f32.mrf.mxu0
    %v999 = vpop.f32.mrf.mxu0
    %v1000 = vadd.f32 0.0, %v999
    %v1001 = vpop.f32.mrf.mxu0
    %1002 = vmatprep.mubr.bf16.mxu0 0
    %1003 = vmatmul.mubr.bf16.gmra.mxu0 %v912
    %v1004 = vpop.f32.mrf.mxu0
    %v1005 = vadd.f32 0.0, %v1004
    %v1006 = vpop.f32.mrf.mxu0
    %v1007 = vpop.f32.mrf.mxu0
    %v1008 = vadd.f32 0.0, %v1007
    %v1009 = vpop.f32.mrf.mxu0
    %1010 = vdwg.mxu0
    %v1011 = vadd.f32 %v747, %v949
    %v1012 = vadd.f32 %v750, %v952
    %v1013 = vadd.f32 %v755, %v957
    %v1014 = vadd.f32 %v758, %v960
    %v1015 = vadd.f32 %v763, %v965
    %v1016 = vadd.f32 %v766, %v968
    %v1017 = vadd.f32 %v771, %v973
    %v1018 = vadd.f32 %v774, %v976
    %v1019 = vadd.f32 %v779, %v981
    %v1020 = vadd.f32 %v782, %v984
    %v1021 = vadd.f32 %v787, %v989
    %v1022 = vadd.f32 %v790, %v992
    %v1023 = vadd.f32 %v795, %v997
    %v1024 = vadd.f32 %v798, %v1000
    %v1025 = vadd.f32 %v803, %v1005
    %v1026 = vadd.f32 %v806, %v1008
    %v1027 = vld [vmem:[#allocation2 + $0xf] sm:$0xff]
    %v1028 = vld [vmem:[#allocation2 + $0x17] sm:$0xff]
    %v1029 = vld [vmem:[#allocation2 + $0x1f] sm:$0xff]
    %v1030 = vld [vmem:[#allocation2 + $0x27] sm:$0xff]
    %v1031 = vld [vmem:[#allocation2 + $0x2f] sm:$0xff]
    %v1032 = vld [vmem:[#allocation2 + $0x37] sm:$0xff]
    %v1033 = vld [vmem:[#allocation2 + $0x3f] sm:$0xff]
    %v1034 = vld [vmem:[#allocation2 + $0x47] sm:$0xff]
    %v1035 = vld [vmem:[#allocation2 + $0x4f] sm:$0xff]
    %v1036 = vld [vmem:[#allocation2 + $0x57] sm:$0xff]
    %v1037 = vld [vmem:[#allocation2 + $0x5f] sm:$0xff]
    %v1038 = vld [vmem:[#allocation2 + $0x67] sm:$0xff]
    %v1039 = vld [vmem:[#allocation2 + $0x6f] sm:$0xff]
    %v1040 = vld [vmem:[#allocation2 + $0x77] sm:$0xff]
    %v1041 = vld [vmem:[#allocation2 + $0x7f] sm:$0xff]
    %v1042 = vld [vmem:[#allocation2 + $0x87] sm:$0xff]
    %v1043 = vsel %vm390, %v1027, 0.0
    %v1044 = vsel %vm391, %v1028, 0.0
    %v1045 = vsel %vm392, %v1029, 0.0
    %v1046 = vsel %vm393, %v1030, 0.0
    %v1047 = vsel %vm394, %v1031, 0.0
    %v1048 = vsel %vm395, %v1032, 0.0
    %v1049 = vsel %vm396, %v1033, 0.0
    %v1050 = vsel %vm397, %v1034, 0.0
    %v1051 = vsel %vm398, %v1035, 0.0
    %v1052 = vsel %vm399, %v1036, 0.0
    %v1053 = vsel %vm400, %v1037, 0.0
    %v1054 = vsel %vm401, %v1038, 0.0
    %v1055 = vsel %vm402, %v1039, 0.0
    %v1056 = vsel %vm403, %v1040, 0.0
    %v1057 = vsel %vm404, %v1041, 0.0
    %v1058 = vsel %vm405, %v1042, 0.0
    %v1059 = vpack.c.bf16 %v1044, %v1043
    %v1060 = vpack.c.bf16 %v1046, %v1045
    %v1061 = vpack.c.bf16 %v1048, %v1047
    %v1062 = vpack.c.bf16 %v1050, %v1049
    %v1063 = vpack.c.bf16 %v1052, %v1051
    %v1064 = vpack.c.bf16 %v1054, %v1053
    %v1065 = vpack.c.bf16 %v1056, %v1055
    %v1066 = vpack.c.bf16 %v1058, %v1057
    %s1067 = scalar_lea.vmem [#allocation3], 72
    %v1068 = vld [vmem:[%s1067] sm:$0xf]
    %v1069 = vld [vmem:[%s1067 + $0x4] sm:$0xf]
    %v1070 = vld [vmem:[%s1067 + $0x8] sm:$0xf]
    %v1071 = vld [vmem:[%s1067 + $0xc] sm:$0xf]
    %v1072 = vld [vmem:[%s1067 + $0x10] sm:$0xf]
    %v1073 = vld [vmem:[%s1067 + $0x14] sm:$0xf]
    %v1080 = vunpack.c.l.b16 %v1068
    %v1081 = vunpack.c.l.b16 %v1069
    %v1082 = vunpack.c.l.b16 %v1070
    %v1083 = vunpack.c.l.b16 %v1071
    %v1084 = vunpack.c.l.b16 %v1072
    %v1085 = vunpack.c.l.b16 %v1073
    %v1086 = vpack.c.b16 %v1081, %v1080
    %v1087 = vpack.c.b16 %v1083, %v1082
    %v1088 = vpack.c.b16 %v1085, %v1084
    %v1093 = vsel %vm68, %v1059, 0
    %v1096 = vsel %vm68, %v1060, 0
    %v1099 = vsel %vm68, %v1061, 0
    %v1102 = vsel %vm68, %v1062, 0
    %v1105 = vsel %vm68, %v1063, 0
    %v1108 = vsel %vm68, %v1064, 0
    %v1111 = vsel %vm68, %v1065, 0
    %v1114 = vsel %vm68, %v1066, 0
    %1116 = vmatprep.subr.bf16.mxu0 0
    %1117 = vmatpush1.bf16.msra.mxu0 0
    %1118 = vmatprep.subr.bf16.mxu0 0
    %1119 = vmatpush1.bf16.msra.mxu0 0
    %1120 = vmatprep.subr.bf16.mxu0 0
    %1121 = vmatpush1.bf16.msra.mxu0 0
    %1122 = vmatprep.subr.bf16.mxu0 0
    %1123 = vmatpush1.bf16.msra.mxu0 0
    %1124 = vmatprep.subr.bf16.mxu0 0
    %1125 = vmatpush1.bf16.msra.mxu0 0
    %1126 = vmatprep.subr.bf16.mxu0 0
    %1127 = vmatpush1.bf16.msra.mxu0 %v1088
    %1128 = vmatprep.subr.bf16.mxu0 0
    %1129 = vmatpush1.bf16.msra.mxu0 %v1087
    %1130 = vmatprep.subr.bf16.mxu0 0
    %1131 = vmatpush1.bf16.msra.mxu0 %v1086
    %1132 = vmatprep.subr.bf16.mxu0 0
    %1133 = vmatpush2.bf16.msra.mxu0 0
    %1134 = vmatprep.subr.bf16.mxu0 0
    %1135 = vmatpush2.bf16.msra.mxu0 0
    %1136 = vmatprep.subr.bf16.mxu0 0
    %1137 = vmatpush2.bf16.msra.mxu0 0
    %1138 = vmatprep.subr.bf16.mxu0 0
    %1139 = vmatpush2.bf16.msra.mxu0 0
    %1140 = vmatprep.subr.bf16.mxu0 0
    %1141 = vmatpush2.bf16.msra.mxu0 0
    %1142 = vmatprep.subr.bf16.mxu0 0
    %1143 = vmatpush2.bf16.msra.mxu0 0
    %1144 = vmatprep.subr.bf16.mxu0 0
    %1145 = vmatpush2.bf16.msra.mxu0 0
    %1146 = vmatprep.subr.bf16.mxu0 0
    %1147 = vmatpush2.bf16.msra.mxu0 0
    %1148 = vmatprep.mubr.bf16.mxu0 0
    %1149 = vmatmul.mubr.bf16.gmra.mxu0 %v1093
    %v1150 = vpop.f32.mrf.mxu0
    %v1151 = vadd.f32 0.0, %v1150
    %v1152 = vpop.f32.mrf.mxu0
    %v1153 = vpop.f32.mrf.mxu0
    %v1154 = vadd.f32 0.0, %v1153
    %v1155 = vpop.f32.mrf.mxu0
    %1156 = vmatprep.mubr.bf16.mxu0 0
    %1157 = vmatmul.mubr.bf16.gmra.mxu0 %v1096
    %v1158 = vpop.f32.mrf.mxu0
    %v1159 = vadd.f32 0.0, %v1158
    %v1160 = vpop.f32.mrf.mxu0
    %v1161 = vpop.f32.mrf.mxu0
    %v1162 = vadd.f32 0.0, %v1161
    %v1163 = vpop.f32.mrf.mxu0
    %1164 = vmatprep.mubr.bf16.mxu0 0
    %1165 = vmatmul.mubr.bf16.gmra.mxu0 %v1099
    %v1166 = vpop.f32.mrf.mxu0
    %v1167 = vadd.f32 0.0, %v1166
    %v1168 = vpop.f32.mrf.mxu0
    %v1169 = vpop.f32.mrf.mxu0
    %v1170 = vadd.f32 0.0, %v1169
    %v1171 = vpop.f32.mrf.mxu0
    %1172 = vmatprep.mubr.bf16.mxu0 0
    %1173 = vmatmul.mubr.bf16.gmra.mxu0 %v1102
    %v1174 = vpop.f32.mrf.mxu0
    %v1175 = vadd.f32 0.0, %v1174
    %v1176 = vpop.f32.mrf.mxu0
    %v1177 = vpop.f32.mrf.mxu0
    %v1178 = vadd.f32 0.0, %v1177
    %v1179 = vpop.f32.mrf.mxu0
    %1180 = vmatprep.mubr.bf16.mxu0 0
    %1181 = vmatmul.mubr.bf16.gmra.mxu0 %v1105
    %v1182 = vpop.f32.mrf.mxu0
    %v1183 = vadd.f32 0.0, %v1182
    %v1184 = vpop.f32.mrf.mxu0
    %v1185 = vpop.f32.mrf.mxu0
    %v1186 = vadd.f32 0.0, %v1185
    %v1187 = vpop.f32.mrf.mxu0
    %1188 = vmatprep.mubr.bf16.mxu0 0
    %1189 = vmatmul.mubr.bf16.gmra.mxu0 %v1108
    %v1190 = vpop.f32.mrf.mxu0
    %v1191 = vadd.f32 0.0, %v1190
    %v1192 = vpop.f32.mrf.mxu0
    %v1193 = vpop.f32.mrf.mxu0
    %v1194 = vadd.f32 0.0, %v1193
    %v1195 = vpop.f32.mrf.mxu0
    %1196 = vmatprep.mubr.bf16.mxu0 0
    %1197 = vmatmul.mubr.bf16.gmra.mxu0 %v1111
    %v1198 = vpop.f32.mrf.mxu0
    %v1199 = vadd.f32 0.0, %v1198
    %v1200 = vpop.f32.mrf.mxu0
    %v1201 = vpop.f32.mrf.mxu0
    %v1202 = vadd.f32 0.0, %v1201
    %v1203 = vpop.f32.mrf.mxu0
    %1204 = vmatprep.mubr.bf16.mxu0 0
    %1205 = vmatmul.mubr.bf16.gmra.mxu0 %v1114
    %v1206 = vpop.f32.mrf.mxu0
    %v1207 = vadd.f32 0.0, %v1206
    %v1208 = vpop.f32.mrf.mxu0
    %v1209 = vpop.f32.mrf.mxu0
    %v1210 = vadd.f32 0.0, %v1209
    %v1211 = vpop.f32.mrf.mxu0
    %1212 = vdwg.mxu0
    %v1213 = vadd.f32 %v1011, %v1151
    %v1214 = vadd.f32 %v1012, %v1154
    %v1215 = vadd.f32 %v1013, %v1159
    %v1216 = vadd.f32 %v1014, %v1162
    %v1217 = vadd.f32 %v1015, %v1167
    %v1218 = vadd.f32 %v1016, %v1170
    %v1219 = vadd.f32 %v1017, %v1175
    %v1220 = vadd.f32 %v1018, %v1178
    %v1221 = vadd.f32 %v1019, %v1183
    %v1222 = vadd.f32 %v1020, %v1186
    %v1223 = vadd.f32 %v1021, %v1191
    %v1224 = vadd.f32 %v1022, %v1194
    %v1225 = vadd.f32 %v1023, %v1199
    %v1226 = vadd.f32 %v1024, %v1202
    %v1227 = vadd.f32 %v1025, %v1207
    %v1228 = vadd.f32 %v1026, %v1210
    %v1229 = vld [vmem:[#allocation2 + $0x10] sm:$0xff]
    %v1230 = vld [vmem:[#allocation2 + $0x18] sm:$0xff]
    %v1231 = vld [vmem:[#allocation2 + $0x20] sm:$0xff]
    %v1232 = vld [vmem:[#allocation2 + $0x28] sm:$0xff]
    %v1233 = vld [vmem:[#allocation2 + $0x30] sm:$0xff]
    %v1234 = vld [vmem:[#allocation2 + $0x38] sm:$0xff]
    %v1235 = vld [vmem:[#allocation2 + $0x40] sm:$0xff]
    %v1236 = vld [vmem:[#allocation2 + $0x48] sm:$0xff]
    %v1237 = vld [vmem:[#allocation2 + $0x50] sm:$0xff]
    %v1238 = vld [vmem:[#allocation2 + $0x58] sm:$0xff]
    %v1239 = vld [vmem:[#allocation2 + $0x60] sm:$0xff]
    %v1240 = vld [vmem:[#allocation2 + $0x68] sm:$0xff]
    %v1241 = vld [vmem:[#allocation2 + $0x70] sm:$0xff]
    %v1242 = vld [vmem:[#allocation2 + $0x78] sm:$0xff]
    %v1243 = vld [vmem:[#allocation2 + $0x80] sm:$0xff]
    %v1244 = vld [vmem:[#allocation2 + $0x88] sm:$0xff]
    %v1245 = vpack.c.bf16 %v1230, %v1229
    %v1246 = vpack.c.bf16 %v1232, %v1231
    %v1247 = vpack.c.bf16 %v1234, %v1233
    %v1248 = vpack.c.bf16 %v1236, %v1235
    %v1249 = vpack.c.bf16 %v1238, %v1237
    %v1250 = vpack.c.bf16 %v1240, %v1239
    %v1251 = vpack.c.bf16 %v1242, %v1241
    %v1252 = vpack.c.bf16 %v1244, %v1243
    %s1253 = scalar_lea.vmem [#allocation3], 96
    %v1254 = vld [vmem:[%s1253] sm:$0xf]
    %v1255 = vld [vmem:[%s1253 + $0x4] sm:$0xf]
    %v1256 = vld [vmem:[%s1253 + $0x8] sm:$0xf]
    %v1257 = vld [vmem:[%s1253 + $0xc] sm:$0xf]
    %v1258 = vld [vmem:[%s1253 + $0x10] sm:$0xf]
    %v1259 = vld [vmem:[%s1253 + $0x14] sm:$0xf]
    %v1266 = vunpack.c.l.b16 %v1254
    %v1267 = vunpack.c.l.b16 %v1255
    %v1268 = vunpack.c.l.b16 %v1256
    %v1269 = vunpack.c.l.b16 %v1257
    %v1270 = vunpack.c.l.b16 %v1258
    %v1271 = vunpack.c.l.b16 %v1259
    %v1272 = vpack.c.b16 %v1267, %v1266
    %v1273 = vpack.c.b16 %v1269, %v1268
    %v1274 = vpack.c.b16 %v1271, %v1270
    %v1279 = vsel %vm68, %v1245, 0
    %v1282 = vsel %vm68, %v1246, 0
    %v1285 = vsel %vm68, %v1247, 0
    %v1288 = vsel %vm68, %v1248, 0
    %v1291 = vsel %vm68, %v1249, 0
    %v1294 = vsel %vm68, %v1250, 0
    %v1297 = vsel %vm68, %v1251, 0
    %v1300 = vsel %vm68, %v1252, 0
    %1302 = vmatprep.subr.bf16.mxu0 0
    %1303 = vmatpush1.bf16.msra.mxu0 0
    %1304 = vmatprep.subr.bf16.mxu0 0
    %1305 = vmatpush1.bf16.msra.mxu0 0
    %1306 = vmatprep.subr.bf16.mxu0 0
    %1307 = vmatpush1.bf16.msra.mxu0 0
    %1308 = vmatprep.subr.bf16.mxu0 0
    %1309 = vmatpush1.bf16.msra.mxu0 0
    %1310 = vmatprep.subr.bf16.mxu0 0
    %1311 = vmatpush1.bf16.msra.mxu0 0
    %1312 = vmatprep.subr.bf16.mxu0 0
    %1313 = vmatpush1.bf16.msra.mxu0 %v1274
    %1314 = vmatprep.subr.bf16.mxu0 0
    %1315 = vmatpush1.bf16.msra.mxu0 %v1273
    %1316 = vmatprep.subr.bf16.mxu0 0
    %1317 = vmatpush1.bf16.msra.mxu0 %v1272
    %1318 = vmatprep.subr.bf16.mxu0 0
    %1319 = vmatpush2.bf16.msra.mxu0 0
    %1320 = vmatprep.subr.bf16.mxu0 0
    %1321 = vmatpush2.bf16.msra.mxu0 0
    %1322 = vmatprep.subr.bf16.mxu0 0
    %1323 = vmatpush2.bf16.msra.mxu0 0
    %1324 = vmatprep.subr.bf16.mxu0 0
    %1325 = vmatpush2.bf16.msra.mxu0 0
    %1326 = vmatprep.subr.bf16.mxu0 0
    %1327 = vmatpush2.bf16.msra.mxu0 0
    %1328 = vmatprep.subr.bf16.mxu0 0
    %1329 = vmatpush2.bf16.msra.mxu0 0
    %1330 = vmatprep.subr.bf16.mxu0 0
    %1331 = vmatpush2.bf16.msra.mxu0 0
    %1332 = vmatprep.subr.bf16.mxu0 0
    %1333 = vmatpush2.bf16.msra.mxu0 0
    %1334 = vmatprep.mubr.bf16.mxu0 0
    %1335 = vmatmul.mubr.bf16.gmra.mxu0 %v1279
    %v1336 = vpop.f32.mrf.mxu0
    %v1337 = vadd.f32 0.0, %v1336
    %v1338 = vpop.f32.mrf.mxu0
    %v1339 = vpop.f32.mrf.mxu0
    %v1340 = vadd.f32 0.0, %v1339
    %v1341 = vpop.f32.mrf.mxu0
    %1342 = vmatprep.mubr.bf16.mxu0 0
    %1343 = vmatmul.mubr.bf16.gmra.mxu0 %v1282
    %v1344 = vpop.f32.mrf.mxu0
    %v1345 = vadd.f32 0.0, %v1344
    %v1346 = vpop.f32.mrf.mxu0
    %v1347 = vpop.f32.mrf.mxu0
    %v1348 = vadd.f32 0.0, %v1347
    %v1349 = vpop.f32.mrf.mxu0
    %1350 = vmatprep.mubr.bf16.mxu0 0
    %1351 = vmatmul.mubr.bf16.gmra.mxu0 %v1285
    %v1352 = vpop.f32.mrf.mxu0
    %v1353 = vadd.f32 0.0, %v1352
    %v1354 = vpop.f32.mrf.mxu0
    %v1355 = vpop.f32.mrf.mxu0
    %v1356 = vadd.f32 0.0, %v1355
    %v1357 = vpop.f32.mrf.mxu0
    %1358 = vmatprep.mubr.bf16.mxu0 0
    %1359 = vmatmul.mubr.bf16.gmra.mxu0 %v1288
    %v1360 = vpop.f32.mrf.mxu0
    %v1361 = vadd.f32 0.0, %v1360
    %v1362 = vpop.f32.mrf.mxu0
    %v1363 = vpop.f32.mrf.mxu0
    %v1364 = vadd.f32 0.0, %v1363
    %v1365 = vpop.f32.mrf.mxu0
    %1366 = vmatprep.mubr.bf16.mxu0 0
    %1367 = vmatmul.mubr.bf16.gmra.mxu0 %v1291
    %v1368 = vpop.f32.mrf.mxu0
    %v1369 = vadd.f32 0.0, %v1368
    %v1370 = vpop.f32.mrf.mxu0
    %v1371 = vpop.f32.mrf.mxu0
    %v1372 = vadd.f32 0.0, %v1371
    %v1373 = vpop.f32.mrf.mxu0
    %1374 = vmatprep.mubr.bf16.mxu0 0
    %1375 = vmatmul.mubr.bf16.gmra.mxu0 %v1294
    %v1376 = vpop.f32.mrf.mxu0
    %v1377 = vadd.f32 0.0, %v1376
    %v1378 = vpop.f32.mrf.mxu0
    %v1379 = vpop.f32.mrf.mxu0
    %v1380 = vadd.f32 0.0, %v1379
    %v1381 = vpop.f32.mrf.mxu0
    %1382 = vmatprep.mubr.bf16.mxu0 0
    %1383 = vmatmul.mubr.bf16.gmra.mxu0 %v1297
    %v1384 = vpop.f32.mrf.mxu0
    %v1385 = vadd.f32 0.0, %v1384
    %v1386 = vpop.f32.mrf.mxu0
    %v1387 = vpop.f32.mrf.mxu0
    %v1388 = vadd.f32 0.0, %v1387
    %v1389 = vpop.f32.mrf.mxu0
    %1390 = vmatprep.mubr.bf16.mxu0 0
    %1391 = vmatmul.mubr.bf16.gmra.mxu0 %v1300
    %v1392 = vpop.f32.mrf.mxu0
    %v1393 = vadd.f32 0.0, %v1392
    %v1394 = vpop.f32.mrf.mxu0
    %v1395 = vpop.f32.mrf.mxu0
    %v1396 = vadd.f32 0.0, %v1395
    %v1397 = vpop.f32.mrf.mxu0
    %1398 = vdwg.mxu0
    %v1399 = vadd.f32 %v1213, %v1337
    %v1400 = vadd.f32 %v1214, %v1340
    %v1401 = vadd.f32 %v1215, %v1345
    %v1402 = vadd.f32 %v1216, %v1348
    %v1403 = vadd.f32 %v1217, %v1353
    %v1404 = vadd.f32 %v1218, %v1356
    %v1405 = vadd.f32 %v1219, %v1361
    %v1406 = vadd.f32 %v1220, %v1364
    %v1407 = vadd.f32 %v1221, %v1369
    %v1408 = vadd.f32 %v1222, %v1372
    %v1409 = vadd.f32 %v1223, %v1377
    %v1410 = vadd.f32 %v1224, %v1380
    %v1411 = vadd.f32 %v1225, %v1385
    %v1412 = vadd.f32 %v1226, %v1388
    %v1413 = vadd.f32 %v1227, %v1393
    %v1414 = vadd.f32 %v1228, %v1396
    %v1415 = vld [vmem:[#allocation2 + $0x11] sm:$0xff]
    %v1416 = vld [vmem:[#allocation2 + $0x19] sm:$0xff]
    %v1417 = vld [vmem:[#allocation2 + $0x21] sm:$0xff]
    %v1418 = vld [vmem:[#allocation2 + $0x29] sm:$0xff]
    %v1419 = vld [vmem:[#allocation2 + $0x31] sm:$0xff]
    %v1420 = vld [vmem:[#allocation2 + $0x39] sm:$0xff]
    %v1421 = vld [vmem:[#allocation2 + $0x41] sm:$0xff]
    %v1422 = vld [vmem:[#allocation2 + $0x49] sm:$0xff]
    %v1423 = vld [vmem:[#allocation2 + $0x51] sm:$0xff]
    %v1424 = vld [vmem:[#allocation2 + $0x59] sm:$0xff]
    %v1425 = vld [vmem:[#allocation2 + $0x61] sm:$0xff]
    %v1426 = vld [vmem:[#allocation2 + $0x69] sm:$0xff]
    %v1427 = vld [vmem:[#allocation2 + $0x71] sm:$0xff]
    %v1428 = vld [vmem:[#allocation2 + $0x79] sm:$0xff]
    %v1429 = vld [vmem:[#allocation2 + $0x81] sm:$0xff]
    %v1430 = vld [vmem:[#allocation2 + $0x89] sm:$0xff]
    %v1431 = vsel %vm406, %v1415, 0.0
    %v1432 = vsel %vm407, %v1416, 0.0
    %v1433 = vsel %vm408, %v1417, 0.0
    %v1434 = vsel %vm409, %v1418, 0.0
    %v1435 = vsel %vm410, %v1419, 0.0
    %v1436 = vsel %vm411, %v1420, 0.0
    %v1437 = vsel %vm412, %v1421, 0.0
    %v1438 = vsel %vm413, %v1422, 0.0
    %v1439 = vsel %vm414, %v1423, 0.0
    %v1440 = vsel %vm415, %v1424, 0.0
    %v1441 = vsel %vm416, %v1425, 0.0
    %v1442 = vsel %vm417, %v1426, 0.0
    %v1443 = vsel %vm418, %v1427, 0.0
    %v1444 = vsel %vm419, %v1428, 0.0
    %v1445 = vsel %vm420, %v1429, 0.0
    %v1446 = vsel %vm421, %v1430, 0.0
    %v1447 = vpack.c.bf16 %v1432, %v1431
    %v1448 = vpack.c.bf16 %v1434, %v1433
    %v1449 = vpack.c.bf16 %v1436, %v1435
    %v1450 = vpack.c.bf16 %v1438, %v1437
    %v1451 = vpack.c.bf16 %v1440, %v1439
    %v1452 = vpack.c.bf16 %v1442, %v1441
    %v1453 = vpack.c.bf16 %v1444, %v1443
    %v1454 = vpack.c.bf16 %v1446, %v1445
    %s1455 = scalar_lea.vmem [#allocation3], 120
    %v1456 = vld [vmem:[%s1455] sm:$0xf]
    %v1457 = vld [vmem:[%s1455 + $0x4] sm:$0xf]
    %v1458 = vld [vmem:[%s1455 + $0x8] sm:$0xf]
    %v1459 = vld [vmem:[%s1455 + $0xc] sm:$0xf]
    %v1460 = vld [vmem:[%s1455 + $0x10] sm:$0xf]
    %v1461 = vld [vmem:[%s1455 + $0x14] sm:$0xf]
    %v1468 = vunpack.c.l.b16 %v1456
    %v1469 = vunpack.c.l.b16 %v1457
    %v1470 = vunpack.c.l.b16 %v1458
    %v1471 = vunpack.c.l.b16 %v1459
    %v1472 = vunpack.c.l.b16 %v1460
    %v1473 = vunpack.c.l.b16 %v1461
    %v1474 = vpack.c.b16 %v1469, %v1468
    %v1475 = vpack.c.b16 %v1471, %v1470
    %v1476 = vpack.c.b16 %v1473, %v1472
    %v1481 = vsel %vm68, %v1447, 0
    %v1484 = vsel %vm68, %v1448, 0
    %v1487 = vsel %vm68, %v1449, 0
    %v1490 = vsel %vm68, %v1450, 0
    %v1493 = vsel %vm68, %v1451, 0
    %v1496 = vsel %vm68, %v1452, 0
    %v1499 = vsel %vm68, %v1453, 0
    %v1502 = vsel %vm68, %v1454, 0
    %1504 = vmatprep.subr.bf16.mxu0 0
    %1505 = vmatpush1.bf16.msra.mxu0 0
    %1506 = vmatprep.subr.bf16.mxu0 0
    %1507 = vmatpush1.bf16.msra.mxu0 0
    %1508 = vmatprep.subr.bf16.mxu0 0
    %1509 = vmatpush1.bf16.msra.mxu0 0
    %1510 = vmatprep.subr.bf16.mxu0 0
    %1511 = vmatpush1.bf16.msra.mxu0 0
    %1512 = vmatprep.subr.bf16.mxu0 0
    %1513 = vmatpush1.bf16.msra.mxu0 0
    %1514 = vmatprep.subr.bf16.mxu0 0
    %1515 = vmatpush1.bf16.msra.mxu0 %v1476
    %1516 = vmatprep.subr.bf16.mxu0 0
    %1517 = vmatpush1.bf16.msra.mxu0 %v1475
    %1518 = vmatprep.subr.bf16.mxu0 0
    %1519 = vmatpush1.bf16.msra.mxu0 %v1474
    %1520 = vmatprep.subr.bf16.mxu0 0
    %1521 = vmatpush2.bf16.msra.mxu0 0
    %1522 = vmatprep.subr.bf16.mxu0 0
    %1523 = vmatpush2.bf16.msra.mxu0 0
    %1524 = vmatprep.subr.bf16.mxu0 0
    %1525 = vmatpush2.bf16.msra.mxu0 0
    %1526 = vmatprep.subr.bf16.mxu0 0
    %1527 = vmatpush2.bf16.msra.mxu0 0
    %1528 = vmatprep.subr.bf16.mxu0 0
    %1529 = vmatpush2.bf16.msra.mxu0 0
    %1530 = vmatprep.subr.bf16.mxu0 0
    %1531 = vmatpush2.bf16.msra.mxu0 0
    %1532 = vmatprep.subr.bf16.mxu0 0
    %1533 = vmatpush2.bf16.msra.mxu0 0
    %1534 = vmatprep.subr.bf16.mxu0 0
    %1535 = vmatpush2.bf16.msra.mxu0 0
    %1536 = vmatprep.mubr.bf16.mxu0 0
    %1537 = vmatmul.mubr.bf16.gmra.mxu0 %v1481
    %v1538 = vpop.f32.mrf.mxu0
    %v1539 = vadd.f32 0.0, %v1538
    %v1540 = vpop.f32.mrf.mxu0
    %v1541 = vpop.f32.mrf.mxu0
    %v1542 = vadd.f32 0.0, %v1541
    %v1543 = vpop.f32.mrf.mxu0
    %1544 = vmatprep.mubr.bf16.mxu0 0
    %1545 = vmatmul.mubr.bf16.gmra.mxu0 %v1484
    %v1546 = vpop.f32.mrf.mxu0
    %v1547 = vadd.f32 0.0, %v1546
    %v1548 = vpop.f32.mrf.mxu0
    %v1549 = vpop.f32.mrf.mxu0
    %v1550 = vadd.f32 0.0, %v1549
    %v1551 = vpop.f32.mrf.mxu0
    %1552 = vmatprep.mubr.bf16.mxu0 0
    %1553 = vmatmul.mubr.bf16.gmra.mxu0 %v1487
    %v1554 = vpop.f32.mrf.mxu0
    %v1555 = vadd.f32 0.0, %v1554
    %v1556 = vpop.f32.mrf.mxu0
    %v1557 = vpop.f32.mrf.mxu0
    %v1558 = vadd.f32 0.0, %v1557
    %v1559 = vpop.f32.mrf.mxu0
    %1560 = vmatprep.mubr.bf16.mxu0 0
    %1561 = vmatmul.mubr.bf16.gmra.mxu0 %v1490
    %v1562 = vpop.f32.mrf.mxu0
    %v1563 = vadd.f32 0.0, %v1562
    %v1564 = vpop.f32.mrf.mxu0
    %v1565 = vpop.f32.mrf.mxu0
    %v1566 = vadd.f32 0.0, %v1565
    %v1567 = vpop.f32.mrf.mxu0
    %1568 = vmatprep.mubr.bf16.mxu0 0
    %1569 = vmatmul.mubr.bf16.gmra.mxu0 %v1493
    %v1570 = vpop.f32.mrf.mxu0
    %v1571 = vadd.f32 0.0, %v1570
    %v1572 = vpop.f32.mrf.mxu0
    %v1573 = vpop.f32.mrf.mxu0
    %v1574 = vadd.f32 0.0, %v1573
    %v1575 = vpop.f32.mrf.mxu0
    %1576 = vmatprep.mubr.bf16.mxu0 0
    %1577 = vmatmul.mubr.bf16.gmra.mxu0 %v1496
    %v1578 = vpop.f32.mrf.mxu0
    %v1579 = vadd.f32 0.0, %v1578
    %v1580 = vpop.f32.mrf.mxu0
    %v1581 = vpop.f32.mrf.mxu0
    %v1582 = vadd.f32 0.0, %v1581
    %v1583 = vpop.f32.mrf.mxu0
    %1584 = vmatprep.mubr.bf16.mxu0 0
    %1585 = vmatmul.mubr.bf16.gmra.mxu0 %v1499
    %v1586 = vpop.f32.mrf.mxu0
    %v1587 = vadd.f32 0.0, %v1586
    %v1588 = vpop.f32.mrf.mxu0
    %v1589 = vpop.f32.mrf.mxu0
    %v1590 = vadd.f32 0.0, %v1589
    %v1591 = vpop.f32.mrf.mxu0
    %1592 = vmatprep.mubr.bf16.mxu0 0
    %1593 = vmatmul.mubr.bf16.gmra.mxu0 %v1502
    %v1594 = vpop.f32.mrf.mxu0
    %v1595 = vadd.f32 0.0, %v1594
    %v1596 = vpop.f32.mrf.mxu0
    %v1597 = vpop.f32.mrf.mxu0
    %v1598 = vadd.f32 0.0, %v1597
    %v1599 = vpop.f32.mrf.mxu0
    %1600 = vdwg.mxu0
    %v1601 = vadd.f32 %v1399, %v1539
    %v1602 = vadd.f32 %v1400, %v1542
    %v1603 = vadd.f32 %v1401, %v1547
    %v1604 = vadd.f32 %v1402, %v1550
    %v1605 = vadd.f32 %v1403, %v1555
    %v1606 = vadd.f32 %v1404, %v1558
    %v1607 = vadd.f32 %v1405, %v1563
    %v1608 = vadd.f32 %v1406, %v1566
    %v1609 = vadd.f32 %v1407, %v1571
    %v1610 = vadd.f32 %v1408, %v1574
    %v1611 = vadd.f32 %v1409, %v1579
    %v1612 = vadd.f32 %v1410, %v1582
    %v1613 = vadd.f32 %v1411, %v1587
    %v1614 = vadd.f32 %v1412, %v1590
    %v1615 = vadd.f32 %v1413, %v1595
    %v1616 = vadd.f32 %v1414, %v1598
    %v1617 = vld [vmem:[#allocation2 + $0x17] sm:$0xff]
    %v1618 = vld [vmem:[#allocation2 + $0x1f] sm:$0xff]
    %v1619 = vld [vmem:[#allocation2 + $0x27] sm:$0xff]
    %v1620 = vld [vmem:[#allocation2 + $0x2f] sm:$0xff]
    %v1621 = vld [vmem:[#allocation2 + $0x37] sm:$0xff]
    %v1622 = vld [vmem:[#allocation2 + $0x3f] sm:$0xff]
    %v1623 = vld [vmem:[#allocation2 + $0x47] sm:$0xff]
    %v1624 = vld [vmem:[#allocation2 + $0x4f] sm:$0xff]
    %v1625 = vld [vmem:[#allocation2 + $0x57] sm:$0xff]
    %v1626 = vld [vmem:[#allocation2 + $0x5f] sm:$0xff]
    %v1627 = vld [vmem:[#allocation2 + $0x67] sm:$0xff]
    %v1628 = vld [vmem:[#allocation2 + $0x6f] sm:$0xff]
    %v1629 = vld [vmem:[#allocation2 + $0x77] sm:$0xff]
    %v1630 = vld [vmem:[#allocation2 + $0x7f] sm:$0xff]
    %v1631 = vld [vmem:[#allocation2 + $0x87] sm:$0xff]
    %v1632 = vld [vmem:[#allocation2 + $0x8f] sm:$0xff]
    %vm1633 = vmand %vm374, %vm390
    %vm1634 = vmand %vm375, %vm391
    %vm1635 = vmand %vm376, %vm392
    %vm1636 = vmand %vm377, %vm393
    %vm1637 = vmand %vm378, %vm394
    %vm1638 = vmand %vm379, %vm395
    %vm1639 = vmand %vm380, %vm396
    %vm1640 = vmand %vm381, %vm397
    %vm1641 = vmand %vm382, %vm398
    %vm1642 = vmand %vm383, %vm399
    %vm1643 = vmand %vm384, %vm400
    %vm1644 = vmand %vm385, %vm401
    %vm1645 = vmand %vm386, %vm402
    %vm1646 = vmand %vm387, %vm403
    %vm1647 = vmand %vm388, %vm404
    %vm1648 = vmand %vm389, %vm405
    %v1649 = vsel %vm1633, %v1617, 0.0
    %v1650 = vsel %vm1634, %v1618, 0.0
    %v1651 = vsel %vm1635, %v1619, 0.0
    %v1652 = vsel %vm1636, %v1620, 0.0
    %v1653 = vsel %vm1637, %v1621, 0.0
    %v1654 = vsel %vm1638, %v1622, 0.0
    %v1655 = vsel %vm1639, %v1623, 0.0
    %v1656 = vsel %vm1640, %v1624, 0.0
    %v1657 = vsel %vm1641, %v1625, 0.0
    %v1658 = vsel %vm1642, %v1626, 0.0
    %v1659 = vsel %vm1643, %v1627, 0.0
    %v1660 = vsel %vm1644, %v1628, 0.0
    %v1661 = vsel %vm1645, %v1629, 0.0
    %v1662 = vsel %vm1646, %v1630, 0.0
    %v1663 = vsel %vm1647, %v1631, 0.0
    %v1664 = vsel %vm1648, %v1632, 0.0
    %v1665 = vpack.c.bf16 %v1650, %v1649
    %v1666 = vpack.c.bf16 %v1652, %v1651
    %v1667 = vpack.c.bf16 %v1654, %v1653
    %v1668 = vpack.c.bf16 %v1656, %v1655
    %v1669 = vpack.c.bf16 %v1658, %v1657
    %v1670 = vpack.c.bf16 %v1660, %v1659
    %v1671 = vpack.c.bf16 %v1662, %v1661
    %v1672 = vpack.c.bf16 %v1664, %v1663
    %s1673 = scalar_lea.vmem [#allocation3], 144
    %v1674 = vld [vmem:[%s1673] sm:$0xf]
    %v1675 = vld [vmem:[%s1673 + $0x4] sm:$0xf]
    %v1676 = vld [vmem:[%s1673 + $0x8] sm:$0xf]
    %v1677 = vld [vmem:[%s1673 + $0xc] sm:$0xf]
    %v1678 = vld [vmem:[%s1673 + $0x10] sm:$0xf]
    %v1679 = vld [vmem:[%s1673 + $0x14] sm:$0xf]
    %v1686 = vunpack.c.l.b16 %v1674
    %v1687 = vunpack.c.l.b16 %v1675
    %v1688 = vunpack.c.l.b16 %v1676
    %v1689 = vunpack.c.l.b16 %v1677
    %v1690 = vunpack.c.l.b16 %v1678
    %v1691 = vunpack.c.l.b16 %v1679
    %v1692 = vpack.c.b16 %v1687, %v1686
    %v1693 = vpack.c.b16 %v1689, %v1688
    %v1694 = vpack.c.b16 %v1691, %v1690
    %v1699 = vsel %vm68, %v1665, 0
    %v1702 = vsel %vm68, %v1666, 0
    %v1705 = vsel %vm68, %v1667, 0
    %v1708 = vsel %vm68, %v1668, 0
    %v1711 = vsel %vm68, %v1669, 0
    %v1714 = vsel %vm68, %v1670, 0
    %v1717 = vsel %vm68, %v1671, 0
    %v1720 = vsel %vm68, %v1672, 0
    %1722 = vmatprep.subr.bf16.mxu0 0
    %1723 = vmatpush1.bf16.msra.mxu0 0
    %1724 = vmatprep.subr.bf16.mxu0 0
    %1725 = vmatpush1.bf16.msra.mxu0 0
    %1726 = vmatprep.subr.bf16.mxu0 0
    %1727 = vmatpush1.bf16.msra.mxu0 0
    %1728 = vmatprep.subr.bf16.mxu0 0
    %1729 = vmatpush1.bf16.msra.mxu0 0
    %1730 = vmatprep.subr.bf16.mxu0 0
    %1731 = vmatpush1.bf16.msra.mxu0 0
    %1732 = vmatprep.subr.bf16.mxu0 0
    %1733 = vmatpush1.bf16.msra.mxu0 %v1694
    %1734 = vmatprep.subr.bf16.mxu0 0
    %1735 = vmatpush1.bf16.msra.mxu0 %v1693
    %1736 = vmatprep.subr.bf16.mxu0 0
    %1737 = vmatpush1.bf16.msra.mxu0 %v1692
    %1738 = vmatprep.subr.bf16.mxu0 0
    %1739 = vmatpush2.bf16.msra.mxu0 0
    %1740 = vmatprep.subr.bf16.mxu0 0
    %1741 = vmatpush2.bf16.msra.mxu0 0
    %1742 = vmatprep.subr.bf16.mxu0 0
    %1743 = vmatpush2.bf16.msra.mxu0 0
    %1744 = vmatprep.subr.bf16.mxu0 0
    %1745 = vmatpush2.bf16.msra.mxu0 0
    %1746 = vmatprep.subr.bf16.mxu0 0
    %1747 = vmatpush2.bf16.msra.mxu0 0
    %1748 = vmatprep.subr.bf16.mxu0 0
    %1749 = vmatpush2.bf16.msra.mxu0 0
    %1750 = vmatprep.subr.bf16.mxu0 0
    %1751 = vmatpush2.bf16.msra.mxu0 0
    %1752 = vmatprep.subr.bf16.mxu0 0
    %1753 = vmatpush2.bf16.msra.mxu0 0
    %1754 = vmatprep.mubr.bf16.mxu0 0
    %1755 = vmatmul.mubr.bf16.gmra.mxu0 %v1699
    %v1756 = vpop.f32.mrf.mxu0
    %v1757 = vadd.f32 0.0, %v1756
    %v1758 = vpop.f32.mrf.mxu0
    %v1759 = vpop.f32.mrf.mxu0
    %v1760 = vadd.f32 0.0, %v1759
    %v1761 = vpop.f32.mrf.mxu0
    %1762 = vmatprep.mubr.bf16.mxu0 0
    %1763 = vmatmul.mubr.bf16.gmra.mxu0 %v1702
    %v1764 = vpop.f32.mrf.mxu0
    %v1765 = vadd.f32 0.0, %v1764
    %v1766 = vpop.f32.mrf.mxu0
    %v1767 = vpop.f32.mrf.mxu0
    %v1768 = vadd.f32 0.0, %v1767
    %v1769 = vpop.f32.mrf.mxu0
    %1770 = vmatprep.mubr.bf16.mxu0 0
    %1771 = vmatmul.mubr.bf16.gmra.mxu0 %v1705
    %v1772 = vpop.f32.mrf.mxu0
    %v1773 = vadd.f32 0.0, %v1772
    %v1774 = vpop.f32.mrf.mxu0
    %v1775 = vpop.f32.mrf.mxu0
    %v1776 = vadd.f32 0.0, %v1775
    %v1777 = vpop.f32.mrf.mxu0
    %1778 = vmatprep.mubr.bf16.mxu0 0
    %1779 = vmatmul.mubr.bf16.gmra.mxu0 %v1708
    %v1780 = vpop.f32.mrf.mxu0
    %v1781 = vadd.f32 0.0, %v1780
    %v1782 = vpop.f32.mrf.mxu0
    %v1783 = vpop.f32.mrf.mxu0
    %v1784 = vadd.f32 0.0, %v1783
    %v1785 = vpop.f32.mrf.mxu0
    %1786 = vmatprep.mubr.bf16.mxu0 0
    %1787 = vmatmul.mubr.bf16.gmra.mxu0 %v1711
    %v1788 = vpop.f32.mrf.mxu0
    %v1789 = vadd.f32 0.0, %v1788
    %v1790 = vpop.f32.mrf.mxu0
    %v1791 = vpop.f32.mrf.mxu0
    %v1792 = vadd.f32 0.0, %v1791
    %v1793 = vpop.f32.mrf.mxu0
    %1794 = vmatprep.mubr.bf16.mxu0 0
    %1795 = vmatmul.mubr.bf16.gmra.mxu0 %v1714
    %v1796 = vpop.f32.mrf.mxu0
    %v1797 = vadd.f32 0.0, %v1796
    %v1798 = vpop.f32.mrf.mxu0
    %v1799 = vpop.f32.mrf.mxu0
    %v1800 = vadd.f32 0.0, %v1799
    %v1801 = vpop.f32.mrf.mxu0
    %1802 = vmatprep.mubr.bf16.mxu0 0
    %1803 = vmatmul.mubr.bf16.gmra.mxu0 %v1717
    %v1804 = vpop.f32.mrf.mxu0
    %v1805 = vadd.f32 0.0, %v1804
    %v1806 = vpop.f32.mrf.mxu0
    %v1807 = vpop.f32.mrf.mxu0
    %v1808 = vadd.f32 0.0, %v1807
    %v1809 = vpop.f32.mrf.mxu0
    %1810 = vmatprep.mubr.bf16.mxu0 0
    %1811 = vmatmul.mubr.bf16.gmra.mxu0 %v1720
    %v1812 = vpop.f32.mrf.mxu0
    %v1813 = vadd.f32 0.0, %v1812
    %v1814 = vpop.f32.mrf.mxu0
    %v1815 = vpop.f32.mrf.mxu0
    %v1816 = vadd.f32 0.0, %v1815
    %v1817 = vpop.f32.mrf.mxu0
    %1818 = vdwg.mxu0
    %v1819 = vadd.f32 %v1601, %v1757
    %v1820 = vadd.f32 %v1602, %v1760
    %v1821 = vadd.f32 %v1603, %v1765
    %v1822 = vadd.f32 %v1604, %v1768
    %v1823 = vadd.f32 %v1605, %v1773
    %v1824 = vadd.f32 %v1606, %v1776
    %v1825 = vadd.f32 %v1607, %v1781
    %v1826 = vadd.f32 %v1608, %v1784
    %v1827 = vadd.f32 %v1609, %v1789
    %v1828 = vadd.f32 %v1610, %v1792
    %v1829 = vadd.f32 %v1611, %v1797
    %v1830 = vadd.f32 %v1612, %v1800
    %v1831 = vadd.f32 %v1613, %v1805
    %v1832 = vadd.f32 %v1614, %v1808
    %v1833 = vadd.f32 %v1615, %v1813
    %v1834 = vadd.f32 %v1616, %v1816
    %v1835 = vld [vmem:[#allocation2 + $0x18] sm:$0xff]
    %v1836 = vld [vmem:[#allocation2 + $0x20] sm:$0xff]
    %v1837 = vld [vmem:[#allocation2 + $0x28] sm:$0xff]
    %v1838 = vld [vmem:[#allocation2 + $0x30] sm:$0xff]
    %v1839 = vld [vmem:[#allocation2 + $0x38] sm:$0xff]
    %v1840 = vld [vmem:[#allocation2 + $0x40] sm:$0xff]
    %v1841 = vld [vmem:[#allocation2 + $0x48] sm:$0xff]
    %v1842 = vld [vmem:[#allocation2 + $0x50] sm:$0xff]
    %v1843 = vld [vmem:[#allocation2 + $0x58] sm:$0xff]
    %v1844 = vld [vmem:[#allocation2 + $0x60] sm:$0xff]
    %v1845 = vld [vmem:[#allocation2 + $0x68] sm:$0xff]
    %v1846 = vld [vmem:[#allocation2 + $0x70] sm:$0xff]
    %v1847 = vld [vmem:[#allocation2 + $0x78] sm:$0xff]
    %v1848 = vld [vmem:[#allocation2 + $0x80] sm:$0xff]
    %v1849 = vld [vmem:[#allocation2 + $0x88] sm:$0xff]
    %v1850 = vld [vmem:[#allocation2 + $0x90] sm:$0xff]
    %v1851 = vsel %vm374, %v1835, 0.0
    %v1852 = vsel %vm375, %v1836, 0.0
    %v1853 = vsel %vm376, %v1837, 0.0
    %v1854 = vsel %vm377, %v1838, 0.0
    %v1855 = vsel %vm378, %v1839, 0.0
    %v1856 = vsel %vm379, %v1840, 0.0
    %v1857 = vsel %vm380, %v1841, 0.0
    %v1858 = vsel %vm381, %v1842, 0.0
    %v1859 = vsel %vm382, %v1843, 0.0
    %v1860 = vsel %vm383, %v1844, 0.0
    %v1861 = vsel %vm384, %v1845, 0.0
    %v1862 = vsel %vm385, %v1846, 0.0
    %v1863 = vsel %vm386, %v1847, 0.0
    %v1864 = vsel %vm387, %v1848, 0.0
    %v1865 = vsel %vm388, %v1849, 0.0
    %v1866 = vsel %vm389, %v1850, 0.0
    %v1867 = vpack.c.bf16 %v1852, %v1851
    %v1868 = vpack.c.bf16 %v1854, %v1853
    %v1869 = vpack.c.bf16 %v1856, %v1855
    %v1870 = vpack.c.bf16 %v1858, %v1857
    %v1871 = vpack.c.bf16 %v1860, %v1859
    %v1872 = vpack.c.bf16 %v1862, %v1861
    %v1873 = vpack.c.bf16 %v1864, %v1863
    %v1874 = vpack.c.bf16 %v1866, %v1865
    %s1875 = scalar_lea.vmem [#allocation3], 168
    %v1876 = vld [vmem:[%s1875] sm:$0xf]
    %v1877 = vld [vmem:[%s1875 + $0x4] sm:$0xf]
    %v1878 = vld [vmem:[%s1875 + $0x8] sm:$0xf]
    %v1879 = vld [vmem:[%s1875 + $0xc] sm:$0xf]
    %v1880 = vld [vmem:[%s1875 + $0x10] sm:$0xf]
    %v1881 = vld [vmem:[%s1875 + $0x14] sm:$0xf]
    %v1888 = vunpack.c.l.b16 %v1876
    %v1889 = vunpack.c.l.b16 %v1877
    %v1890 = vunpack.c.l.b16 %v1878
    %v1891 = vunpack.c.l.b16 %v1879
    %v1892 = vunpack.c.l.b16 %v1880
    %v1893 = vunpack.c.l.b16 %v1881
    %v1894 = vpack.c.b16 %v1889, %v1888
    %v1895 = vpack.c.b16 %v1891, %v1890
    %v1896 = vpack.c.b16 %v1893, %v1892
    %v1901 = vsel %vm68, %v1867, 0
    %v1904 = vsel %vm68, %v1868, 0
    %v1907 = vsel %vm68, %v1869, 0
    %v1910 = vsel %vm68, %v1870, 0
    %v1913 = vsel %vm68, %v1871, 0
    %v1916 = vsel %vm68, %v1872, 0
    %v1919 = vsel %vm68, %v1873, 0
    %v1922 = vsel %vm68, %v1874, 0
    %1924 = vmatprep.subr.bf16.mxu0 0
    %1925 = vmatpush1.bf16.msra.mxu0 0
    %1926 = vmatprep.subr.bf16.mxu0 0
    %1927 = vmatpush1.bf16.msra.mxu0 0
    %1928 = vmatprep.subr.bf16.mxu0 0
    %1929 = vmatpush1.bf16.msra.mxu0 0
    %1930 = vmatprep.subr.bf16.mxu0 0
    %1931 = vmatpush1.bf16.msra.mxu0 0
    %1932 = vmatprep.subr.bf16.mxu0 0
    %1933 = vmatpush1.bf16.msra.mxu0 0
    %1934 = vmatprep.subr.bf16.mxu0 0
    %1935 = vmatpush1.bf16.msra.mxu0 %v1896
    %1936 = vmatprep.subr.bf16.mxu0 0
    %1937 = vmatpush1.bf16.msra.mxu0 %v1895
    %1938 = vmatprep.subr.bf16.mxu0 0
    %1939 = vmatpush1.bf16.msra.mxu0 %v1894
    %1940 = vmatprep.subr.bf16.mxu0 0
    %1941 = vmatpush2.bf16.msra.mxu0 0
    %1942 = vmatprep.subr.bf16.mxu0 0
    %1943 = vmatpush2.bf16.msra.mxu0 0
    %1944 = vmatprep.subr.bf16.mxu0 0
    %1945 = vmatpush2.bf16.msra.mxu0 0
    %1946 = vmatprep.subr.bf16.mxu0 0
    %1947 = vmatpush2.bf16.msra.mxu0 0
    %1948 = vmatprep.subr.bf16.mxu0 0
    %1949 = vmatpush2.bf16.msra.mxu0 0
    %1950 = vmatprep.subr.bf16.mxu0 0
    %1951 = vmatpush2.bf16.msra.mxu0 0
    %1952 = vmatprep.subr.bf16.mxu0 0
    %1953 = vmatpush2.bf16.msra.mxu0 0
    %1954 = vmatprep.subr.bf16.mxu0 0
    %1955 = vmatpush2.bf16.msra.mxu0 0
    %1956 = vmatprep.mubr.bf16.mxu0 0
    %1957 = vmatmul.mubr.bf16.gmra.mxu0 %v1901
    %v1958 = vpop.f32.mrf.mxu0
    %v1959 = vadd.f32 0.0, %v1958
    %v1960 = vpop.f32.mrf.mxu0
    %v1961 = vpop.f32.mrf.mxu0
    %v1962 = vadd.f32 0.0, %v1961
    %v1963 = vpop.f32.mrf.mxu0
    %1964 = vmatprep.mubr.bf16.mxu0 0
    %1965 = vmatmul.mubr.bf16.gmra.mxu0 %v1904
    %v1966 = vpop.f32.mrf.mxu0
    %v1967 = vadd.f32 0.0, %v1966
    %v1968 = vpop.f32.mrf.mxu0
    %v1969 = vpop.f32.mrf.mxu0
    %v1970 = vadd.f32 0.0, %v1969
    %v1971 = vpop.f32.mrf.mxu0
    %1972 = vmatprep.mubr.bf16.mxu0 0
    %1973 = vmatmul.mubr.bf16.gmra.mxu0 %v1907
    %v1974 = vpop.f32.mrf.mxu0
    %v1975 = vadd.f32 0.0, %v1974
    %v1976 = vpop.f32.mrf.mxu0
    %v1977 = vpop.f32.mrf.mxu0
    %v1978 = vadd.f32 0.0, %v1977
    %v1979 = vpop.f32.mrf.mxu0
    %1980 = vmatprep.mubr.bf16.mxu0 0
    %1981 = vmatmul.mubr.bf16.gmra.mxu0 %v1910
    %v1982 = vpop.f32.mrf.mxu0
    %v1983 = vadd.f32 0.0, %v1982
    %v1984 = vpop.f32.mrf.mxu0
    %v1985 = vpop.f32.mrf.mxu0
    %v1986 = vadd.f32 0.0, %v1985
    %v1987 = vpop.f32.mrf.mxu0
    %1988 = vmatprep.mubr.bf16.mxu0 0
    %1989 = vmatmul.mubr.bf16.gmra.mxu0 %v1913
    %v1990 = vpop.f32.mrf.mxu0
    %v1991 = vadd.f32 0.0, %v1990
    %v1992 = vpop.f32.mrf.mxu0
    %v1993 = vpop.f32.mrf.mxu0
    %v1994 = vadd.f32 0.0, %v1993
    %v1995 = vpop.f32.mrf.mxu0
    %1996 = vmatprep.mubr.bf16.mxu0 0
    %1997 = vmatmul.mubr.bf16.gmra.mxu0 %v1916
    %v1998 = vpop.f32.mrf.mxu0
    %v1999 = vadd.f32 0.0, %v1998
    %v2000 = vpop.f32.mrf.mxu0
    %v2001 = vpop.f32.mrf.mxu0
    %v2002 = vadd.f32 0.0, %v2001
    %v2003 = vpop.f32.mrf.mxu0
    %2004 = vmatprep.mubr.bf16.mxu0 0
    %2005 = vmatmul.mubr.bf16.gmra.mxu0 %v1919
    %v2006 = vpop.f32.mrf.mxu0
    %v2007 = vadd.f32 0.0, %v2006
    %v2008 = vpop.f32.mrf.mxu0
    %v2009 = vpop.f32.mrf.mxu0
    %v2010 = vadd.f32 0.0, %v2009
    %v2011 = vpop.f32.mrf.mxu0
    %2012 = vmatprep.mubr.bf16.mxu0 0
    %2013 = vmatmul.mubr.bf16.gmra.mxu0 %v1922
    %v2014 = vpop.f32.mrf.mxu0
    %v2015 = vadd.f32 0.0, %v2014
    %v2016 = vpop.f32.mrf.mxu0
    %v2017 = vpop.f32.mrf.mxu0
    %v2018 = vadd.f32 0.0, %v2017
    %v2019 = vpop.f32.mrf.mxu0
    %2020 = vdwg.mxu0
    %v2021 = vadd.f32 %v1819, %v1959
    %v2022 = vadd.f32 %v1820, %v1962
    %v2023 = vadd.f32 %v1821, %v1967
    %v2024 = vadd.f32 %v1822, %v1970
    %v2025 = vadd.f32 %v1823, %v1975
    %v2026 = vadd.f32 %v1824, %v1978
    %v2027 = vadd.f32 %v1825, %v1983
    %v2028 = vadd.f32 %v1826, %v1986
    %v2029 = vadd.f32 %v1827, %v1991
    %v2030 = vadd.f32 %v1828, %v1994
    %v2031 = vadd.f32 %v1829, %v1999
    %v2032 = vadd.f32 %v1830, %v2002
    %v2033 = vadd.f32 %v1831, %v2007
    %v2034 = vadd.f32 %v1832, %v2010
    %v2035 = vadd.f32 %v1833, %v2015
    %v2036 = vadd.f32 %v1834, %v2018
    %v2037 = vld [vmem:[#allocation2 + $0x19] sm:$0xff]
    %v2038 = vld [vmem:[#allocation2 + $0x21] sm:$0xff]
    %v2039 = vld [vmem:[#allocation2 + $0x29] sm:$0xff]
    %v2040 = vld [vmem:[#allocation2 + $0x31] sm:$0xff]
    %v2041 = vld [vmem:[#allocation2 + $0x39] sm:$0xff]
    %v2042 = vld [vmem:[#allocation2 + $0x41] sm:$0xff]
    %v2043 = vld [vmem:[#allocation2 + $0x49] sm:$0xff]
    %v2044 = vld [vmem:[#allocation2 + $0x51] sm:$0xff]
    %v2045 = vld [vmem:[#allocation2 + $0x59] sm:$0xff]
    %v2046 = vld [vmem:[#allocation2 + $0x61] sm:$0xff]
    %v2047 = vld [vmem:[#allocation2 + $0x69] sm:$0xff]
    %v2048 = vld [vmem:[#allocation2 + $0x71] sm:$0xff]
    %v2049 = vld [vmem:[#allocation2 + $0x79] sm:$0xff]
    %v2050 = vld [vmem:[#allocation2 + $0x81] sm:$0xff]
    %v2051 = vld [vmem:[#allocation2 + $0x89] sm:$0xff]
    %v2052 = vld [vmem:[#allocation2 + $0x91] sm:$0xff]
    %vm2053 = vmand %vm374, %vm406
    %vm2054 = vmand %vm375, %vm407
    %vm2055 = vmand %vm376, %vm408
    %vm2056 = vmand %vm377, %vm409
    %vm2057 = vmand %vm378, %vm410
    %vm2058 = vmand %vm379, %vm411
    %vm2059 = vmand %vm380, %vm412
    %vm2060 = vmand %vm381, %vm413
    %vm2061 = vmand %vm382, %vm414
    %vm2062 = vmand %vm383, %vm415
    %vm2063 = vmand %vm384, %vm416
    %vm2064 = vmand %vm385, %vm417
    %vm2065 = vmand %vm386, %vm418
    %vm2066 = vmand %vm387, %vm419
    %vm2067 = vmand %vm388, %vm420
    %vm2068 = vmand %vm389, %vm421
    %v2069 = vsel %vm2053, %v2037, 0.0
    %v2070 = vsel %vm2054, %v2038, 0.0
    %v2071 = vsel %vm2055, %v2039, 0.0
    %v2072 = vsel %vm2056, %v2040, 0.0
    %v2073 = vsel %vm2057, %v2041, 0.0
    %v2074 = vsel %vm2058, %v2042, 0.0
    %v2075 = vsel %vm2059, %v2043, 0.0
    %v2076 = vsel %vm2060, %v2044, 0.0
    %v2077 = vsel %vm2061, %v2045, 0.0
    %v2078 = vsel %vm2062, %v2046, 0.0
    %v2079 = vsel %vm2063, %v2047, 0.0
    %v2080 = vsel %vm2064, %v2048, 0.0
    %v2081 = vsel %vm2065, %v2049, 0.0
    %v2082 = vsel %vm2066, %v2050, 0.0
    %v2083 = vsel %vm2067, %v2051, 0.0
    %v2084 = vsel %vm2068, %v2052, 0.0
    %v2085 = vpack.c.bf16 %v2070, %v2069
    %v2086 = vpack.c.bf16 %v2072, %v2071
    %v2087 = vpack.c.bf16 %v2074, %v2073
    %v2088 = vpack.c.bf16 %v2076, %v2075
    %v2089 = vpack.c.bf16 %v2078, %v2077
    %v2090 = vpack.c.bf16 %v2080, %v2079
    %v2091 = vpack.c.bf16 %v2082, %v2081
    %v2092 = vpack.c.bf16 %v2084, %v2083
    %s2093 = scalar_lea.vmem [#allocation3], 192
    %v2094 = vld [vmem:[%s2093] sm:$0xf]
    %v2095 = vld [vmem:[%s2093 + $0x4] sm:$0xf]
    %v2096 = vld [vmem:[%s2093 + $0x8] sm:$0xf]
    %v2097 = vld [vmem:[%s2093 + $0xc] sm:$0xf]
    %v2098 = vld [vmem:[%s2093 + $0x10] sm:$0xf]
    %v2099 = vld [vmem:[%s2093 + $0x14] sm:$0xf]
    %v2106 = vunpack.c.l.b16 %v2094
    %v2107 = vunpack.c.l.b16 %v2095
    %v2108 = vunpack.c.l.b16 %v2096
    %v2109 = vunpack.c.l.b16 %v2097
    %v2110 = vunpack.c.l.b16 %v2098
    %v2111 = vunpack.c.l.b16 %v2099
    %v2112 = vpack.c.b16 %v2107, %v2106
    %v2113 = vpack.c.b16 %v2109, %v2108
    %v2114 = vpack.c.b16 %v2111, %v2110
    %v2119 = vsel %vm68, %v2085, 0
    %v2122 = vsel %vm68, %v2086, 0
    %v2125 = vsel %vm68, %v2087, 0
    %v2128 = vsel %vm68, %v2088, 0
    %v2131 = vsel %vm68, %v2089, 0
    %v2134 = vsel %vm68, %v2090, 0
    %v2137 = vsel %vm68, %v2091, 0
    %v2140 = vsel %vm68, %v2092, 0
    %2142 = vmatprep.subr.bf16.mxu0 0
    %2143 = vmatpush1.bf16.msra.mxu0 0
    %2144 = vmatprep.subr.bf16.mxu0 0
    %2145 = vmatpush1.bf16.msra.mxu0 0
    %2146 = vmatprep.subr.bf16.mxu0 0
    %2147 = vmatpush1.bf16.msra.mxu0 0
    %2148 = vmatprep.subr.bf16.mxu0 0
    %2149 = vmatpush1.bf16.msra.mxu0 0
    %2150 = vmatprep.subr.bf16.mxu0 0
    %2151 = vmatpush1.bf16.msra.mxu0 0
    %2152 = vmatprep.subr.bf16.mxu0 0
    %2153 = vmatpush1.bf16.msra.mxu0 %v2114
    %2154 = vmatprep.subr.bf16.mxu0 0
    %2155 = vmatpush1.bf16.msra.mxu0 %v2113
    %2156 = vmatprep.subr.bf16.mxu0 0
    %2157 = vmatpush1.bf16.msra.mxu0 %v2112
    %2158 = vmatprep.subr.bf16.mxu0 0
    %2159 = vmatpush2.bf16.msra.mxu0 0
    %2160 = vmatprep.subr.bf16.mxu0 0
    %2161 = vmatpush2.bf16.msra.mxu0 0
    %2162 = vmatprep.subr.bf16.mxu0 0
    %2163 = vmatpush2.bf16.msra.mxu0 0
    %2164 = vmatprep.subr.bf16.mxu0 0
    %2165 = vmatpush2.bf16.msra.mxu0 0
    %2166 = vmatprep.subr.bf16.mxu0 0
    %2167 = vmatpush2.bf16.msra.mxu0 0
    %2168 = vmatprep.subr.bf16.mxu0 0
    %2169 = vmatpush2.bf16.msra.mxu0 0
    %2170 = vmatprep.subr.bf16.mxu0 0
    %2171 = vmatpush2.bf16.msra.mxu0 0
    %2172 = vmatprep.subr.bf16.mxu0 0
    %2173 = vmatpush2.bf16.msra.mxu0 0
    %2174 = vmatprep.mubr.bf16.mxu0 0
    %2175 = vmatmul.mubr.bf16.gmra.mxu0 %v2119
    %v2176 = vpop.f32.mrf.mxu0
    %v2177 = vadd.f32 0.0, %v2176
    %v2178 = vpop.f32.mrf.mxu0
    %v2179 = vpop.f32.mrf.mxu0
    %v2180 = vadd.f32 0.0, %v2179
    %v2181 = vpop.f32.mrf.mxu0
    %2182 = vmatprep.mubr.bf16.mxu0 0
    %2183 = vmatmul.mubr.bf16.gmra.mxu0 %v2122
    %v2184 = vpop.f32.mrf.mxu0
    %v2185 = vadd.f32 0.0, %v2184
    %v2186 = vpop.f32.mrf.mxu0
    %v2187 = vpop.f32.mrf.mxu0
    %v2188 = vadd.f32 0.0, %v2187
    %v2189 = vpop.f32.mrf.mxu0
    %2190 = vmatprep.mubr.bf16.mxu0 0
    %2191 = vmatmul.mubr.bf16.gmra.mxu0 %v2125
    %v2192 = vpop.f32.mrf.mxu0
    %v2193 = vadd.f32 0.0, %v2192
    %v2194 = vpop.f32.mrf.mxu0
    %v2195 = vpop.f32.mrf.mxu0
    %v2196 = vadd.f32 0.0, %v2195
    %v2197 = vpop.f32.mrf.mxu0
    %2198 = vmatprep.mubr.bf16.mxu0 0
    %2199 = vmatmul.mubr.bf16.gmra.mxu0 %v2128
    %v2200 = vpop.f32.mrf.mxu0
    %v2201 = vadd.f32 0.0, %v2200
    %v2202 = vpop.f32.mrf.mxu0
    %v2203 = vpop.f32.mrf.mxu0
    %v2204 = vadd.f32 0.0, %v2203
    %v2205 = vpop.f32.mrf.mxu0
    %2206 = vmatprep.mubr.bf16.mxu0 0
    %2207 = vmatmul.mubr.bf16.gmra.mxu0 %v2131
    %v2208 = vpop.f32.mrf.mxu0
    %v2209 = vadd.f32 0.0, %v2208
    %v2210 = vpop.f32.mrf.mxu0
    %v2211 = vpop.f32.mrf.mxu0
    %v2212 = vadd.f32 0.0, %v2211
    %v2213 = vpop.f32.mrf.mxu0
    %2214 = vmatprep.mubr.bf16.mxu0 0
    %2215 = vmatmul.mubr.bf16.gmra.mxu0 %v2134
    %v2216 = vpop.f32.mrf.mxu0
    %v2217 = vadd.f32 0.0, %v2216
    %v2218 = vpop.f32.mrf.mxu0
    %v2219 = vpop.f32.mrf.mxu0
    %v2220 = vadd.f32 0.0, %v2219
    %v2221 = vpop.f32.mrf.mxu0
    %2222 = vmatprep.mubr.bf16.mxu0 0
    %2223 = vmatmul.mubr.bf16.gmra.mxu0 %v2137
    %v2224 = vpop.f32.mrf.mxu0
    %v2225 = vadd.f32 0.0, %v2224
    %v2226 = vpop.f32.mrf.mxu0
    %v2227 = vpop.f32.mrf.mxu0
    %v2228 = vadd.f32 0.0, %v2227
    %v2229 = vpop.f32.mrf.mxu0
    %2230 = vmatprep.mubr.bf16.mxu0 0
    %2231 = vmatmul.mubr.bf16.gmra.mxu0 %v2140
    %v2232 = vpop.f32.mrf.mxu0
    %v2233 = vadd.f32 0.0, %v2232
    %v2234 = vpop.f32.mrf.mxu0
    %v2235 = vpop.f32.mrf.mxu0
    %v2236 = vadd.f32 0.0, %v2235
    %v2237 = vpop.f32.mrf.mxu0
    %2238 = vdwg.mxu0
    %v2239 = vadd.f32 %v2021, %v2177
    %v2240 = vadd.f32 %v2022, %v2180
    %v2241 = vadd.f32 %v2023, %v2185
    %v2242 = vadd.f32 %v2024, %v2188
    %v2243 = vadd.f32 %v2025, %v2193
    %v2244 = vadd.f32 %v2026, %v2196
    %v2245 = vadd.f32 %v2027, %v2201
    %v2246 = vadd.f32 %v2028, %v2204
    %v2247 = vadd.f32 %v2029, %v2209
    %v2248 = vadd.f32 %v2030, %v2212
    %v2249 = vadd.f32 %v2031, %v2217
    %v2250 = vadd.f32 %v2032, %v2220
    %v2251 = vadd.f32 %v2033, %v2225
    %v2252 = vadd.f32 %v2034, %v2228
    %v2253 = vadd.f32 %v2035, %v2233
    %v2254 = vadd.f32 %v2036, %v2236
    %v2255 = vld [vmem:[%s5 + $0x2] sm:$0x1]
    %v2256 = vlaneseq
    %v2257 = vshrl.u32 %v2256, 7
    %v2258 = vsub.s32 0, %v2257
    %v2259 = vrot.slane %v2255, %v2258
    %v2260 = vmul.f32 %v2239, %v2259
    %v2261 = vmul.f32 %v2240, %v2259
    %v2262 = vmul.f32 %v2241, %v2259
    %v2263 = vmul.f32 %v2242, %v2259
    %v2264 = vmul.f32 %v2243, %v2259
    %v2265 = vmul.f32 %v2244, %v2259
    %v2266 = vmul.f32 %v2245, %v2259
    %v2267 = vmul.f32 %v2246, %v2259
    %v2268 = vmul.f32 %v2247, %v2259
    %v2269 = vmul.f32 %v2248, %v2259
    %v2270 = vmul.f32 %v2249, %v2259
    %v2271 = vmul.f32 %v2250, %v2259
    %v2272 = vmul.f32 %v2251, %v2259
    %v2273 = vmul.f32 %v2252, %v2259
    %v2274 = vmul.f32 %v2253, %v2259
    %v2275 = vmul.f32 %v2254, %v2259
    %v2276 = vld [vmem:[%s5 + $0x3] sm:$0x1]
    %v2277 = vlaneseq
    %v2278 = vshrl.u32 %v2277, 7
    %v2279 = vsub.s32 0, %v2278
    %v2280 = vrot.slane %v2276, %v2279
    %v2281 = vadd.f32 %v2260, %v2280
    %v2282 = vadd.f32 %v2261, %v2280
    %v2283 = vadd.f32 %v2262, %v2280
    %v2284 = vadd.f32 %v2263, %v2280
    %v2285 = vadd.f32 %v2264, %v2280
    %v2286 = vadd.f32 %v2265, %v2280
    %v2287 = vadd.f32 %v2266, %v2280
    %v2288 = vadd.f32 %v2267, %v2280
    %v2289 = vadd.f32 %v2268, %v2280
    %v2290 = vadd.f32 %v2269, %v2280
    %v2291 = vadd.f32 %v2270, %v2280
    %v2292 = vadd.f32 %v2271, %v2280
    %v2293 = vadd.f32 %v2272, %v2280
    %v2294 = vadd.f32 %v2273, %v2280
    %v2295 = vadd.f32 %v2274, %v2280
    %v2296 = vadd.f32 %v2275, %v2280
    %v2297 = vmax.f32 %v2281, 0.0
    %v2298 = vmax.f32 %v2282, 0.0
    %v2299 = vmax.f32 %v2283, 0.0
    %v2300 = vmax.f32 %v2284, 0.0
    %v2301 = vmax.f32 %v2285, 0.0
    %v2302 = vmax.f32 %v2286, 0.0
    %v2303 = vmax.f32 %v2287, 0.0
    %v2304 = vmax.f32 %v2288, 0.0
    %v2305 = vmax.f32 %v2289, 0.0
    %v2306 = vmax.f32 %v2290, 0.0
    %v2307 = vmax.f32 %v2291, 0.0
    %v2308 = vmax.f32 %v2292, 0.0
    %v2309 = vmax.f32 %v2293, 0.0
    %v2310 = vmax.f32 %v2294, 0.0
    %v2311 = vmax.f32 %v2295, 0.0
    %v2312 = vmax.f32 %v2296, 0.0
    %2313 = vst.msk [vmem:[#allocation2 + $0x10] sm:$0xff] %vm68, %v2297
    %2314 = vst.msk [vmem:[#allocation2 + $0x18] sm:$0xff] %vm68, %v2298
    %2315 = vst.msk [vmem:[#allocation2 + $0x20] sm:$0xff] %vm68, %v2299
    %2316 = vst.msk [vmem:[#allocation2 + $0x28] sm:$0xff] %vm68, %v2300
    %2317 = vst.msk [vmem:[#allocation2 + $0x30] sm:$0xff] %vm68, %v2301
    %2318 = vst.msk [vmem:[#allocation2 + $0x38] sm:$0xff] %vm68, %v2302
    %2319 = vst.msk [vmem:[#allocation2 + $0x40] sm:$0xff] %vm68, %v2303
    %2320 = vst.msk [vmem:[#allocation2 + $0x48] sm:$0xff] %vm68, %v2304
    %2321 = vst.msk [vmem:[#allocation2 + $0x50] sm:$0xff] %vm68, %v2305
    %2322 = vst.msk [vmem:[#allocation2 + $0x58] sm:$0xff] %vm68, %v2306
    %2323 = vst.msk [vmem:[#allocation2 + $0x60] sm:$0xff] %vm68, %v2307
    %2324 = vst.msk [vmem:[#allocation2 + $0x68] sm:$0xff] %vm68, %v2308
    %2325 = vst.msk [vmem:[#allocation2 + $0x70] sm:$0xff] %vm68, %v2309
    %2326 = vst.msk [vmem:[#allocation2 + $0x78] sm:$0xff] %vm68, %v2310
    %2327 = vst.msk [vmem:[#allocation2 + $0x80] sm:$0xff] %vm68, %v2311
    %2328 = vst.msk [vmem:[#allocation2 + $0x88] sm:$0xff] %vm68, %v2312
    %v2329 = vld [vmem:[#allocation2 + $0x7] sm:$0xff]
    %v2330 = vld [vmem:[#allocation2 + $0xf] sm:$0xff]
    %v2331 = vld [vmem:[#allocation2 + $0x17] sm:$0xff]
    %v2332 = vld [vmem:[#allocation2 + $0x1f] sm:$0xff]
    %v2333 = vld [vmem:[#allocation2 + $0x27] sm:$0xff]
    %v2334 = vld [vmem:[#allocation2 + $0x2f] sm:$0xff]
    %v2335 = vld [vmem:[#allocation2 + $0x37] sm:$0xff]
    %v2336 = vld [vmem:[#allocation2 + $0x3f] sm:$0xff]
    %v2337 = vld [vmem:[#allocation2 + $0x47] sm:$0xff]
    %v2338 = vld [vmem:[#allocation2 + $0x4f] sm:$0xff]
    %v2339 = vld [vmem:[#allocation2 + $0x57] sm:$0xff]
    %v2340 = vld [vmem:[#allocation2 + $0x5f] sm:$0xff]
    %v2341 = vld [vmem:[#allocation2 + $0x67] sm:$0xff]
    %v2342 = vld [vmem:[#allocation2 + $0x6f] sm:$0xff]
    %v2343 = vld [vmem:[#allocation2 + $0x77] sm:$0xff]
    %v2344 = vld [vmem:[#allocation2 + $0x7f] sm:$0xff]
    %v2345 = vsel %vm438, %v2329, 0.0
    %v2346 = vsel %vm439, %v2330, 0.0
    %v2347 = vsel %vm440, %v2331, 0.0
    %v2348 = vsel %vm441, %v2332, 0.0
    %v2349 = vsel %vm442, %v2333, 0.0
    %v2350 = vsel %vm443, %v2334, 0.0
    %v2351 = vsel %vm444, %v2335, 0.0
    %v2352 = vsel %vm445, %v2336, 0.0
    %v2353 = vsel %vm446, %v2337, 0.0
    %v2354 = vsel %vm447, %v2338, 0.0
    %v2355 = vsel %vm448, %v2339, 0.0
    %v2356 = vsel %vm449, %v2340, 0.0
    %v2357 = vsel %vm450, %v2341, 0.0
    %v2358 = vsel %vm451, %v2342, 0.0
    %v2359 = vsel %vm452, %v2343, 0.0
    %v2360 = vsel %vm453, %v2344, 0.0
    %v2361 = vpack.c.bf16 %v2346, %v2345
    %v2362 = vpack.c.bf16 %v2348, %v2347
    %v2363 = vpack.c.bf16 %v2350, %v2349
    %v2364 = vpack.c.bf16 %v2352, %v2351
    %v2365 = vpack.c.bf16 %v2354, %v2353
    %v2366 = vpack.c.bf16 %v2356, %v2355
    %v2367 = vpack.c.bf16 %v2358, %v2357
    %v2368 = vpack.c.bf16 %v2360, %v2359
    %v2369 = vld [vmem:[#allocation5] sm:$0xf]
    %v2370 = vld [vmem:[#allocation5 + $0x4] sm:$0xf]
    %v2371 = vld [vmem:[#allocation5 + $0x8] sm:$0xf]
    %v2372 = vld [vmem:[#allocation5 + $0xc] sm:$0xf]
    %v2373 = vld [vmem:[#allocation5 + $0x10] sm:$0xf]
    %v2374 = vld [vmem:[#allocation5 + $0x14] sm:$0xf]
    %v2375 = vld [vmem:[#allocation2 + $0x8] sm:$0xff]
    %v2376 = vld [vmem:[#allocation2 + $0x10] sm:$0xff]
    %v2377 = vld [vmem:[#allocation2 + $0x18] sm:$0xff]
    %v2378 = vld [vmem:[#allocation2 + $0x20] sm:$0xff]
    %v2379 = vld [vmem:[#allocation2 + $0x28] sm:$0xff]
    %v2380 = vld [vmem:[#allocation2 + $0x30] sm:$0xff]
    %v2381 = vld [vmem:[#allocation2 + $0x38] sm:$0xff]
    %v2382 = vld [vmem:[#allocation2 + $0x40] sm:$0xff]
    %v2383 = vld [vmem:[#allocation2 + $0x48] sm:$0xff]
    %v2384 = vld [vmem:[#allocation2 + $0x50] sm:$0xff]
    %v2385 = vld [vmem:[#allocation2 + $0x58] sm:$0xff]
    %v2386 = vld [vmem:[#allocation2 + $0x60] sm:$0xff]
    %v2387 = vld [vmem:[#allocation2 + $0x68] sm:$0xff]
    %v2388 = vld [vmem:[#allocation2 + $0x70] sm:$0xff]
    %v2389 = vld [vmem:[#allocation2 + $0x78] sm:$0xff]
    %v2390 = vld [vmem:[#allocation2 + $0x80] sm:$0xff]
    %v2391 = vsel %vm358, %v2375, 0.0
    %v2392 = vsel %vm359, %v2376, 0.0
    %v2393 = vsel %vm360, %v2377, 0.0
    %v2394 = vsel %vm361, %v2378, 0.0
    %v2395 = vsel %vm362, %v2379, 0.0
    %v2396 = vsel %vm363, %v2380, 0.0
    %v2397 = vsel %vm364, %v2381, 0.0
    %v2398 = vsel %vm365, %v2382, 0.0
    %v2399 = vsel %vm366, %v2383, 0.0
    %v2400 = vsel %vm367, %v2384, 0.0
    %v2401 = vsel %vm368, %v2385, 0.0
    %v2402 = vsel %vm369, %v2386, 0.0
    %v2403 = vsel %vm370, %v2387, 0.0
    %v2404 = vsel %vm371, %v2388, 0.0
    %v2405 = vsel %vm372, %v2389, 0.0
    %v2406 = vsel %vm373, %v2390, 0.0
    %v2407 = vpack.c.bf16 %v2392, %v2391
    %v2408 = vpack.c.bf16 %v2394, %v2393
    %v2409 = vpack.c.bf16 %v2396, %v2395
    %v2410 = vpack.c.bf16 %v2398, %v2397
    %v2411 = vpack.c.bf16 %v2400, %v2399
    %v2412 = vpack.c.bf16 %v2402, %v2401
    %v2413 = vpack.c.bf16 %v2404, %v2403
    %v2414 = vpack.c.bf16 %v2406, %v2405
    %s2415 = scalar_lea.vmem [#allocation5], 24
    %v2416 = vld [vmem:[%s2415] sm:$0xf]
    %v2417 = vld [vmem:[%s2415 + $0x4] sm:$0xf]
    %v2418 = vld [vmem:[%s2415 + $0x8] sm:$0xf]
    %v2419 = vld [vmem:[%s2415 + $0xc] sm:$0xf]
    %v2420 = vld [vmem:[%s2415 + $0x10] sm:$0xf]
    %v2421 = vld [vmem:[%s2415 + $0x14] sm:$0xf]
    %v2428 = vunpack.c.l.b16 %v2416
    %v2429 = vunpack.c.l.b16 %v2417
    %v2430 = vunpack.c.l.b16 %v2418
    %v2431 = vunpack.c.l.b16 %v2419
    %v2432 = vunpack.c.l.b16 %v2420
    %v2433 = vunpack.c.l.b16 %v2421
    %v2434 = vpack.c.b16 %v2429, %v2428
    %v2435 = vpack.c.b16 %v2431, %v2430
    %v2436 = vpack.c.b16 %v2433, %v2432
    %v2441 = vsel %vm68, %v2407, 0
    %v2444 = vsel %vm68, %v2408, 0
    %v2447 = vsel %vm68, %v2409, 0
    %v2450 = vsel %vm68, %v2410, 0
    %v2453 = vsel %vm68, %v2411, 0
    %v2456 = vsel %vm68, %v2412, 0
    %v2459 = vsel %vm68, %v2413, 0
    %v2462 = vsel %vm68, %v2414, 0
    %2464 = vmatprep.subr.bf16.mxu0 0
    %2465 = vmatpush1.bf16.msra.mxu0 0
    %2466 = vmatprep.subr.bf16.mxu0 0
    %2467 = vmatpush1.bf16.msra.mxu0 0
    %2468 = vmatprep.subr.bf16.mxu0 0
    %2469 = vmatpush1.bf16.msra.mxu0 0
    %2470 = vmatprep.subr.bf16.mxu0 0
    %2471 = vmatpush1.bf16.msra.mxu0 0
    %2472 = vmatprep.subr.bf16.mxu0 0
    %2473 = vmatpush1.bf16.msra.mxu0 0
    %2474 = vmatprep.subr.bf16.mxu0 0
    %2475 = vmatpush1.bf16.msra.mxu0 %v2436
    %2476 = vmatprep.subr.bf16.mxu0 0
    %2477 = vmatpush1.bf16.msra.mxu0 %v2435
    %2478 = vmatprep.subr.bf16.mxu0 0
    %2479 = vmatpush1.bf16.msra.mxu0 %v2434
    %2480 = vmatprep.subr.bf16.mxu0 0
    %2481 = vmatpush2.bf16.msra.mxu0 0
    %2482 = vmatprep.subr.bf16.mxu0 0
    %2483 = vmatpush2.bf16.msra.mxu0 0
    %2484 = vmatprep.subr.bf16.mxu0 0
    %2485 = vmatpush2.bf16.msra.mxu0 0
    %2486 = vmatprep.subr.bf16.mxu0 0
    %2487 = vmatpush2.bf16.msra.mxu0 0
    %2488 = vmatprep.subr.bf16.mxu0 0
    %2489 = vmatpush2.bf16.msra.mxu0 0
    %2490 = vmatprep.subr.bf16.mxu0 0
    %2491 = vmatpush2.bf16.msra.mxu0 0
    %2492 = vmatprep.subr.bf16.mxu0 0
    %2493 = vmatpush2.bf16.msra.mxu0 0
    %2494 = vmatprep.subr.bf16.mxu0 0
    %2495 = vmatpush2.bf16.msra.mxu0 0
    %2496 = vmatprep.mubr.bf16.mxu0 0
    %2497 = vmatmul.mubr.bf16.gmra.mxu0 %v2441
    %v2498 = vpop.f32.mrf.mxu0
    %v2499 = vadd.f32 0.0, %v2498
    %v2500 = vpop.f32.mrf.mxu0
    %v2501 = vpop.f32.mrf.mxu0
    %v2502 = vadd.f32 0.0, %v2501
    %v2503 = vpop.f32.mrf.mxu0
    %2504 = vmatprep.mubr.bf16.mxu0 0
    %2505 = vmatmul.mubr.bf16.gmra.mxu0 %v2444
    %v2506 = vpop.f32.mrf.mxu0
    %v2507 = vadd.f32 0.0, %v2506
    %v2508 = vpop.f32.mrf.mxu0
    %v2509 = vpop.f32.mrf.mxu0
    %v2510 = vadd.f32 0.0, %v2509
    %v2511 = vpop.f32.mrf.mxu0
    %2512 = vmatprep.mubr.bf16.mxu0 0
    %2513 = vmatmul.mubr.bf16.gmra.mxu0 %v2447
    %v2514 = vpop.f32.mrf.mxu0
    %v2515 = vadd.f32 0.0, %v2514
    %v2516 = vpop.f32.mrf.mxu0
    %v2517 = vpop.f32.mrf.mxu0
    %v2518 = vadd.f32 0.0, %v2517
    %v2519 = vpop.f32.mrf.mxu0
    %2520 = vmatprep.mubr.bf16.mxu0 0
    %2521 = vmatmul.mubr.bf16.gmra.mxu0 %v2450
    %v2522 = vpop.f32.mrf.mxu0
    %v2523 = vadd.f32 0.0, %v2522
    %v2524 = vpop.f32.mrf.mxu0
    %v2525 = vpop.f32.mrf.mxu0
    %v2526 = vadd.f32 0.0, %v2525
    %v2527 = vpop.f32.mrf.mxu0
    %2528 = vmatprep.mubr.bf16.mxu0 0
    %2529 = vmatmul.mubr.bf16.gmra.mxu0 %v2453
    %v2530 = vpop.f32.mrf.mxu0
    %v2531 = vadd.f32 0.0, %v2530
    %v2532 = vpop.f32.mrf.mxu0
    %v2533 = vpop.f32.mrf.mxu0
    %v2534 = vadd.f32 0.0, %v2533
    %v2535 = vpop.f32.mrf.mxu0
    %2536 = vmatprep.mubr.bf16.mxu0 0
    %2537 = vmatmul.mubr.bf16.gmra.mxu0 %v2456
    %v2538 = vpop.f32.mrf.mxu0
    %v2539 = vadd.f32 0.0, %v2538
    %v2540 = vpop.f32.mrf.mxu0
    %v2541 = vpop.f32.mrf.mxu0
    %v2542 = vadd.f32 0.0, %v2541
    %v2543 = vpop.f32.mrf.mxu0
    %2544 = vmatprep.mubr.bf16.mxu0 0
    %2545 = vmatmul.mubr.bf16.gmra.mxu0 %v2459
    %v2546 = vpop.f32.mrf.mxu0
    %v2547 = vadd.f32 0.0, %v2546
    %v2548 = vpop.f32.mrf.mxu0
    %v2549 = vpop.f32.mrf.mxu0
    %v2550 = vadd.f32 0.0, %v2549
    %v2551 = vpop.f32.mrf.mxu0
    %2552 = vmatprep.mubr.bf16.mxu0 0
    %2553 = vmatmul.mubr.bf16.gmra.mxu0 %v2462
    %v2554 = vpop.f32.mrf.mxu0
    %v2555 = vadd.f32 0.0, %v2554
    %v2556 = vpop.f32.mrf.mxu0
    %v2557 = vpop.f32.mrf.mxu0
    %v2558 = vadd.f32 0.0, %v2557
    %v2559 = vpop.f32.mrf.mxu0
    %2560 = vdwg.mxu0
    %v2567 = vunpack.c.l.b16 %v2369
    %v2568 = vunpack.c.l.b16 %v2370
    %v2569 = vunpack.c.l.b16 %v2371
    %v2570 = vunpack.c.l.b16 %v2372
    %v2571 = vunpack.c.l.b16 %v2373
    %v2572 = vunpack.c.l.b16 %v2374
    %v2573 = vpack.c.b16 %v2568, %v2567
    %v2574 = vpack.c.b16 %v2570, %v2569
    %v2575 = vpack.c.b16 %v2572, %v2571
    %v2580 = vsel %vm68, %v2361, 0
    %v2583 = vsel %vm68, %v2362, 0
    %v2586 = vsel %vm68, %v2363, 0
    %v2589 = vsel %vm68, %v2364, 0
    %v2592 = vsel %vm68, %v2365, 0
    %v2595 = vsel %vm68, %v2366, 0
    %v2598 = vsel %vm68, %v2367, 0
    %v2601 = vsel %vm68, %v2368, 0
    %2603 = vmatprep.subr.bf16.mxu0 0
    %2604 = vmatpush1.bf16.msra.mxu0 0
    %2605 = vmatprep.subr.bf16.mxu0 0
    %2606 = vmatpush1.bf16.msra.mxu0 0
    %2607 = vmatprep.subr.bf16.mxu0 0
    %2608 = vmatpush1.bf16.msra.mxu0 0
    %2609 = vmatprep.subr.bf16.mxu0 0
    %2610 = vmatpush1.bf16.msra.mxu0 0
    %2611 = vmatprep.subr.bf16.mxu0 0
    %2612 = vmatpush1.bf16.msra.mxu0 0
    %2613 = vmatprep.subr.bf16.mxu0 0
    %2614 = vmatpush1.bf16.msra.mxu0 %v2575
    %2615 = vmatprep.subr.bf16.mxu0 0
    %2616 = vmatpush1.bf16.msra.mxu0 %v2574
    %2617 = vmatprep.subr.bf16.mxu0 0
    %2618 = vmatpush1.bf16.msra.mxu0 %v2573
    %2619 = vmatprep.subr.bf16.mxu0 0
    %2620 = vmatpush2.bf16.msra.mxu0 0
    %2621 = vmatprep.subr.bf16.mxu0 0
    %2622 = vmatpush2.bf16.msra.mxu0 0
    %2623 = vmatprep.subr.bf16.mxu0 0
    %2624 = vmatpush2.bf16.msra.mxu0 0
    %2625 = vmatprep.subr.bf16.mxu0 0
    %2626 = vmatpush2.bf16.msra.mxu0 0
    %2627 = vmatprep.subr.bf16.mxu0 0
    %2628 = vmatpush2.bf16.msra.mxu0 0
    %2629 = vmatprep.subr.bf16.mxu0 0
    %2630 = vmatpush2.bf16.msra.mxu0 0
    %2631 = vmatprep.subr.bf16.mxu0 0
    %2632 = vmatpush2.bf16.msra.mxu0 0
    %2633 = vmatprep.subr.bf16.mxu0 0
    %2634 = vmatpush2.bf16.msra.mxu0 0
    %2635 = vmatprep.mubr.bf16.mxu0 0
    %2636 = vmatmul.mubr.bf16.gmra.mxu0 %v2580
    %v2637 = vpop.f32.mrf.mxu0
    %v2638 = vadd.f32 %v2499, %v2637
    %v2639 = vpop.f32.mrf.mxu0
    %v2640 = vpop.f32.mrf.mxu0
    %v2641 = vadd.f32 %v2502, %v2640
    %v2642 = vpop.f32.mrf.mxu0
    %2643 = vmatprep.mubr.bf16.mxu0 0
    %2644 = vmatmul.mubr.bf16.gmra.mxu0 %v2583
    %v2645 = vpop.f32.mrf.mxu0
    %v2646 = vadd.f32 %v2507, %v2645
    %v2647 = vpop.f32.mrf.mxu0
    %v2648 = vpop.f32.mrf.mxu0
    %v2649 = vadd.f32 %v2510, %v2648
    %v2650 = vpop.f32.mrf.mxu0
    %2651 = vmatprep.mubr.bf16.mxu0 0
    %2652 = vmatmul.mubr.bf16.gmra.mxu0 %v2586
    %v2653 = vpop.f32.mrf.mxu0
    %v2654 = vadd.f32 %v2515, %v2653
    %v2655 = vpop.f32.mrf.mxu0
    %v2656 = vpop.f32.mrf.mxu0
    %v2657 = vadd.f32 %v2518, %v2656
    %v2658 = vpop.f32.mrf.mxu0
    %2659 = vmatprep.mubr.bf16.mxu0 0
    %2660 = vmatmul.mubr.bf16.gmra.mxu0 %v2589
    %v2661 = vpop.f32.mrf.mxu0
    %v2662 = vadd.f32 %v2523, %v2661
    %v2663 = vpop.f32.mrf.mxu0
    %v2664 = vpop.f32.mrf.mxu0
    %v2665 = vadd.f32 %v2526, %v2664
    %v2666 = vpop.f32.mrf.mxu0
    %2667 = vmatprep.mubr.bf16.mxu0 0
    %2668 = vmatmul.mubr.bf16.gmra.mxu0 %v2592
    %v2669 = vpop.f32.mrf.mxu0
    %v2670 = vadd.f32 %v2531, %v2669
    %v2671 = vpop.f32.mrf.mxu0
    %v2672 = vpop.f32.mrf.mxu0
    %v2673 = vadd.f32 %v2534, %v2672
    %v2674 = vpop.f32.mrf.mxu0
    %2675 = vmatprep.mubr.bf16.mxu0 0
    %2676 = vmatmul.mubr.bf16.gmra.mxu0 %v2595
    %v2677 = vpop.f32.mrf.mxu0
    %v2678 = vadd.f32 %v2539, %v2677
    %v2679 = vpop.f32.mrf.mxu0
    %v2680 = vpop.f32.mrf.mxu0
    %v2681 = vadd.f32 %v2542, %v2680
    %v2682 = vpop.f32.mrf.mxu0
    %2683 = vmatprep.mubr.bf16.mxu0 0
    %2684 = vmatmul.mubr.bf16.gmra.mxu0 %v2598
    %v2685 = vpop.f32.mrf.mxu0
    %v2686 = vadd.f32 %v2547, %v2685
    %v2687 = vpop.f32.mrf.mxu0
    %v2688 = vpop.f32.mrf.mxu0
    %v2689 = vadd.f32 %v2550, %v2688
    %v2690 = vpop.f32.mrf.mxu0
    %2691 = vmatprep.mubr.bf16.mxu0 0
    %2692 = vmatmul.mubr.bf16.gmra.mxu0 %v2601
    %v2693 = vpop.f32.mrf.mxu0
    %v2694 = vadd.f32 %v2555, %v2693
    %v2695 = vpop.f32.mrf.mxu0
    %v2696 = vpop.f32.mrf.mxu0
    %v2697 = vadd.f32 %v2558, %v2696
    %v2698 = vpop.f32.mrf.mxu0
    %2699 = vdwg.mxu0
    %v2700 = vld [vmem:[#allocation2 + $0x9] sm:$0xff]
    %v2701 = vld [vmem:[#allocation2 + $0x11] sm:$0xff]
    %v2702 = vld [vmem:[#allocation2 + $0x19] sm:$0xff]
    %v2703 = vld [vmem:[#allocation2 + $0x21] sm:$0xff]
    %v2704 = vld [vmem:[#allocation2 + $0x29] sm:$0xff]
    %v2705 = vld [vmem:[#allocation2 + $0x31] sm:$0xff]
    %v2706 = vld [vmem:[#allocation2 + $0x39] sm:$0xff]
    %v2707 = vld [vmem:[#allocation2 + $0x41] sm:$0xff]
    %v2708 = vld [vmem:[#allocation2 + $0x49] sm:$0xff]
    %v2709 = vld [vmem:[#allocation2 + $0x51] sm:$0xff]
    %v2710 = vld [vmem:[#allocation2 + $0x59] sm:$0xff]
    %v2711 = vld [vmem:[#allocation2 + $0x61] sm:$0xff]
    %v2712 = vld [vmem:[#allocation2 + $0x69] sm:$0xff]
    %v2713 = vld [vmem:[#allocation2 + $0x71] sm:$0xff]
    %v2714 = vld [vmem:[#allocation2 + $0x79] sm:$0xff]
    %v2715 = vld [vmem:[#allocation2 + $0x81] sm:$0xff]
    %v2716 = vsel %vm825, %v2700, 0.0
    %v2717 = vsel %vm826, %v2701, 0.0
    %v2718 = vsel %vm827, %v2702, 0.0
    %v2719 = vsel %vm828, %v2703, 0.0
    %v2720 = vsel %vm829, %v2704, 0.0
    %v2721 = vsel %vm830, %v2705, 0.0
    %v2722 = vsel %vm831, %v2706, 0.0
    %v2723 = vsel %vm832, %v2707, 0.0
    %v2724 = vsel %vm833, %v2708, 0.0
    %v2725 = vsel %vm834, %v2709, 0.0
    %v2726 = vsel %vm835, %v2710, 0.0
    %v2727 = vsel %vm836, %v2711, 0.0
    %v2728 = vsel %vm837, %v2712, 0.0
    %v2729 = vsel %vm838, %v2713, 0.0
    %v2730 = vsel %vm839, %v2714, 0.0
    %v2731 = vsel %vm840, %v2715, 0.0
    %v2732 = vpack.c.bf16 %v2717, %v2716
    %v2733 = vpack.c.bf16 %v2719, %v2718
    %v2734 = vpack.c.bf16 %v2721, %v2720
    %v2735 = vpack.c.bf16 %v2723, %v2722
    %v2736 = vpack.c.bf16 %v2725, %v2724
    %v2737 = vpack.c.bf16 %v2727, %v2726
    %v2738 = vpack.c.bf16 %v2729, %v2728
    %v2739 = vpack.c.bf16 %v2731, %v2730
    %s2740 = scalar_lea.vmem [#allocation5], 48
    %v2741 = vld [vmem:[%s2740] sm:$0xf]
    %v2742 = vld [vmem:[%s2740 + $0x4] sm:$0xf]
    %v2743 = vld [vmem:[%s2740 + $0x8] sm:$0xf]
    %v2744 = vld [vmem:[%s2740 + $0xc] sm:$0xf]
    %v2745 = vld [vmem:[%s2740 + $0x10] sm:$0xf]
    %v2746 = vld [vmem:[%s2740 + $0x14] sm:$0xf]
    %v2753 = vunpack.c.l.b16 %v2741
    %v2754 = vunpack.c.l.b16 %v2742
    %v2755 = vunpack.c.l.b16 %v2743
    %v2756 = vunpack.c.l.b16 %v2744
    %v2757 = vunpack.c.l.b16 %v2745
    %v2758 = vunpack.c.l.b16 %v2746
    %v2759 = vpack.c.b16 %v2754, %v2753
    %v2760 = vpack.c.b16 %v2756, %v2755
    %v2761 = vpack.c.b16 %v2758, %v2757
    %v2766 = vsel %vm68, %v2732, 0
    %v2769 = vsel %vm68, %v2733, 0
    %v2772 = vsel %vm68, %v2734, 0
    %v2775 = vsel %vm68, %v2735, 0
    %v2778 = vsel %vm68, %v2736, 0
    %v2781 = vsel %vm68, %v2737, 0
    %v2784 = vsel %vm68, %v2738, 0
    %v2787 = vsel %vm68, %v2739, 0
    %2789 = vmatprep.subr.bf16.mxu0 0
    %2790 = vmatpush1.bf16.msra.mxu0 0
    %2791 = vmatprep.subr.bf16.mxu0 0
    %2792 = vmatpush1.bf16.msra.mxu0 0
    %2793 = vmatprep.subr.bf16.mxu0 0
    %2794 = vmatpush1.bf16.msra.mxu0 0
    %2795 = vmatprep.subr.bf16.mxu0 0
    %2796 = vmatpush1.bf16.msra.mxu0 0
    %2797 = vmatprep.subr.bf16.mxu0 0
    %2798 = vmatpush1.bf16.msra.mxu0 0
    %2799 = vmatprep.subr.bf16.mxu0 0
    %2800 = vmatpush1.bf16.msra.mxu0 %v2761
    %2801 = vmatprep.subr.bf16.mxu0 0
    %2802 = vmatpush1.bf16.msra.mxu0 %v2760
    %2803 = vmatprep.subr.bf16.mxu0 0
    %2804 = vmatpush1.bf16.msra.mxu0 %v2759
    %2805 = vmatprep.subr.bf16.mxu0 0
    %2806 = vmatpush2.bf16.msra.mxu0 0
    %2807 = vmatprep.subr.bf16.mxu0 0
    %2808 = vmatpush2.bf16.msra.mxu0 0
    %2809 = vmatprep.subr.bf16.mxu0 0
    %2810 = vmatpush2.bf16.msra.mxu0 0
    %2811 = vmatprep.subr.bf16.mxu0 0
    %2812 = vmatpush2.bf16.msra.mxu0 0
    %2813 = vmatprep.subr.bf16.mxu0 0
    %2814 = vmatpush2.bf16.msra.mxu0 0
    %2815 = vmatprep.subr.bf16.mxu0 0
    %2816 = vmatpush2.bf16.msra.mxu0 0
    %2817 = vmatprep.subr.bf16.mxu0 0
    %2818 = vmatpush2.bf16.msra.mxu0 0
    %2819 = vmatprep.subr.bf16.mxu0 0
    %2820 = vmatpush2.bf16.msra.mxu0 0
    %2821 = vmatprep.mubr.bf16.mxu0 0
    %2822 = vmatmul.mubr.bf16.gmra.mxu0 %v2766
    %v2823 = vpop.f32.mrf.mxu0
    %v2824 = vadd.f32 0.0, %v2823
    %v2825 = vpop.f32.mrf.mxu0
    %v2826 = vpop.f32.mrf.mxu0
    %v2827 = vadd.f32 0.0, %v2826
    %v2828 = vpop.f32.mrf.mxu0
    %2829 = vmatprep.mubr.bf16.mxu0 0
    %2830 = vmatmul.mubr.bf16.gmra.mxu0 %v2769
    %v2831 = vpop.f32.mrf.mxu0
    %v2832 = vadd.f32 0.0, %v2831
    %v2833 = vpop.f32.mrf.mxu0
    %v2834 = vpop.f32.mrf.mxu0
    %v2835 = vadd.f32 0.0, %v2834
    %v2836 = vpop.f32.mrf.mxu0
    %2837 = vmatprep.mubr.bf16.mxu0 0
    %2838 = vmatmul.mubr.bf16.gmra.mxu0 %v2772
    %v2839 = vpop.f32.mrf.mxu0
    %v2840 = vadd.f32 0.0, %v2839
    %v2841 = vpop.f32.mrf.mxu0
    %v2842 = vpop.f32.mrf.mxu0
    %v2843 = vadd.f32 0.0, %v2842
    %v2844 = vpop.f32.mrf.mxu0
    %2845 = vmatprep.mubr.bf16.mxu0 0
    %2846 = vmatmul.mubr.bf16.gmra.mxu0 %v2775
    %v2847 = vpop.f32.mrf.mxu0
    %v2848 = vadd.f32 0.0, %v2847
    %v2849 = vpop.f32.mrf.mxu0
    %v2850 = vpop.f32.mrf.mxu0
    %v2851 = vadd.f32 0.0, %v2850
    %v2852 = vpop.f32.mrf.mxu0
    %2853 = vmatprep.mubr.bf16.mxu0 0
    %2854 = vmatmul.mubr.bf16.gmra.mxu0 %v2778
    %v2855 = vpop.f32.mrf.mxu0
    %v2856 = vadd.f32 0.0, %v2855
    %v2857 = vpop.f32.mrf.mxu0
    %v2858 = vpop.f32.mrf.mxu0
    %v2859 = vadd.f32 0.0, %v2858
    %v2860 = vpop.f32.mrf.mxu0
    %2861 = vmatprep.mubr.bf16.mxu0 0
    %2862 = vmatmul.mubr.bf16.gmra.mxu0 %v2781
    %v2863 = vpop.f32.mrf.mxu0
    %v2864 = vadd.f32 0.0, %v2863
    %v2865 = vpop.f32.mrf.mxu0
    %v2866 = vpop.f32.mrf.mxu0
    %v2867 = vadd.f32 0.0, %v2866
    %v2868 = vpop.f32.mrf.mxu0
    %2869 = vmatprep.mubr.bf16.mxu0 0
    %2870 = vmatmul.mubr.bf16.gmra.mxu0 %v2784
    %v2871 = vpop.f32.mrf.mxu0
    %v2872 = vadd.f32 0.0, %v2871
    %v2873 = vpop.f32.mrf.mxu0
    %v2874 = vpop.f32.mrf.mxu0
    %v2875 = vadd.f32 0.0, %v2874
    %v2876 = vpop.f32.mrf.mxu0
    %2877 = vmatprep.mubr.bf16.mxu0 0
    %2878 = vmatmul.mubr.bf16.gmra.mxu0 %v2787
    %v2879 = vpop.f32.mrf.mxu0
    %v2880 = vadd.f32 0.0, %v2879
    %v2881 = vpop.f32.mrf.mxu0
    %v2882 = vpop.f32.mrf.mxu0
    %v2883 = vadd.f32 0.0, %v2882
    %v2884 = vpop.f32.mrf.mxu0
    %2885 = vdwg.mxu0
    %v2886 = vadd.f32 %v2638, %v2824
    %v2887 = vadd.f32 %v2641, %v2827
    %v2888 = vadd.f32 %v2646, %v2832
    %v2889 = vadd.f32 %v2649, %v2835
    %v2890 = vadd.f32 %v2654, %v2840
    %v2891 = vadd.f32 %v2657, %v2843
    %v2892 = vadd.f32 %v2662, %v2848
    %v2893 = vadd.f32 %v2665, %v2851
    %v2894 = vadd.f32 %v2670, %v2856
    %v2895 = vadd.f32 %v2673, %v2859
    %v2896 = vadd.f32 %v2678, %v2864
    %v2897 = vadd.f32 %v2681, %v2867
    %v2898 = vadd.f32 %v2686, %v2872
    %v2899 = vadd.f32 %v2689, %v2875
    %v2900 = vadd.f32 %v2694, %v2880
    %v2901 = vadd.f32 %v2697, %v2883
    %v2902 = vld [vmem:[#allocation2 + $0xf] sm:$0xff]
    %v2903 = vld [vmem:[#allocation2 + $0x17] sm:$0xff]
    %v2904 = vld [vmem:[#allocation2 + $0x1f] sm:$0xff]
    %v2905 = vld [vmem:[#allocation2 + $0x27] sm:$0xff]
    %v2906 = vld [vmem:[#allocation2 + $0x2f] sm:$0xff]
    %v2907 = vld [vmem:[#allocation2 + $0x37] sm:$0xff]
    %v2908 = vld [vmem:[#allocation2 + $0x3f] sm:$0xff]
    %v2909 = vld [vmem:[#allocation2 + $0x47] sm:$0xff]
    %v2910 = vld [vmem:[#allocation2 + $0x4f] sm:$0xff]
    %v2911 = vld [vmem:[#allocation2 + $0x57] sm:$0xff]
    %v2912 = vld [vmem:[#allocation2 + $0x5f] sm:$0xff]
    %v2913 = vld [vmem:[#allocation2 + $0x67] sm:$0xff]
    %v2914 = vld [vmem:[#allocation2 + $0x6f] sm:$0xff]
    %v2915 = vld [vmem:[#allocation2 + $0x77] sm:$0xff]
    %v2916 = vld [vmem:[#allocation2 + $0x7f] sm:$0xff]
    %v2917 = vld [vmem:[#allocation2 + $0x87] sm:$0xff]
    %v2918 = vsel %vm390, %v2902, 0.0
    %v2919 = vsel %vm391, %v2903, 0.0
    %v2920 = vsel %vm392, %v2904, 0.0
    %v2921 = vsel %vm393, %v2905, 0.0
    %v2922 = vsel %vm394, %v2906, 0.0
    %v2923 = vsel %vm395, %v2907, 0.0
    %v2924 = vsel %vm396, %v2908, 0.0
    %v2925 = vsel %vm397, %v2909, 0.0
    %v2926 = vsel %vm398, %v2910, 0.0
    %v2927 = vsel %vm399, %v2911, 0.0
    %v2928 = vsel %vm400, %v2912, 0.0
    %v2929 = vsel %vm401, %v2913, 0.0
    %v2930 = vsel %vm402, %v2914, 0.0
    %v2931 = vsel %vm403, %v2915, 0.0
    %v2932 = vsel %vm404, %v2916, 0.0
    %v2933 = vsel %vm405, %v2917, 0.0
    %v2934 = vpack.c.bf16 %v2919, %v2918
    %v2935 = vpack.c.bf16 %v2921, %v2920
    %v2936 = vpack.c.bf16 %v2923, %v2922
    %v2937 = vpack.c.bf16 %v2925, %v2924
    %v2938 = vpack.c.bf16 %v2927, %v2926
    %v2939 = vpack.c.bf16 %v2929, %v2928
    %v2940 = vpack.c.bf16 %v2931, %v2930
    %v2941 = vpack.c.bf16 %v2933, %v2932
    %s2942 = scalar_lea.vmem [#allocation5], 72
    %v2943 = vld [vmem:[%s2942] sm:$0xf]
    %v2944 = vld [vmem:[%s2942 + $0x4] sm:$0xf]
    %v2945 = vld [vmem:[%s2942 + $0x8] sm:$0xf]
    %v2946 = vld [vmem:[%s2942 + $0xc] sm:$0xf]
    %v2947 = vld [vmem:[%s2942 + $0x10] sm:$0xf]
    %v2948 = vld [vmem:[%s2942 + $0x14] sm:$0xf]
    %v2955 = vunpack.c.l.b16 %v2943
    %v2956 = vunpack.c.l.b16 %v2944
    %v2957 = vunpack.c.l.b16 %v2945
    %v2958 = vunpack.c.l.b16 %v2946
    %v2959 = vunpack.c.l.b16 %v2947
    %v2960 = vunpack.c.l.b16 %v2948
    %v2961 = vpack.c.b16 %v2956, %v2955
    %v2962 = vpack.c.b16 %v2958, %v2957
    %v2963 = vpack.c.b16 %v2960, %v2959
    %v2968 = vsel %vm68, %v2934, 0
    %v2971 = vsel %vm68, %v2935, 0
    %v2974 = vsel %vm68, %v2936, 0
    %v2977 = vsel %vm68, %v2937, 0
    %v2980 = vsel %vm68, %v2938, 0
    %v2983 = vsel %vm68, %v2939, 0
    %v2986 = vsel %vm68, %v2940, 0
    %v2989 = vsel %vm68, %v2941, 0
    %2991 = vmatprep.subr.bf16.mxu0 0
    %2992 = vmatpush1.bf16.msra.mxu0 0
    %2993 = vmatprep.subr.bf16.mxu0 0
    %2994 = vmatpush1.bf16.msra.mxu0 0
    %2995 = vmatprep.subr.bf16.mxu0 0
    %2996 = vmatpush1.bf16.msra.mxu0 0
    %2997 = vmatprep.subr.bf16.mxu0 0
    %2998 = vmatpush1.bf16.msra.mxu0 0
    %2999 = vmatprep.subr.bf16.mxu0 0
    %3000 = vmatpush1.bf16.msra.mxu0 0
    %3001 = vmatprep.subr.bf16.mxu0 0
    %3002 = vmatpush1.bf16.msra.mxu0 %v2963
    %3003 = vmatprep.subr.bf16.mxu0 0
    %3004 = vmatpush1.bf16.msra.mxu0 %v2962
    %3005 = vmatprep.subr.bf16.mxu0 0
    %3006 = vmatpush1.bf16.msra.mxu0 %v2961
    %3007 = vmatprep.subr.bf16.mxu0 0
    %3008 = vmatpush2.bf16.msra.mxu0 0
    %3009 = vmatprep.subr.bf16.mxu0 0
    %3010 = vmatpush2.bf16.msra.mxu0 0
    %3011 = vmatprep.subr.bf16.mxu0 0
    %3012 = vmatpush2.bf16.msra.mxu0 0
    %3013 = vmatprep.subr.bf16.mxu0 0
    %3014 = vmatpush2.bf16.msra.mxu0 0
    %3015 = vmatprep.subr.bf16.mxu0 0
    %3016 = vmatpush2.bf16.msra.mxu0 0
    %3017 = vmatprep.subr.bf16.mxu0 0
    %3018 = vmatpush2.bf16.msra.mxu0 0
    %3019 = vmatprep.subr.bf16.mxu0 0
    %3020 = vmatpush2.bf16.msra.mxu0 0
    %3021 = vmatprep.subr.bf16.mxu0 0
    %3022 = vmatpush2.bf16.msra.mxu0 0
    %3023 = vmatprep.mubr.bf16.mxu0 0
    %3024 = vmatmul.mubr.bf16.gmra.mxu0 %v2968
    %v3025 = vpop.f32.mrf.mxu0
    %v3026 = vadd.f32 0.0, %v3025
    %v3027 = vpop.f32.mrf.mxu0
    %v3028 = vpop.f32.mrf.mxu0
    %v3029 = vadd.f32 0.0, %v3028
    %v3030 = vpop.f32.mrf.mxu0
    %3031 = vmatprep.mubr.bf16.mxu0 0
    %3032 = vmatmul.mubr.bf16.gmra.mxu0 %v2971
    %v3033 = vpop.f32.mrf.mxu0
    %v3034 = vadd.f32 0.0, %v3033
    %v3035 = vpop.f32.mrf.mxu0
    %v3036 = vpop.f32.mrf.mxu0
    %v3037 = vadd.f32 0.0, %v3036
    %v3038 = vpop.f32.mrf.mxu0
    %3039 = vmatprep.mubr.bf16.mxu0 0
    %3040 = vmatmul.mubr.bf16.gmra.mxu0 %v2974
    %v3041 = vpop.f32.mrf.mxu0
    %v3042 = vadd.f32 0.0, %v3041
    %v3043 = vpop.f32.mrf.mxu0
    %v3044 = vpop.f32.mrf.mxu0
    %v3045 = vadd.f32 0.0, %v3044
    %v3046 = vpop.f32.mrf.mxu0
    %3047 = vmatprep.mubr.bf16.mxu0 0
    %3048 = vmatmul.mubr.bf16.gmra.mxu0 %v2977
    %v3049 = vpop.f32.mrf.mxu0
    %v3050 = vadd.f32 0.0, %v3049
    %v3051 = vpop.f32.mrf.mxu0
    %v3052 = vpop.f32.mrf.mxu0
    %v3053 = vadd.f32 0.0, %v3052
    %v3054 = vpop.f32.mrf.mxu0
    %3055 = vmatprep.mubr.bf16.mxu0 0
    %3056 = vmatmul.mubr.bf16.gmra.mxu0 %v2980
    %v3057 = vpop.f32.mrf.mxu0
    %v3058 = vadd.f32 0.0, %v3057
    %v3059 = vpop.f32.mrf.mxu0
    %v3060 = vpop.f32.mrf.mxu0
    %v3061 = vadd.f32 0.0, %v3060
    %v3062 = vpop.f32.mrf.mxu0
    %3063 = vmatprep.mubr.bf16.mxu0 0
    %3064 = vmatmul.mubr.bf16.gmra.mxu0 %v2983
    %v3065 = vpop.f32.mrf.mxu0
    %v3066 = vadd.f32 0.0, %v3065
    %v3067 = vpop.f32.mrf.mxu0
    %v3068 = vpop.f32.mrf.mxu0
    %v3069 = vadd.f32 0.0, %v3068
    %v3070 = vpop.f32.mrf.mxu0
    %3071 = vmatprep.mubr.bf16.mxu0 0
    %3072 = vmatmul.mubr.bf16.gmra.mxu0 %v2986
    %v3073 = vpop.f32.mrf.mxu0
    %v3074 = vadd.f32 0.0, %v3073
    %v3075 = vpop.f32.mrf.mxu0
    %v3076 = vpop.f32.mrf.mxu0
    %v3077 = vadd.f32 0.0, %v3076
    %v3078 = vpop.f32.mrf.mxu0
    %3079 = vmatprep.mubr.bf16.mxu0 0
    %3080 = vmatmul.mubr.bf16.gmra.mxu0 %v2989
    %v3081 = vpop.f32.mrf.mxu0
    %v3082 = vadd.f32 0.0, %v3081
    %v3083 = vpop.f32.mrf.mxu0
    %v3084 = vpop.f32.mrf.mxu0
    %v3085 = vadd.f32 0.0, %v3084
    %v3086 = vpop.f32.mrf.mxu0
    %3087 = vdwg.mxu0
    %v3088 = vadd.f32 %v2886, %v3026
    %v3089 = vadd.f32 %v2887, %v3029
    %v3090 = vadd.f32 %v2888, %v3034
    %v3091 = vadd.f32 %v2889, %v3037
    %v3092 = vadd.f32 %v2890, %v3042
    %v3093 = vadd.f32 %v2891, %v3045
    %v3094 = vadd.f32 %v2892, %v3050
    %v3095 = vadd.f32 %v2893, %v3053
    %v3096 = vadd.f32 %v2894, %v3058
    %v3097 = vadd.f32 %v2895, %v3061
    %v3098 = vadd.f32 %v2896, %v3066
    %v3099 = vadd.f32 %v2897, %v3069
    %v3100 = vadd.f32 %v2898, %v3074
    %v3101 = vadd.f32 %v2899, %v3077
    %v3102 = vadd.f32 %v2900, %v3082
    %v3103 = vadd.f32 %v2901, %v3085
    %v3104 = vld [vmem:[#allocation2 + $0x10] sm:$0xff]
    %v3105 = vld [vmem:[#allocation2 + $0x18] sm:$0xff]
    %v3106 = vld [vmem:[#allocation2 + $0x20] sm:$0xff]
    %v3107 = vld [vmem:[#allocation2 + $0x28] sm:$0xff]
    %v3108 = vld [vmem:[#allocation2 + $0x30] sm:$0xff]
    %v3109 = vld [vmem:[#allocation2 + $0x38] sm:$0xff]
    %v3110 = vld [vmem:[#allocation2 + $0x40] sm:$0xff]
    %v3111 = vld [vmem:[#allocation2 + $0x48] sm:$0xff]
    %v3112 = vld [vmem:[#allocation2 + $0x50] sm:$0xff]
    %v3113 = vld [vmem:[#allocation2 + $0x58] sm:$0xff]
    %v3114 = vld [vmem:[#allocation2 + $0x60] sm:$0xff]
    %v3115 = vld [vmem:[#allocation2 + $0x68] sm:$0xff]
    %v3116 = vld [vmem:[#allocation2 + $0x70] sm:$0xff]
    %v3117 = vld [vmem:[#allocation2 + $0x78] sm:$0xff]
    %v3118 = vld [vmem:[#allocation2 + $0x80] sm:$0xff]
    %v3119 = vld [vmem:[#allocation2 + $0x88] sm:$0xff]
    %v3120 = vpack.c.bf16 %v3105, %v3104
    %v3121 = vpack.c.bf16 %v3107, %v3106
    %v3122 = vpack.c.bf16 %v3109, %v3108
    %v3123 = vpack.c.bf16 %v3111, %v3110
    %v3124 = vpack.c.bf16 %v3113, %v3112
    %v3125 = vpack.c.bf16 %v3115, %v3114
    %v3126 = vpack.c.bf16 %v3117, %v3116
    %v3127 = vpack.c.bf16 %v3119, %v3118
    %s3128 = scalar_lea.vmem [#allocation5], 96
    %v3129 = vld [vmem:[%s3128] sm:$0xf]
    %v3130 = vld [vmem:[%s3128 + $0x4] sm:$0xf]
    %v3131 = vld [vmem:[%s3128 + $0x8] sm:$0xf]
    %v3132 = vld [vmem:[%s3128 + $0xc] sm:$0xf]
    %v3133 = vld [vmem:[%s3128 + $0x10] sm:$0xf]
    %v3134 = vld [vmem:[%s3128 + $0x14] sm:$0xf]
    %v3141 = vunpack.c.l.b16 %v3129
    %v3142 = vunpack.c.l.b16 %v3130
    %v3143 = vunpack.c.l.b16 %v3131
    %v3144 = vunpack.c.l.b16 %v3132
    %v3145 = vunpack.c.l.b16 %v3133
    %v3146 = vunpack.c.l.b16 %v3134
    %v3147 = vpack.c.b16 %v3142, %v3141
    %v3148 = vpack.c.b16 %v3144, %v3143
    %v3149 = vpack.c.b16 %v3146, %v3145
    %v3154 = vsel %vm68, %v3120, 0
    %v3157 = vsel %vm68, %v3121, 0
    %v3160 = vsel %vm68, %v3122, 0
    %v3163 = vsel %vm68, %v3123, 0
    %v3166 = vsel %vm68, %v3124, 0
    %v3169 = vsel %vm68, %v3125, 0
    %v3172 = vsel %vm68, %v3126, 0
    %v3175 = vsel %vm68, %v3127, 0
    %3177 = vmatprep.subr.bf16.mxu0 0
    %3178 = vmatpush1.bf16.msra.mxu0 0
    %3179 = vmatprep.subr.bf16.mxu0 0
    %3180 = vmatpush1.bf16.msra.mxu0 0
    %3181 = vmatprep.subr.bf16.mxu0 0
    %3182 = vmatpush1.bf16.msra.mxu0 0
    %3183 = vmatprep.subr.bf16.mxu0 0
    %3184 = vmatpush1.bf16.msra.mxu0 0
    %3185 = vmatprep.subr.bf16.mxu0 0
    %3186 = vmatpush1.bf16.msra.mxu0 0
    %3187 = vmatprep.subr.bf16.mxu0 0
    %3188 = vmatpush1.bf16.msra.mxu0 %v3149
    %3189 = vmatprep.subr.bf16.mxu0 0
    %3190 = vmatpush1.bf16.msra.mxu0 %v3148
    %3191 = vmatprep.subr.bf16.mxu0 0
    %3192 = vmatpush1.bf16.msra.mxu0 %v3147
    %3193 = vmatprep.subr.bf16.mxu0 0
    %3194 = vmatpush2.bf16.msra.mxu0 0
    %3195 = vmatprep.subr.bf16.mxu0 0
    %3196 = vmatpush2.bf16.msra.mxu0 0
    %3197 = vmatprep.subr.bf16.mxu0 0
    %3198 = vmatpush2.bf16.msra.mxu0 0
    %3199 = vmatprep.subr.bf16.mxu0 0
    %3200 = vmatpush2.bf16.msra.mxu0 0
    %3201 = vmatprep.subr.bf16.mxu0 0
    %3202 = vmatpush2.bf16.msra.mxu0 0
    %3203 = vmatprep.subr.bf16.mxu0 0
    %3204 = vmatpush2.bf16.msra.mxu0 0
    %3205 = vmatprep.subr.bf16.mxu0 0
    %3206 = vmatpush2.bf16.msra.mxu0 0
    %3207 = vmatprep.subr.bf16.mxu0 0
    %3208 = vmatpush2.bf16.msra.mxu0 0
    %3209 = vmatprep.mubr.bf16.mxu0 0
    %3210 = vmatmul.mubr.bf16.gmra.mxu0 %v3154
    %v3211 = vpop.f32.mrf.mxu0
    %v3212 = vadd.f32 0.0, %v3211
    %v3213 = vpop.f32.mrf.mxu0
    %v3214 = vpop.f32.mrf.mxu0
    %v3215 = vadd.f32 0.0, %v3214
    %v3216 = vpop.f32.mrf.mxu0
    %3217 = vmatprep.mubr.bf16.mxu0 0
    %3218 = vmatmul.mubr.bf16.gmra.mxu0 %v3157
    %v3219 = vpop.f32.mrf.mxu0
    %v3220 = vadd.f32 0.0, %v3219
    %v3221 = vpop.f32.mrf.mxu0
    %v3222 = vpop.f32.mrf.mxu0
    %v3223 = vadd.f32 0.0, %v3222
    %v3224 = vpop.f32.mrf.mxu0
    %3225 = vmatprep.mubr.bf16.mxu0 0
    %3226 = vmatmul.mubr.bf16.gmra.mxu0 %v3160
    %v3227 = vpop.f32.mrf.mxu0
    %v3228 = vadd.f32 0.0, %v3227
    %v3229 = vpop.f32.mrf.mxu0
    %v3230 = vpop.f32.mrf.mxu0
    %v3231 = vadd.f32 0.0, %v3230
    %v3232 = vpop.f32.mrf.mxu0
    %3233 = vmatprep.mubr.bf16.mxu0 0
    %3234 = vmatmul.mubr.bf16.gmra.mxu0 %v3163
    %v3235 = vpop.f32.mrf.mxu0
    %v3236 = vadd.f32 0.0, %v3235
    %v3237 = vpop.f32.mrf.mxu0
    %v3238 = vpop.f32.mrf.mxu0
    %v3239 = vadd.f32 0.0, %v3238
    %v3240 = vpop.f32.mrf.mxu0
    %3241 = vmatprep.mubr.bf16.mxu0 0
    %3242 = vmatmul.mubr.bf16.gmra.mxu0 %v3166
    %v3243 = vpop.f32.mrf.mxu0
    %v3244 = vadd.f32 0.0, %v3243
    %v3245 = vpop.f32.mrf.mxu0
    %v3246 = vpop.f32.mrf.mxu0
    %v3247 = vadd.f32 0.0, %v3246
    %v3248 = vpop.f32.mrf.mxu0
    %3249 = vmatprep.mubr.bf16.mxu0 0
    %3250 = vmatmul.mubr.bf16.gmra.mxu0 %v3169
    %v3251 = vpop.f32.mrf.mxu0
    %v3252 = vadd.f32 0.0, %v3251
    %v3253 = vpop.f32.mrf.mxu0
    %v3254 = vpop.f32.mrf.mxu0
    %v3255 = vadd.f32 0.0, %v3254
    %v3256 = vpop.f32.mrf.mxu0
    %3257 = vmatprep.mubr.bf16.mxu0 0
    %3258 = vmatmul.mubr.bf16.gmra.mxu0 %v3172
    %v3259 = vpop.f32.mrf.mxu0
    %v3260 = vadd.f32 0.0, %v3259
    %v3261 = vpop.f32.mrf.mxu0
    %v3262 = vpop.f32.mrf.mxu0
    %v3263 = vadd.f32 0.0, %v3262
    %v3264 = vpop.f32.mrf.mxu0
    %3265 = vmatprep.mubr.bf16.mxu0 0
    %3266 = vmatmul.mubr.bf16.gmra.mxu0 %v3175
    %v3267 = vpop.f32.mrf.mxu0
    %v3268 = vadd.f32 0.0, %v3267
    %v3269 = vpop.f32.mrf.mxu0
    %v3270 = vpop.f32.mrf.mxu0
    %v3271 = vadd.f32 0.0, %v3270
    %v3272 = vpop.f32.mrf.mxu0
    %3273 = vdwg.mxu0
    %v3274 = vadd.f32 %v3088, %v3212
    %v3275 = vadd.f32 %v3089, %v3215
    %v3276 = vadd.f32 %v3090, %v3220
    %v3277 = vadd.f32 %v3091, %v3223
    %v3278 = vadd.f32 %v3092, %v3228
    %v3279 = vadd.f32 %v3093, %v3231
    %v3280 = vadd.f32 %v3094, %v3236
    %v3281 = vadd.f32 %v3095, %v3239
    %v3282 = vadd.f32 %v3096, %v3244
    %v3283 = vadd.f32 %v3097, %v3247
    %v3284 = vadd.f32 %v3098, %v3252
    %v3285 = vadd.f32 %v3099, %v3255
    %v3286 = vadd.f32 %v3100, %v3260
    %v3287 = vadd.f32 %v3101, %v3263
    %v3288 = vadd.f32 %v3102, %v3268
    %v3289 = vadd.f32 %v3103, %v3271
    %v3290 = vld [vmem:[#allocation2 + $0x11] sm:$0xff]
    %v3291 = vld [vmem:[#allocation2 + $0x19] sm:$0xff]
    %v3292 = vld [vmem:[#allocation2 + $0x21] sm:$0xff]
    %v3293 = vld [vmem:[#allocation2 + $0x29] sm:$0xff]
    %v3294 = vld [vmem:[#allocation2 + $0x31] sm:$0xff]
    %v3295 = vld [vmem:[#allocation2 + $0x39] sm:$0xff]
    %v3296 = vld [vmem:[#allocation2 + $0x41] sm:$0xff]
    %v3297 = vld [vmem:[#allocation2 + $0x49] sm:$0xff]
    %v3298 = vld [vmem:[#allocation2 + $0x51] sm:$0xff]
    %v3299 = vld [vmem:[#allocation2 + $0x59] sm:$0xff]
    %v3300 = vld [vmem:[#allocation2 + $0x61] sm:$0xff]
    %v3301 = vld [vmem:[#allocation2 + $0x69] sm:$0xff]
    %v3302 = vld [vmem:[#allocation2 + $0x71] sm:$0xff]
    %v3303 = vld [vmem:[#allocation2 + $0x79] sm:$0xff]
    %v3304 = vld [vmem:[#allocation2 + $0x81] sm:$0xff]
    %v3305 = vld [vmem:[#allocation2 + $0x89] sm:$0xff]
    %v3306 = vsel %vm406, %v3290, 0.0
    %v3307 = vsel %vm407, %v3291, 0.0
    %v3308 = vsel %vm408, %v3292, 0.0
    %v3309 = vsel %vm409, %v3293, 0.0
    %v3310 = vsel %vm410, %v3294, 0.0
    %v3311 = vsel %vm411, %v3295, 0.0
    %v3312 = vsel %vm412, %v3296, 0.0
    %v3313 = vsel %vm413, %v3297, 0.0
    %v3314 = vsel %vm414, %v3298, 0.0
    %v3315 = vsel %vm415, %v3299, 0.0
    %v3316 = vsel %vm416, %v3300, 0.0
    %v3317 = vsel %vm417, %v3301, 0.0
    %v3318 = vsel %vm418, %v3302, 0.0
    %v3319 = vsel %vm419, %v3303, 0.0
    %v3320 = vsel %vm420, %v3304, 0.0
    %v3321 = vsel %vm421, %v3305, 0.0
    %v3322 = vpack.c.bf16 %v3307, %v3306
    %v3323 = vpack.c.bf16 %v3309, %v3308
    %v3324 = vpack.c.bf16 %v3311, %v3310
    %v3325 = vpack.c.bf16 %v3313, %v3312
    %v3326 = vpack.c.bf16 %v3315, %v3314
    %v3327 = vpack.c.bf16 %v3317, %v3316
    %v3328 = vpack.c.bf16 %v3319, %v3318
    %v3329 = vpack.c.bf16 %v3321, %v3320
    %s3330 = scalar_lea.vmem [#allocation5], 120
    %v3331 = vld [vmem:[%s3330] sm:$0xf]
    %v3332 = vld [vmem:[%s3330 + $0x4] sm:$0xf]
    %v3333 = vld [vmem:[%s3330 + $0x8] sm:$0xf]
    %v3334 = vld [vmem:[%s3330 + $0xc] sm:$0xf]
    %v3335 = vld [vmem:[%s3330 + $0x10] sm:$0xf]
    %v3336 = vld [vmem:[%s3330 + $0x14] sm:$0xf]
    %v3343 = vunpack.c.l.b16 %v3331
    %v3344 = vunpack.c.l.b16 %v3332
    %v3345 = vunpack.c.l.b16 %v3333
    %v3346 = vunpack.c.l.b16 %v3334
    %v3347 = vunpack.c.l.b16 %v3335
    %v3348 = vunpack.c.l.b16 %v3336
    %v3349 = vpack.c.b16 %v3344, %v3343
    %v3350 = vpack.c.b16 %v3346, %v3345
    %v3351 = vpack.c.b16 %v3348, %v3347
    %v3356 = vsel %vm68, %v3322, 0
    %v3359 = vsel %vm68, %v3323, 0
    %v3362 = vsel %vm68, %v3324, 0
    %v3365 = vsel %vm68, %v3325, 0
    %v3368 = vsel %vm68, %v3326, 0
    %v3371 = vsel %vm68, %v3327, 0
    %v3374 = vsel %vm68, %v3328, 0
    %v3377 = vsel %vm68, %v3329, 0
    %3379 = vmatprep.subr.bf16.mxu0 0
    %3380 = vmatpush1.bf16.msra.mxu0 0
    %3381 = vmatprep.subr.bf16.mxu0 0
    %3382 = vmatpush1.bf16.msra.mxu0 0
    %3383 = vmatprep.subr.bf16.mxu0 0
    %3384 = vmatpush1.bf16.msra.mxu0 0
    %3385 = vmatprep.subr.bf16.mxu0 0
    %3386 = vmatpush1.bf16.msra.mxu0 0
    %3387 = vmatprep.subr.bf16.mxu0 0
    %3388 = vmatpush1.bf16.msra.mxu0 0
    %3389 = vmatprep.subr.bf16.mxu0 0
    %3390 = vmatpush1.bf16.msra.mxu0 %v3351
    %3391 = vmatprep.subr.bf16.mxu0 0
    %3392 = vmatpush1.bf16.msra.mxu0 %v3350
    %3393 = vmatprep.subr.bf16.mxu0 0
    %3394 = vmatpush1.bf16.msra.mxu0 %v3349
    %3395 = vmatprep.subr.bf16.mxu0 0
    %3396 = vmatpush2.bf16.msra.mxu0 0
    %3397 = vmatprep.subr.bf16.mxu0 0
    %3398 = vmatpush2.bf16.msra.mxu0 0
    %3399 = vmatprep.subr.bf16.mxu0 0
    %3400 = vmatpush2.bf16.msra.mxu0 0
    %3401 = vmatprep.subr.bf16.mxu0 0
    %3402 = vmatpush2.bf16.msra.mxu0 0
    %3403 = vmatprep.subr.bf16.mxu0 0
    %3404 = vmatpush2.bf16.msra.mxu0 0
    %3405 = vmatprep.subr.bf16.mxu0 0
    %3406 = vmatpush2.bf16.msra.mxu0 0
    %3407 = vmatprep.subr.bf16.mxu0 0
    %3408 = vmatpush2.bf16.msra.mxu0 0
    %3409 = vmatprep.subr.bf16.mxu0 0
    %3410 = vmatpush2.bf16.msra.mxu0 0
    %3411 = vmatprep.mubr.bf16.mxu0 0
    %3412 = vmatmul.mubr.bf16.gmra.mxu0 %v3356
    %v3413 = vpop.f32.mrf.mxu0
    %v3414 = vadd.f32 0.0, %v3413
    %v3415 = vpop.f32.mrf.mxu0
    %v3416 = vpop.f32.mrf.mxu0
    %v3417 = vadd.f32 0.0, %v3416
    %v3418 = vpop.f32.mrf.mxu0
    %3419 = vmatprep.mubr.bf16.mxu0 0
    %3420 = vmatmul.mubr.bf16.gmra.mxu0 %v3359
    %v3421 = vpop.f32.mrf.mxu0
    %v3422 = vadd.f32 0.0, %v3421
    %v3423 = vpop.f32.mrf.mxu0
    %v3424 = vpop.f32.mrf.mxu0
    %v3425 = vadd.f32 0.0, %v3424
    %v3426 = vpop.f32.mrf.mxu0
    %3427 = vmatprep.mubr.bf16.mxu0 0
    %3428 = vmatmul.mubr.bf16.gmra.mxu0 %v3362
    %v3429 = vpop.f32.mrf.mxu0
    %v3430 = vadd.f32 0.0, %v3429
    %v3431 = vpop.f32.mrf.mxu0
    %v3432 = vpop.f32.mrf.mxu0
    %v3433 = vadd.f32 0.0, %v3432
    %v3434 = vpop.f32.mrf.mxu0
    %3435 = vmatprep.mubr.bf16.mxu0 0
    %3436 = vmatmul.mubr.bf16.gmra.mxu0 %v3365
    %v3437 = vpop.f32.mrf.mxu0
    %v3438 = vadd.f32 0.0, %v3437
    %v3439 = vpop.f32.mrf.mxu0
    %v3440 = vpop.f32.mrf.mxu0
    %v3441 = vadd.f32 0.0, %v3440
    %v3442 = vpop.f32.mrf.mxu0
    %3443 = vmatprep.mubr.bf16.mxu0 0
    %3444 = vmatmul.mubr.bf16.gmra.mxu0 %v3368
    %v3445 = vpop.f32.mrf.mxu0
    %v3446 = vadd.f32 0.0, %v3445
    %v3447 = vpop.f32.mrf.mxu0
    %v3448 = vpop.f32.mrf.mxu0
    %v3449 = vadd.f32 0.0, %v3448
    %v3450 = vpop.f32.mrf.mxu0
    %3451 = vmatprep.mubr.bf16.mxu0 0
    %3452 = vmatmul.mubr.bf16.gmra.mxu0 %v3371
    %v3453 = vpop.f32.mrf.mxu0
    %v3454 = vadd.f32 0.0, %v3453
    %v3455 = vpop.f32.mrf.mxu0
    %v3456 = vpop.f32.mrf.mxu0
    %v3457 = vadd.f32 0.0, %v3456
    %v3458 = vpop.f32.mrf.mxu0
    %3459 = vmatprep.mubr.bf16.mxu0 0
    %3460 = vmatmul.mubr.bf16.gmra.mxu0 %v3374
    %v3461 = vpop.f32.mrf.mxu0
    %v3462 = vadd.f32 0.0, %v3461
    %v3463 = vpop.f32.mrf.mxu0
    %v3464 = vpop.f32.mrf.mxu0
    %v3465 = vadd.f32 0.0, %v3464
    %v3466 = vpop.f32.mrf.mxu0
    %3467 = vmatprep.mubr.bf16.mxu0 0
    %3468 = vmatmul.mubr.bf16.gmra.mxu0 %v3377
    %v3469 = vpop.f32.mrf.mxu0
    %v3470 = vadd.f32 0.0, %v3469
    %v3471 = vpop.f32.mrf.mxu0
    %v3472 = vpop.f32.mrf.mxu0
    %v3473 = vadd.f32 0.0, %v3472
    %v3474 = vpop.f32.mrf.mxu0
    %3475 = vdwg.mxu0
    %v3476 = vadd.f32 %v3274, %v3414
    %v3477 = vadd.f32 %v3275, %v3417
    %v3478 = vadd.f32 %v3276, %v3422
    %v3479 = vadd.f32 %v3277, %v3425
    %v3480 = vadd.f32 %v3278, %v3430
    %v3481 = vadd.f32 %v3279, %v3433
    %v3482 = vadd.f32 %v3280, %v3438
    %v3483 = vadd.f32 %v3281, %v3441
    %v3484 = vadd.f32 %v3282, %v3446
    %v3485 = vadd.f32 %v3283, %v3449
    %v3486 = vadd.f32 %v3284, %v3454
    %v3487 = vadd.f32 %v3285, %v3457
    %v3488 = vadd.f32 %v3286, %v3462
    %v3489 = vadd.f32 %v3287, %v3465
    %v3490 = vadd.f32 %v3288, %v3470
    %v3491 = vadd.f32 %v3289, %v3473
    %v3492 = vld [vmem:[#allocation2 + $0x17] sm:$0xff]
    %v3493 = vld [vmem:[#allocation2 + $0x1f] sm:$0xff]
    %v3494 = vld [vmem:[#allocation2 + $0x27] sm:$0xff]
    %v3495 = vld [vmem:[#allocation2 + $0x2f] sm:$0xff]
    %v3496 = vld [vmem:[#allocation2 + $0x37] sm:$0xff]
    %v3497 = vld [vmem:[#allocation2 + $0x3f] sm:$0xff]
    %v3498 = vld [vmem:[#allocation2 + $0x47] sm:$0xff]
    %v3499 = vld [vmem:[#allocation2 + $0x4f] sm:$0xff]
    %v3500 = vld [vmem:[#allocation2 + $0x57] sm:$0xff]
    %v3501 = vld [vmem:[#allocation2 + $0x5f] sm:$0xff]
    %v3502 = vld [vmem:[#allocation2 + $0x67] sm:$0xff]
    %v3503 = vld [vmem:[#allocation2 + $0x6f] sm:$0xff]
    %v3504 = vld [vmem:[#allocation2 + $0x77] sm:$0xff]
    %v3505 = vld [vmem:[#allocation2 + $0x7f] sm:$0xff]
    %v3506 = vld [vmem:[#allocation2 + $0x87] sm:$0xff]
    %v3507 = vld [vmem:[#allocation2 + $0x8f] sm:$0xff]
    %v3508 = vsel %vm1633, %v3492, 0.0
    %v3509 = vsel %vm1634, %v3493, 0.0
    %v3510 = vsel %vm1635, %v3494, 0.0
    %v3511 = vsel %vm1636, %v3495, 0.0
    %v3512 = vsel %vm1637, %v3496, 0.0
    %v3513 = vsel %vm1638, %v3497, 0.0
    %v3514 = vsel %vm1639, %v3498, 0.0
    %v3515 = vsel %vm1640, %v3499, 0.0
    %v3516 = vsel %vm1641, %v3500, 0.0
    %v3517 = vsel %vm1642, %v3501, 0.0
    %v3518 = vsel %vm1643, %v3502, 0.0
    %v3519 = vsel %vm1644, %v3503, 0.0
    %v3520 = vsel %vm1645, %v3504, 0.0
    %v3521 = vsel %vm1646, %v3505, 0.0
    %v3522 = vsel %vm1647, %v3506, 0.0
    %v3523 = vsel %vm1648, %v3507, 0.0
    %v3524 = vpack.c.bf16 %v3509, %v3508
    %v3525 = vpack.c.bf16 %v3511, %v3510
    %v3526 = vpack.c.bf16 %v3513, %v3512
    %v3527 = vpack.c.bf16 %v3515, %v3514
    %v3528 = vpack.c.bf16 %v3517, %v3516
    %v3529 = vpack.c.bf16 %v3519, %v3518
    %v3530 = vpack.c.bf16 %v3521, %v3520
    %v3531 = vpack.c.bf16 %v3523, %v3522
    %s3532 = scalar_lea.vmem [#allocation5], 144
    %v3533 = vld [vmem:[%s3532] sm:$0xf]
    %v3534 = vld [vmem:[%s3532 + $0x4] sm:$0xf]
    %v3535 = vld [vmem:[%s3532 + $0x8] sm:$0xf]
    %v3536 = vld [vmem:[%s3532 + $0xc] sm:$0xf]
    %v3537 = vld [vmem:[%s3532 + $0x10] sm:$0xf]
    %v3538 = vld [vmem:[%s3532 + $0x14] sm:$0xf]
    %v3545 = vunpack.c.l.b16 %v3533
    %v3546 = vunpack.c.l.b16 %v3534
    %v3547 = vunpack.c.l.b16 %v3535
    %v3548 = vunpack.c.l.b16 %v3536
    %v3549 = vunpack.c.l.b16 %v3537
    %v3550 = vunpack.c.l.b16 %v3538
    %v3551 = vpack.c.b16 %v3546, %v3545
    %v3552 = vpack.c.b16 %v3548, %v3547
    %v3553 = vpack.c.b16 %v3550, %v3549
    %v3558 = vsel %vm68, %v3524, 0
    %v3561 = vsel %vm68, %v3525, 0
    %v3564 = vsel %vm68, %v3526, 0
    %v3567 = vsel %vm68, %v3527, 0
    %v3570 = vsel %vm68, %v3528, 0
    %v3573 = vsel %vm68, %v3529, 0
    %v3576 = vsel %vm68, %v3530, 0
    %v3579 = vsel %vm68, %v3531, 0
    %3581 = vmatprep.subr.bf16.mxu0 0
    %3582 = vmatpush1.bf16.msra.mxu0 0
    %3583 = vmatprep.subr.bf16.mxu0 0
    %3584 = vmatpush1.bf16.msra.mxu0 0
    %3585 = vmatprep.subr.bf16.mxu0 0
    %3586 = vmatpush1.bf16.msra.mxu0 0
    %3587 = vmatprep.subr.bf16.mxu0 0
    %3588 = vmatpush1.bf16.msra.mxu0 0
    %3589 = vmatprep.subr.bf16.mxu0 0
    %3590 = vmatpush1.bf16.msra.mxu0 0
    %3591 = vmatprep.subr.bf16.mxu0 0
    %3592 = vmatpush1.bf16.msra.mxu0 %v3553
    %3593 = vmatprep.subr.bf16.mxu0 0
    %3594 = vmatpush1.bf16.msra.mxu0 %v3552
    %3595 = vmatprep.subr.bf16.mxu0 0
    %3596 = vmatpush1.bf16.msra.mxu0 %v3551
    %3597 = vmatprep.subr.bf16.mxu0 0
    %3598 = vmatpush2.bf16.msra.mxu0 0
    %3599 = vmatprep.subr.bf16.mxu0 0
    %3600 = vmatpush2.bf16.msra.mxu0 0
    %3601 = vmatprep.subr.bf16.mxu0 0
    %3602 = vmatpush2.bf16.msra.mxu0 0
    %3603 = vmatprep.subr.bf16.mxu0 0
    %3604 = vmatpush2.bf16.msra.mxu0 0
    %3605 = vmatprep.subr.bf16.mxu0 0
    %3606 = vmatpush2.bf16.msra.mxu0 0
    %3607 = vmatprep.subr.bf16.mxu0 0
    %3608 = vmatpush2.bf16.msra.mxu0 0
    %3609 = vmatprep.subr.bf16.mxu0 0
    %3610 = vmatpush2.bf16.msra.mxu0 0
    %3611 = vmatprep.subr.bf16.mxu0 0
    %3612 = vmatpush2.bf16.msra.mxu0 0
    %3613 = vmatprep.mubr.bf16.mxu0 0
    %3614 = vmatmul.mubr.bf16.gmra.mxu0 %v3558
    %v3615 = vpop.f32.mrf.mxu0
    %v3616 = vadd.f32 0.0, %v3615
    %v3617 = vpop.f32.mrf.mxu0
    %v3618 = vpop.f32.mrf.mxu0
    %v3619 = vadd.f32 0.0, %v3618
    %v3620 = vpop.f32.mrf.mxu0
    %3621 = vmatprep.mubr.bf16.mxu0 0
    %3622 = vmatmul.mubr.bf16.gmra.mxu0 %v3561
    %v3623 = vpop.f32.mrf.mxu0
    %v3624 = vadd.f32 0.0, %v3623
    %v3625 = vpop.f32.mrf.mxu0
    %v3626 = vpop.f32.mrf.mxu0
    %v3627 = vadd.f32 0.0, %v3626
    %v3628 = vpop.f32.mrf.mxu0
    %3629 = vmatprep.mubr.bf16.mxu0 0
    %3630 = vmatmul.mubr.bf16.gmra.mxu0 %v3564
    %v3631 = vpop.f32.mrf.mxu0
    %v3632 = vadd.f32 0.0, %v3631
    %v3633 = vpop.f32.mrf.mxu0
    %v3634 = vpop.f32.mrf.mxu0
    %v3635 = vadd.f32 0.0, %v3634
    %v3636 = vpop.f32.mrf.mxu0
    %3637 = vmatprep.mubr.bf16.mxu0 0
    %3638 = vmatmul.mubr.bf16.gmra.mxu0 %v3567
    %v3639 = vpop.f32.mrf.mxu0
    %v3640 = vadd.f32 0.0, %v3639
    %v3641 = vpop.f32.mrf.mxu0
    %v3642 = vpop.f32.mrf.mxu0
    %v3643 = vadd.f32 0.0, %v3642
    %v3644 = vpop.f32.mrf.mxu0
    %3645 = vmatprep.mubr.bf16.mxu0 0
    %3646 = vmatmul.mubr.bf16.gmra.mxu0 %v3570
    %v3647 = vpop.f32.mrf.mxu0
    %v3648 = vadd.f32 0.0, %v3647
    %v3649 = vpop.f32.mrf.mxu0
    %v3650 = vpop.f32.mrf.mxu0
    %v3651 = vadd.f32 0.0, %v3650
    %v3652 = vpop.f32.mrf.mxu0
    %3653 = vmatprep.mubr.bf16.mxu0 0
    %3654 = vmatmul.mubr.bf16.gmra.mxu0 %v3573
    %v3655 = vpop.f32.mrf.mxu0
    %v3656 = vadd.f32 0.0, %v3655
    %v3657 = vpop.f32.mrf.mxu0
    %v3658 = vpop.f32.mrf.mxu0
    %v3659 = vadd.f32 0.0, %v3658
    %v3660 = vpop.f32.mrf.mxu0
    %3661 = vmatprep.mubr.bf16.mxu0 0
    %3662 = vmatmul.mubr.bf16.gmra.mxu0 %v3576
    %v3663 = vpop.f32.mrf.mxu0
    %v3664 = vadd.f32 0.0, %v3663
    %v3665 = vpop.f32.mrf.mxu0
    %v3666 = vpop.f32.mrf.mxu0
    %v3667 = vadd.f32 0.0, %v3666
    %v3668 = vpop.f32.mrf.mxu0
    %3669 = vmatprep.mubr.bf16.mxu0 0
    %3670 = vmatmul.mubr.bf16.gmra.mxu0 %v3579
    %v3671 = vpop.f32.mrf.mxu0
    %v3672 = vadd.f32 0.0, %v3671
    %v3673 = vpop.f32.mrf.mxu0
    %v3674 = vpop.f32.mrf.mxu0
    %v3675 = vadd.f32 0.0, %v3674
    %v3676 = vpop.f32.mrf.mxu0
    %3677 = vdwg.mxu0
    %v3678 = vadd.f32 %v3476, %v3616
    %v3679 = vadd.f32 %v3477, %v3619
    %v3680 = vadd.f32 %v3478, %v3624
    %v3681 = vadd.f32 %v3479, %v3627
    %v3682 = vadd.f32 %v3480, %v3632
    %v3683 = vadd.f32 %v3481, %v3635
    %v3684 = vadd.f32 %v3482, %v3640
    %v3685 = vadd.f32 %v3483, %v3643
    %v3686 = vadd.f32 %v3484, %v3648
    %v3687 = vadd.f32 %v3485, %v3651
    %v3688 = vadd.f32 %v3486, %v3656
    %v3689 = vadd.f32 %v3487, %v3659
    %v3690 = vadd.f32 %v3488, %v3664
    %v3691 = vadd.f32 %v3489, %v3667
    %v3692 = vadd.f32 %v3490, %v3672
    %v3693 = vadd.f32 %v3491, %v3675
    %v3694 = vld [vmem:[#allocation2 + $0x18] sm:$0xff]
    %v3695 = vld [vmem:[#allocation2 + $0x20] sm:$0xff]
    %v3696 = vld [vmem:[#allocation2 + $0x28] sm:$0xff]
    %v3697 = vld [vmem:[#allocation2 + $0x30] sm:$0xff]
    %v3698 = vld [vmem:[#allocation2 + $0x38] sm:$0xff]
    %v3699 = vld [vmem:[#allocation2 + $0x40] sm:$0xff]
    %v3700 = vld [vmem:[#allocation2 + $0x48] sm:$0xff]
    %v3701 = vld [vmem:[#allocation2 + $0x50] sm:$0xff]
    %v3702 = vld [vmem:[#allocation2 + $0x58] sm:$0xff]
    %v3703 = vld [vmem:[#allocation2 + $0x60] sm:$0xff]
    %v3704 = vld [vmem:[#allocation2 + $0x68] sm:$0xff]
    %v3705 = vld [vmem:[#allocation2 + $0x70] sm:$0xff]
    %v3706 = vld [vmem:[#allocation2 + $0x78] sm:$0xff]
    %v3707 = vld [vmem:[#allocation2 + $0x80] sm:$0xff]
    %v3708 = vld [vmem:[#allocation2 + $0x88] sm:$0xff]
    %v3709 = vld [vmem:[#allocation2 + $0x90] sm:$0xff]
    %v3710 = vsel %vm374, %v3694, 0.0
    %v3711 = vsel %vm375, %v3695, 0.0
    %v3712 = vsel %vm376, %v3696, 0.0
    %v3713 = vsel %vm377, %v3697, 0.0
    %v3714 = vsel %vm378, %v3698, 0.0
    %v3715 = vsel %vm379, %v3699, 0.0
    %v3716 = vsel %vm380, %v3700, 0.0
    %v3717 = vsel %vm381, %v3701, 0.0
    %v3718 = vsel %vm382, %v3702, 0.0
    %v3719 = vsel %vm383, %v3703, 0.0
    %v3720 = vsel %vm384, %v3704, 0.0
    %v3721 = vsel %vm385, %v3705, 0.0
    %v3722 = vsel %vm386, %v3706, 0.0
    %v3723 = vsel %vm387, %v3707, 0.0
    %v3724 = vsel %vm388, %v3708, 0.0
    %v3725 = vsel %vm389, %v3709, 0.0
    %v3726 = vpack.c.bf16 %v3711, %v3710
    %v3727 = vpack.c.bf16 %v3713, %v3712
    %v3728 = vpack.c.bf16 %v3715, %v3714
    %v3729 = vpack.c.bf16 %v3717, %v3716
    %v3730 = vpack.c.bf16 %v3719, %v3718
    %v3731 = vpack.c.bf16 %v3721, %v3720
    %v3732 = vpack.c.bf16 %v3723, %v3722
    %v3733 = vpack.c.bf16 %v3725, %v3724
    %s3734 = scalar_lea.vmem [#allocation5], 168
    %v3735 = vld [vmem:[%s3734] sm:$0xf]
    %v3736 = vld [vmem:[%s3734 + $0x4] sm:$0xf]
    %v3737 = vld [vmem:[%s3734 + $0x8] sm:$0xf]
    %v3738 = vld [vmem:[%s3734 + $0xc] sm:$0xf]
    %v3739 = vld [vmem:[%s3734 + $0x10] sm:$0xf]
    %v3740 = vld [vmem:[%s3734 + $0x14] sm:$0xf]
    %v3747 = vunpack.c.l.b16 %v3735
    %v3748 = vunpack.c.l.b16 %v3736
    %v3749 = vunpack.c.l.b16 %v3737
    %v3750 = vunpack.c.l.b16 %v3738
    %v3751 = vunpack.c.l.b16 %v3739
    %v3752 = vunpack.c.l.b16 %v3740
    %v3753 = vpack.c.b16 %v3748, %v3747
    %v3754 = vpack.c.b16 %v3750, %v3749
    %v3755 = vpack.c.b16 %v3752, %v3751
    %v3760 = vsel %vm68, %v3726, 0
    %v3763 = vsel %vm68, %v3727, 0
    %v3766 = vsel %vm68, %v3728, 0
    %v3769 = vsel %vm68, %v3729, 0
    %v3772 = vsel %vm68, %v3730, 0
    %v3775 = vsel %vm68, %v3731, 0
    %v3778 = vsel %vm68, %v3732, 0
    %v3781 = vsel %vm68, %v3733, 0
    %3783 = vmatprep.subr.bf16.mxu0 0
    %3784 = vmatpush1.bf16.msra.mxu0 0
    %3785 = vmatprep.subr.bf16.mxu0 0
    %3786 = vmatpush1.bf16.msra.mxu0 0
    %3787 = vmatprep.subr.bf16.mxu0 0
    %3788 = vmatpush1.bf16.msra.mxu0 0
    %3789 = vmatprep.subr.bf16.mxu0 0
    %3790 = vmatpush1.bf16.msra.mxu0 0
    %3791 = vmatprep.subr.bf16.mxu0 0
    %3792 = vmatpush1.bf16.msra.mxu0 0
    %3793 = vmatprep.subr.bf16.mxu0 0
    %3794 = vmatpush1.bf16.msra.mxu0 %v3755
    %3795 = vmatprep.subr.bf16.mxu0 0
    %3796 = vmatpush1.bf16.msra.mxu0 %v3754
    %3797 = vmatprep.subr.bf16.mxu0 0
    %3798 = vmatpush1.bf16.msra.mxu0 %v3753
    %3799 = vmatprep.subr.bf16.mxu0 0
    %3800 = vmatpush2.bf16.msra.mxu0 0
    %3801 = vmatprep.subr.bf16.mxu0 0
    %3802 = vmatpush2.bf16.msra.mxu0 0
    %3803 = vmatprep.subr.bf16.mxu0 0
    %3804 = vmatpush2.bf16.msra.mxu0 0
    %3805 = vmatprep.subr.bf16.mxu0 0
    %3806 = vmatpush2.bf16.msra.mxu0 0
    %3807 = vmatprep.subr.bf16.mxu0 0
    %3808 = vmatpush2.bf16.msra.mxu0 0
    %3809 = vmatprep.subr.bf16.mxu0 0
    %3810 = vmatpush2.bf16.msra.mxu0 0
    %3811 = vmatprep.subr.bf16.mxu0 0
    %3812 = vmatpush2.bf16.msra.mxu0 0
    %3813 = vmatprep.subr.bf16.mxu0 0
    %3814 = vmatpush2.bf16.msra.mxu0 0
    %3815 = vmatprep.mubr.bf16.mxu0 0
    %3816 = vmatmul.mubr.bf16.gmra.mxu0 %v3760
    %v3817 = vpop.f32.mrf.mxu0
    %v3818 = vadd.f32 0.0, %v3817
    %v3819 = vpop.f32.mrf.mxu0
    %v3820 = vpop.f32.mrf.mxu0
    %v3821 = vadd.f32 0.0, %v3820
    %v3822 = vpop.f32.mrf.mxu0
    %3823 = vmatprep.mubr.bf16.mxu0 0
    %3824 = vmatmul.mubr.bf16.gmra.mxu0 %v3763
    %v3825 = vpop.f32.mrf.mxu0
    %v3826 = vadd.f32 0.0, %v3825
    %v3827 = vpop.f32.mrf.mxu0
    %v3828 = vpop.f32.mrf.mxu0
    %v3829 = vadd.f32 0.0, %v3828
    %v3830 = vpop.f32.mrf.mxu0
    %3831 = vmatprep.mubr.bf16.mxu0 0
    %3832 = vmatmul.mubr.bf16.gmra.mxu0 %v3766
    %v3833 = vpop.f32.mrf.mxu0
    %v3834 = vadd.f32 0.0, %v3833
    %v3835 = vpop.f32.mrf.mxu0
    %v3836 = vpop.f32.mrf.mxu0
    %v3837 = vadd.f32 0.0, %v3836
    %v3838 = vpop.f32.mrf.mxu0
    %3839 = vmatprep.mubr.bf16.mxu0 0
    %3840 = vmatmul.mubr.bf16.gmra.mxu0 %v3769
    %v3841 = vpop.f32.mrf.mxu0
    %v3842 = vadd.f32 0.0, %v3841
    %v3843 = vpop.f32.mrf.mxu0
    %v3844 = vpop.f32.mrf.mxu0
    %v3845 = vadd.f32 0.0, %v3844
    %v3846 = vpop.f32.mrf.mxu0
    %3847 = vmatprep.mubr.bf16.mxu0 0
    %3848 = vmatmul.mubr.bf16.gmra.mxu0 %v3772
    %v3849 = vpop.f32.mrf.mxu0
    %v3850 = vadd.f32 0.0, %v3849
    %v3851 = vpop.f32.mrf.mxu0
    %v3852 = vpop.f32.mrf.mxu0
    %v3853 = vadd.f32 0.0, %v3852
    %v3854 = vpop.f32.mrf.mxu0
    %3855 = vmatprep.mubr.bf16.mxu0 0
    %3856 = vmatmul.mubr.bf16.gmra.mxu0 %v3775
    %v3857 = vpop.f32.mrf.mxu0
    %v3858 = vadd.f32 0.0, %v3857
    %v3859 = vpop.f32.mrf.mxu0
    %v3860 = vpop.f32.mrf.mxu0
    %v3861 = vadd.f32 0.0, %v3860
    %v3862 = vpop.f32.mrf.mxu0
    %3863 = vmatprep.mubr.bf16.mxu0 0
    %3864 = vmatmul.mubr.bf16.gmra.mxu0 %v3778
    %v3865 = vpop.f32.mrf.mxu0
    %v3866 = vadd.f32 0.0, %v3865
    %v3867 = vpop.f32.mrf.mxu0
    %v3868 = vpop.f32.mrf.mxu0
    %v3869 = vadd.f32 0.0, %v3868
    %v3870 = vpop.f32.mrf.mxu0
    %3871 = vmatprep.mubr.bf16.mxu0 0
    %3872 = vmatmul.mubr.bf16.gmra.mxu0 %v3781
    %v3873 = vpop.f32.mrf.mxu0
    %v3874 = vadd.f32 0.0, %v3873
    %v3875 = vpop.f32.mrf.mxu0
    %v3876 = vpop.f32.mrf.mxu0
    %v3877 = vadd.f32 0.0, %v3876
    %v3878 = vpop.f32.mrf.mxu0
    %3879 = vdwg.mxu0
    %v3880 = vadd.f32 %v3678, %v3818
    %v3881 = vadd.f32 %v3679, %v3821
    %v3882 = vadd.f32 %v3680, %v3826
    %v3883 = vadd.f32 %v3681, %v3829
    %v3884 = vadd.f32 %v3682, %v3834
    %v3885 = vadd.f32 %v3683, %v3837
    %v3886 = vadd.f32 %v3684, %v3842
    %v3887 = vadd.f32 %v3685, %v3845
    %v3888 = vadd.f32 %v3686, %v3850
    %v3889 = vadd.f32 %v3687, %v3853
    %v3890 = vadd.f32 %v3688, %v3858
    %v3891 = vadd.f32 %v3689, %v3861
    %v3892 = vadd.f32 %v3690, %v3866
    %v3893 = vadd.f32 %v3691, %v3869
    %v3894 = vadd.f32 %v3692, %v3874
    %v3895 = vadd.f32 %v3693, %v3877
    %v3896 = vld [vmem:[#allocation2 + $0x19] sm:$0xff]
    %v3897 = vld [vmem:[#allocation2 + $0x21] sm:$0xff]
    %v3898 = vld [vmem:[#allocation2 + $0x29] sm:$0xff]
    %v3899 = vld [vmem:[#allocation2 + $0x31] sm:$0xff]
    %v3900 = vld [vmem:[#allocation2 + $0x39] sm:$0xff]
    %v3901 = vld [vmem:[#allocation2 + $0x41] sm:$0xff]
    %v3902 = vld [vmem:[#allocation2 + $0x49] sm:$0xff]
    %v3903 = vld [vmem:[#allocation2 + $0x51] sm:$0xff]
    %v3904 = vld [vmem:[#allocation2 + $0x59] sm:$0xff]
    %v3905 = vld [vmem:[#allocation2 + $0x61] sm:$0xff]
    %v3906 = vld [vmem:[#allocation2 + $0x69] sm:$0xff]
    %v3907 = vld [vmem:[#allocation2 + $0x71] sm:$0xff]
    %v3908 = vld [vmem:[#allocation2 + $0x79] sm:$0xff]
    %v3909 = vld [vmem:[#allocation2 + $0x81] sm:$0xff]
    %v3910 = vld [vmem:[#allocation2 + $0x89] sm:$0xff]
    %v3911 = vld [vmem:[#allocation2 + $0x91] sm:$0xff]
    %v3912 = vsel %vm2053, %v3896, 0.0
    %v3913 = vsel %vm2054, %v3897, 0.0
    %v3914 = vsel %vm2055, %v3898, 0.0
    %v3915 = vsel %vm2056, %v3899, 0.0
    %v3916 = vsel %vm2057, %v3900, 0.0
    %v3917 = vsel %vm2058, %v3901, 0.0
    %v3918 = vsel %vm2059, %v3902, 0.0
    %v3919 = vsel %vm2060, %v3903, 0.0
    %v3920 = vsel %vm2061, %v3904, 0.0
    %v3921 = vsel %vm2062, %v3905, 0.0
    %v3922 = vsel %vm2063, %v3906, 0.0
    %v3923 = vsel %vm2064, %v3907, 0.0
    %v3924 = vsel %vm2065, %v3908, 0.0
    %v3925 = vsel %vm2066, %v3909, 0.0
    %v3926 = vsel %vm2067, %v3910, 0.0
    %v3927 = vsel %vm2068, %v3911, 0.0
    %v3928 = vpack.c.bf16 %v3913, %v3912
    %v3929 = vpack.c.bf16 %v3915, %v3914
    %v3930 = vpack.c.bf16 %v3917, %v3916
    %v3931 = vpack.c.bf16 %v3919, %v3918
    %v3932 = vpack.c.bf16 %v3921, %v3920
    %v3933 = vpack.c.bf16 %v3923, %v3922
    %v3934 = vpack.c.bf16 %v3925, %v3924
    %v3935 = vpack.c.bf16 %v3927, %v3926
    %s3936 = scalar_lea.vmem [#allocation5], 192
    %v3937 = vld [vmem:[%s3936] sm:$0xf]
    %v3938 = vld [vmem:[%s3936 + $0x4] sm:$0xf]
    %v3939 = vld [vmem:[%s3936 + $0x8] sm:$0xf]
    %v3940 = vld [vmem:[%s3936 + $0xc] sm:$0xf]
    %v3941 = vld [vmem:[%s3936 + $0x10] sm:$0xf]
    %v3942 = vld [vmem:[%s3936 + $0x14] sm:$0xf]
    %v3949 = vunpack.c.l.b16 %v3937
    %v3950 = vunpack.c.l.b16 %v3938
    %v3951 = vunpack.c.l.b16 %v3939
    %v3952 = vunpack.c.l.b16 %v3940
    %v3953 = vunpack.c.l.b16 %v3941
    %v3954 = vunpack.c.l.b16 %v3942
    %v3955 = vpack.c.b16 %v3950, %v3949
    %v3956 = vpack.c.b16 %v3952, %v3951
    %v3957 = vpack.c.b16 %v3954, %v3953
    %v3962 = vsel %vm68, %v3928, 0
    %v3965 = vsel %vm68, %v3929, 0
    %v3968 = vsel %vm68, %v3930, 0
    %v3971 = vsel %vm68, %v3931, 0
    %v3974 = vsel %vm68, %v3932, 0
    %v3977 = vsel %vm68, %v3933, 0
    %v3980 = vsel %vm68, %v3934, 0
    %v3983 = vsel %vm68, %v3935, 0
    %3985 = vmatprep.subr.bf16.mxu0 0
    %3986 = vmatpush1.bf16.msra.mxu0 0
    %3987 = vmatprep.subr.bf16.mxu0 0
    %3988 = vmatpush1.bf16.msra.mxu0 0
    %3989 = vmatprep.subr.bf16.mxu0 0
    %3990 = vmatpush1.bf16.msra.mxu0 0
    %3991 = vmatprep.subr.bf16.mxu0 0
    %3992 = vmatpush1.bf16.msra.mxu0 0
    %3993 = vmatprep.subr.bf16.mxu0 0
    %3994 = vmatpush1.bf16.msra.mxu0 0
    %3995 = vmatprep.subr.bf16.mxu0 0
    %3996 = vmatpush1.bf16.msra.mxu0 %v3957
    %3997 = vmatprep.subr.bf16.mxu0 0
    %3998 = vmatpush1.bf16.msra.mxu0 %v3956
    %3999 = vmatprep.subr.bf16.mxu0 0
    %4000 = vmatpush1.bf16.msra.mxu0 %v3955
    %4001 = vmatprep.subr.bf16.mxu0 0
    %4002 = vmatpush2.bf16.msra.mxu0 0
    %4003 = vmatprep.subr.bf16.mxu0 0
    %4004 = vmatpush2.bf16.msra.mxu0 0
    %4005 = vmatprep.subr.bf16.mxu0 0
    %4006 = vmatpush2.bf16.msra.mxu0 0
    %4007 = vmatprep.subr.bf16.mxu0 0
    %4008 = vmatpush2.bf16.msra.mxu0 0
    %4009 = vmatprep.subr.bf16.mxu0 0
    %4010 = vmatpush2.bf16.msra.mxu0 0
    %4011 = vmatprep.subr.bf16.mxu0 0
    %4012 = vmatpush2.bf16.msra.mxu0 0
    %4013 = vmatprep.subr.bf16.mxu0 0
    %4014 = vmatpush2.bf16.msra.mxu0 0
    %4015 = vmatprep.subr.bf16.mxu0 0
    %4016 = vmatpush2.bf16.msra.mxu0 0
    %4017 = vmatprep.mubr.bf16.mxu0 0
    %4018 = vmatmul.mubr.bf16.gmra.mxu0 %v3962
    %v4019 = vpop.f32.mrf.mxu0
    %v4020 = vadd.f32 0.0, %v4019
    %v4021 = vpop.f32.mrf.mxu0
    %v4022 = vpop.f32.mrf.mxu0
    %v4023 = vadd.f32 0.0, %v4022
    %v4024 = vpop.f32.mrf.mxu0
    %4025 = vmatprep.mubr.bf16.mxu0 0
    %4026 = vmatmul.mubr.bf16.gmra.mxu0 %v3965
    %v4027 = vpop.f32.mrf.mxu0
    %v4028 = vadd.f32 0.0, %v4027
    %v4029 = vpop.f32.mrf.mxu0
    %v4030 = vpop.f32.mrf.mxu0
    %v4031 = vadd.f32 0.0, %v4030
    %v4032 = vpop.f32.mrf.mxu0
    %4033 = vmatprep.mubr.bf16.mxu0 0
    %4034 = vmatmul.mubr.bf16.gmra.mxu0 %v3968
    %v4035 = vpop.f32.mrf.mxu0
    %v4036 = vadd.f32 0.0, %v4035
    %v4037 = vpop.f32.mrf.mxu0
    %v4038 = vpop.f32.mrf.mxu0
    %v4039 = vadd.f32 0.0, %v4038
    %v4040 = vpop.f32.mrf.mxu0
    %4041 = vmatprep.mubr.bf16.mxu0 0
    %4042 = vmatmul.mubr.bf16.gmra.mxu0 %v3971
    %v4043 = vpop.f32.mrf.mxu0
    %v4044 = vadd.f32 0.0, %v4043
    %v4045 = vpop.f32.mrf.mxu0
    %v4046 = vpop.f32.mrf.mxu0
    %v4047 = vadd.f32 0.0, %v4046
    %v4048 = vpop.f32.mrf.mxu0
    %4049 = vmatprep.mubr.bf16.mxu0 0
    %4050 = vmatmul.mubr.bf16.gmra.mxu0 %v3974
    %v4051 = vpop.f32.mrf.mxu0
    %v4052 = vadd.f32 0.0, %v4051
    %v4053 = vpop.f32.mrf.mxu0
    %v4054 = vpop.f32.mrf.mxu0
    %v4055 = vadd.f32 0.0, %v4054
    %v4056 = vpop.f32.mrf.mxu0
    %4057 = vmatprep.mubr.bf16.mxu0 0
    %4058 = vmatmul.mubr.bf16.gmra.mxu0 %v3977
    %v4059 = vpop.f32.mrf.mxu0
    %v4060 = vadd.f32 0.0, %v4059
    %v4061 = vpop.f32.mrf.mxu0
    %v4062 = vpop.f32.mrf.mxu0
    %v4063 = vadd.f32 0.0, %v4062
    %v4064 = vpop.f32.mrf.mxu0
    %4065 = vmatprep.mubr.bf16.mxu0 0
    %4066 = vmatmul.mubr.bf16.gmra.mxu0 %v3980
    %v4067 = vpop.f32.mrf.mxu0
    %v4068 = vadd.f32 0.0, %v4067
    %v4069 = vpop.f32.mrf.mxu0
    %v4070 = vpop.f32.mrf.mxu0
    %v4071 = vadd.f32 0.0, %v4070
    %v4072 = vpop.f32.mrf.mxu0
    %4073 = vmatprep.mubr.bf16.mxu0 0
    %4074 = vmatmul.mubr.bf16.gmra.mxu0 %v3983
    %v4075 = vpop.f32.mrf.mxu0
    %v4076 = vadd.f32 0.0, %v4075
    %v4077 = vpop.f32.mrf.mxu0
    %v4078 = vpop.f32.mrf.mxu0
    %v4079 = vadd.f32 0.0, %v4078
    %v4080 = vpop.f32.mrf.mxu0
    %4081 = vdwg.mxu0
    %v4082 = vadd.f32 %v3880, %v4020
    %v4083 = vadd.f32 %v3881, %v4023
    %v4084 = vadd.f32 %v3882, %v4028
    %v4085 = vadd.f32 %v3883, %v4031
    %v4086 = vadd.f32 %v3884, %v4036
    %v4087 = vadd.f32 %v3885, %v4039
    %v4088 = vadd.f32 %v3886, %v4044
    %v4089 = vadd.f32 %v3887, %v4047
    %v4090 = vadd.f32 %v3888, %v4052
    %v4091 = vadd.f32 %v3889, %v4055
    %v4092 = vadd.f32 %v3890, %v4060
    %v4093 = vadd.f32 %v3891, %v4063
    %v4094 = vadd.f32 %v3892, %v4068
    %v4095 = vadd.f32 %v3893, %v4071
    %v4096 = vadd.f32 %v3894, %v4076
    %v4097 = vadd.f32 %v3895, %v4079
    %v4098 = vld [vmem:[%s5 + $0x4] sm:$0x1]
    %v4099 = vlaneseq
    %v4100 = vshrl.u32 %v4099, 7
    %v4101 = vsub.s32 0, %v4100
    %v4102 = vrot.slane %v4098, %v4101
    %v4103 = vmul.f32 %v2239, %v4102
    %v4104 = vmul.f32 %v2240, %v4102
    %v4105 = vmul.f32 %v2241, %v4102
    %v4106 = vmul.f32 %v2242, %v4102
    %v4107 = vmul.f32 %v2243, %v4102
    %v4108 = vmul.f32 %v2244, %v4102
    %v4109 = vmul.f32 %v2245, %v4102
    %v4110 = vmul.f32 %v2246, %v4102
    %v4111 = vmul.f32 %v2247, %v4102
    %v4112 = vmul.f32 %v2248, %v4102
    %v4113 = vmul.f32 %v2249, %v4102
    %v4114 = vmul.f32 %v2250, %v4102
    %v4115 = vmul.f32 %v2251, %v4102
    %v4116 = vmul.f32 %v2252, %v4102
    %v4117 = vmul.f32 %v2253, %v4102
    %v4118 = vmul.f32 %v2254, %v4102
    %v4119 = vadd.f32 %v4103, %v4082
    %v4120 = vadd.f32 %v4104, %v4083
    %v4121 = vadd.f32 %v4105, %v4084
    %v4122 = vadd.f32 %v4106, %v4085
    %v4123 = vadd.f32 %v4107, %v4086
    %v4124 = vadd.f32 %v4108, %v4087
    %v4125 = vadd.f32 %v4109, %v4088
    %v4126 = vadd.f32 %v4110, %v4089
    %v4127 = vadd.f32 %v4111, %v4090
    %v4128 = vadd.f32 %v4112, %v4091
    %v4129 = vadd.f32 %v4113, %v4092
    %v4130 = vadd.f32 %v4114, %v4093
    %v4131 = vadd.f32 %v4115, %v4094
    %v4132 = vadd.f32 %v4116, %v4095
    %v4133 = vadd.f32 %v4117, %v4096
    %v4134 = vadd.f32 %v4118, %v4097
    %v4135 = vld [vmem:[%s5 + $0x5] sm:$0x1]
    %v4136 = vlaneseq
    %v4137 = vshrl.u32 %v4136, 7
    %v4138 = vsub.s32 0, %v4137
    %v4139 = vrot.slane %v4135, %v4138
    %v4140 = vmul.f32 %v4119, %v4139
    %v4141 = vmul.f32 %v4120, %v4139
    %v4142 = vmul.f32 %v4121, %v4139
    %v4143 = vmul.f32 %v4122, %v4139
    %v4144 = vmul.f32 %v4123, %v4139
    %v4145 = vmul.f32 %v4124, %v4139
    %v4146 = vmul.f32 %v4125, %v4139
    %v4147 = vmul.f32 %v4126, %v4139
    %v4148 = vmul.f32 %v4127, %v4139
    %v4149 = vmul.f32 %v4128, %v4139
    %v4150 = vmul.f32 %v4129, %v4139
    %v4151 = vmul.f32 %v4130, %v4139
    %v4152 = vmul.f32 %v4131, %v4139
    %v4153 = vmul.f32 %v4132, %v4139
    %v4154 = vmul.f32 %v4133, %v4139
    %v4155 = vmul.f32 %v4134, %v4139
    %v4156 = vld [vmem:[%s5 + $0x6] sm:$0x1]
    %v4157 = vlaneseq
    %v4158 = vshrl.u32 %v4157, 7
    %v4159 = vsub.s32 0, %v4158
    %v4160 = vrot.slane %v4156, %v4159
    %v4161 = vadd.f32 %v4140, %v4160
    %v4162 = vadd.f32 %v4141, %v4160
    %v4163 = vadd.f32 %v4142, %v4160
    %v4164 = vadd.f32 %v4143, %v4160
    %v4165 = vadd.f32 %v4144, %v4160
    %v4166 = vadd.f32 %v4145, %v4160
    %v4167 = vadd.f32 %v4146, %v4160
    %v4168 = vadd.f32 %v4147, %v4160
    %v4169 = vadd.f32 %v4148, %v4160
    %v4170 = vadd.f32 %v4149, %v4160
    %v4171 = vadd.f32 %v4150, %v4160
    %v4172 = vadd.f32 %v4151, %v4160
    %v4173 = vadd.f32 %v4152, %v4160
    %v4174 = vadd.f32 %v4153, %v4160
    %v4175 = vadd.f32 %v4154, %v4160
    %v4176 = vadd.f32 %v4155, %v4160
    %v4177 = vmax.f32 %v4161, 0.0
    %v4178 = vmax.f32 %v4162, 0.0
    %v4179 = vmax.f32 %v4163, 0.0
    %v4180 = vmax.f32 %v4164, 0.0
    %v4181 = vmax.f32 %v4165, 0.0
    %v4182 = vmax.f32 %v4166, 0.0
    %v4183 = vmax.f32 %v4167, 0.0
    %v4184 = vmax.f32 %v4168, 0.0
    %v4185 = vmax.f32 %v4169, 0.0
    %v4186 = vmax.f32 %v4170, 0.0
    %v4187 = vmax.f32 %v4171, 0.0
    %v4188 = vmax.f32 %v4172, 0.0
    %v4189 = vmax.f32 %v4173, 0.0
    %v4190 = vmax.f32 %v4174, 0.0
    %v4191 = vmax.f32 %v4175, 0.0
    %v4192 = vmax.f32 %v4176, 0.0
    %v4193 = vpack.c.bf16 %v4178, %v4177
    %v4194 = vpack.c.bf16 %v4180, %v4179
    %v4195 = vpack.c.bf16 %v4182, %v4181
    %v4196 = vpack.c.bf16 %v4184, %v4183
    %v4197 = vpack.c.bf16 %v4186, %v4185
    %v4198 = vpack.c.bf16 %v4188, %v4187
    %v4199 = vpack.c.bf16 %v4190, %v4189
    %v4200 = vpack.c.bf16 %v4192, %v4191
    %v4201 = vld [vmem:[%s4] sm:$0xf]
    %v4202 = vld [vmem:[%s4 + $0x4] sm:$0xf]
    %v4203 = vld [vmem:[%s4 + $0x8] sm:$0xf]
    %v4204 = vld [vmem:[%s4 + $0xc] sm:$0xf]
    %v4205 = vld [vmem:[%s4 + $0x10] sm:$0xf]
    %v4206 = vld [vmem:[%s4 + $0x14] sm:$0xf]
    %v4213 = vunpack.c.l.b16 %v4201
    %v4214 = vunpack.c.l.b16 %v4202
    %v4215 = vunpack.c.l.b16 %v4203
    %v4216 = vunpack.c.l.b16 %v4204
    %v4217 = vunpack.c.l.b16 %v4205
    %v4218 = vunpack.c.l.b16 %v4206
    %v4219 = vpack.c.b16 %v4214, %v4213
    %v4220 = vpack.c.b16 %v4216, %v4215
    %v4221 = vpack.c.b16 %v4218, %v4217
    %v4226 = vsel %vm68, %v4193, 0
    %v4229 = vsel %vm68, %v4194, 0
    %v4232 = vsel %vm68, %v4195, 0
    %v4235 = vsel %vm68, %v4196, 0
    %v4238 = vsel %vm68, %v4197, 0
    %v4241 = vsel %vm68, %v4198, 0
    %v4244 = vsel %vm68, %v4199, 0
    %v4247 = vsel %vm68, %v4200, 0
    %4249 = vmatprep.subr.bf16.mxu0 0
    %4250 = vmatpush1.bf16.msra.mxu0 0
    %4251 = vmatprep.subr.bf16.mxu0 0
    %4252 = vmatpush1.bf16.msra.mxu0 0
    %4253 = vmatprep.subr.bf16.mxu0 0
    %4254 = vmatpush1.bf16.msra.mxu0 0
    %4255 = vmatprep.subr.bf16.mxu0 0
    %4256 = vmatpush1.bf16.msra.mxu0 0
    %4257 = vmatprep.subr.bf16.mxu0 0
    %4258 = vmatpush1.bf16.msra.mxu0 0
    %4259 = vmatprep.subr.bf16.mxu0 0
    %4260 = vmatpush1.bf16.msra.mxu0 %v4221
    %4261 = vmatprep.subr.bf16.mxu0 0
    %4262 = vmatpush1.bf16.msra.mxu0 %v4220
    %4263 = vmatprep.subr.bf16.mxu0 0
    %4264 = vmatpush1.bf16.msra.mxu0 %v4219
    %4265 = vmatprep.subr.bf16.mxu0 0
    %4266 = vmatpush2.bf16.msra.mxu0 0
    %4267 = vmatprep.subr.bf16.mxu0 0
    %4268 = vmatpush2.bf16.msra.mxu0 0
    %4269 = vmatprep.subr.bf16.mxu0 0
    %4270 = vmatpush2.bf16.msra.mxu0 0
    %4271 = vmatprep.subr.bf16.mxu0 0
    %4272 = vmatpush2.bf16.msra.mxu0 0
    %4273 = vmatprep.subr.bf16.mxu0 0
    %4274 = vmatpush2.bf16.msra.mxu0 0
    %4275 = vmatprep.subr.bf16.mxu0 0
    %4276 = vmatpush2.bf16.msra.mxu0 0
    %4277 = vmatprep.subr.bf16.mxu0 0
    %4278 = vmatpush2.bf16.msra.mxu0 0
    %4279 = vmatprep.subr.bf16.mxu0 0
    %4280 = vmatpush2.bf16.msra.mxu0 0
    %4281 = vmatprep.mubr.bf16.mxu0 0
    %4282 = vmatmul.mubr.bf16.gmra.mxu0 %v4226
    %v4283 = vpop.f32.mrf.mxu0
    %v4284 = vadd.f32 0.0, %v4283
    %v4285 = vpop.f32.mrf.mxu0
    %v4286 = vpop.f32.mrf.mxu0
    %v4287 = vadd.f32 0.0, %v4286
    %v4288 = vpop.f32.mrf.mxu0
    %4289 = vmatprep.mubr.bf16.mxu0 0
    %4290 = vmatmul.mubr.bf16.gmra.mxu0 %v4229
    %v4291 = vpop.f32.mrf.mxu0
    %v4292 = vadd.f32 0.0, %v4291
    %v4293 = vpop.f32.mrf.mxu0
    %v4294 = vpop.f32.mrf.mxu0
    %v4295 = vadd.f32 0.0, %v4294
    %v4296 = vpop.f32.mrf.mxu0
    %4297 = vmatprep.mubr.bf16.mxu0 0
    %4298 = vmatmul.mubr.bf16.gmra.mxu0 %v4232
    %v4299 = vpop.f32.mrf.mxu0
    %v4300 = vadd.f32 0.0, %v4299
    %v4301 = vpop.f32.mrf.mxu0
    %v4302 = vpop.f32.mrf.mxu0
    %v4303 = vadd.f32 0.0, %v4302
    %v4304 = vpop.f32.mrf.mxu0
    %4305 = vmatprep.mubr.bf16.mxu0 0
    %4306 = vmatmul.mubr.bf16.gmra.mxu0 %v4235
    %v4307 = vpop.f32.mrf.mxu0
    %v4308 = vadd.f32 0.0, %v4307
    %v4309 = vpop.f32.mrf.mxu0
    %v4310 = vpop.f32.mrf.mxu0
    %v4311 = vadd.f32 0.0, %v4310
    %v4312 = vpop.f32.mrf.mxu0
    %4313 = vmatprep.mubr.bf16.mxu0 0
    %4314 = vmatmul.mubr.bf16.gmra.mxu0 %v4238
    %v4315 = vpop.f32.mrf.mxu0
    %v4316 = vadd.f32 0.0, %v4315
    %v4317 = vpop.f32.mrf.mxu0
    %v4318 = vpop.f32.mrf.mxu0
    %v4319 = vadd.f32 0.0, %v4318
    %v4320 = vpop.f32.mrf.mxu0
    %4321 = vmatprep.mubr.bf16.mxu0 0
    %4322 = vmatmul.mubr.bf16.gmra.mxu0 %v4241
    %v4323 = vpop.f32.mrf.mxu0
    %v4324 = vadd.f32 0.0, %v4323
    %v4325 = vpop.f32.mrf.mxu0
    %v4326 = vpop.f32.mrf.mxu0
    %v4327 = vadd.f32 0.0, %v4326
    %v4328 = vpop.f32.mrf.mxu0
    %4329 = vmatprep.mubr.bf16.mxu0 0
    %4330 = vmatmul.mubr.bf16.gmra.mxu0 %v4244
    %v4331 = vpop.f32.mrf.mxu0
    %v4332 = vadd.f32 0.0, %v4331
    %v4333 = vpop.f32.mrf.mxu0
    %v4334 = vpop.f32.mrf.mxu0
    %v4335 = vadd.f32 0.0, %v4334
    %v4336 = vpop.f32.mrf.mxu0
    %4337 = vmatprep.mubr.bf16.mxu0 0
    %4338 = vmatmul.mubr.bf16.gmra.mxu0 %v4247
    %v4339 = vpop.f32.mrf.mxu0
    %v4340 = vadd.f32 0.0, %v4339
    %v4341 = vpop.f32.mrf.mxu0
    %v4342 = vpop.f32.mrf.mxu0
    %v4343 = vadd.f32 0.0, %v4342
    %v4344 = vpop.f32.mrf.mxu0
    %4345 = vdwg.mxu0
    %v4346 = vld [vmem:[%s5 + $0x7] sm:$0x1]
    %v4347 = vlaneseq
    %v4348 = vshrl.u32 %v4347, 7
    %v4349 = vsub.s32 0, %v4348
    %v4350 = vrot.slane %v4346, %v4349
    %v4351 = vmul.f32 %v4284, %v4350
    %v4352 = vmul.f32 %v4287, %v4350
    %v4353 = vmul.f32 %v4292, %v4350
    %v4354 = vmul.f32 %v4295, %v4350
    %v4355 = vmul.f32 %v4300, %v4350
    %v4356 = vmul.f32 %v4303, %v4350
    %v4357 = vmul.f32 %v4308, %v4350
    %v4358 = vmul.f32 %v4311, %v4350
    %v4359 = vmul.f32 %v4316, %v4350
    %v4360 = vmul.f32 %v4319, %v4350
    %v4361 = vmul.f32 %v4324, %v4350
    %v4362 = vmul.f32 %v4327, %v4350
    %v4363 = vmul.f32 %v4332, %v4350
    %v4364 = vmul.f32 %v4335, %v4350
    %v4365 = vmul.f32 %v4340, %v4350
    %v4366 = vmul.f32 %v4343, %v4350
    %v4367 = vld [vmem:[%s5 + $0x8] sm:$0x1]
    %v4368 = vlaneseq
    %v4369 = vshrl.u32 %v4368, 7
    %v4370 = vsub.s32 0, %v4369
    %v4371 = vrot.slane %v4367, %v4370
    %v4372 = vadd.f32 %v4351, %v4371
    %v4373 = vadd.f32 %v4352, %v4371
    %v4374 = vadd.f32 %v4353, %v4371
    %v4375 = vadd.f32 %v4354, %v4371
    %v4376 = vadd.f32 %v4355, %v4371
    %v4377 = vadd.f32 %v4356, %v4371
    %v4378 = vadd.f32 %v4357, %v4371
    %v4379 = vadd.f32 %v4358, %v4371
    %v4380 = vadd.f32 %v4359, %v4371
    %v4381 = vadd.f32 %v4360, %v4371
    %v4382 = vadd.f32 %v4361, %v4371
    %v4383 = vadd.f32 %v4362, %v4371
    %v4384 = vadd.f32 %v4363, %v4371
    %v4385 = vadd.f32 %v4364, %v4371
    %v4386 = vadd.f32 %v4365, %v4371
    %v4387 = vadd.f32 %v4366, %v4371
    %v4388 = vadd.f32 %v4372, %v52
    %v4389 = vadd.f32 %v4373, %v53
    %v4390 = vadd.f32 %v4374, %v54
    %v4391 = vadd.f32 %v4375, %v55
    %v4392 = vadd.f32 %v4376, %v56
    %v4393 = vadd.f32 %v4377, %v57
    %v4394 = vadd.f32 %v4378, %v58
    %v4395 = vadd.f32 %v4379, %v59
    %v4396 = vadd.f32 %v4380, %v60
    %v4397 = vadd.f32 %v4381, %v61
    %v4398 = vadd.f32 %v4382, %v62
    %v4399 = vadd.f32 %v4383, %v63
    %v4400 = vadd.f32 %v4384, %v64
    %v4401 = vadd.f32 %v4385, %v65
    %v4402 = vadd.f32 %v4386, %v66
    %v4403 = vadd.f32 %v4387, %v67
    %v4404 = vmax.f32 %v4388, 0.0
    %v4405 = vmax.f32 %v4389, 0.0
    %v4406 = vmax.f32 %v4390, 0.0
    %v4407 = vmax.f32 %v4391, 0.0
    %v4408 = vmax.f32 %v4392, 0.0
    %v4409 = vmax.f32 %v4393, 0.0
    %v4410 = vmax.f32 %v4394, 0.0
    %v4411 = vmax.f32 %v4395, 0.0
    %v4412 = vmax.f32 %v4396, 0.0
    %v4413 = vmax.f32 %v4397, 0.0
    %v4414 = vmax.f32 %v4398, 0.0
    %v4415 = vmax.f32 %v4399, 0.0
    %v4416 = vmax.f32 %v4400, 0.0
    %v4417 = vmax.f32 %v4401, 0.0
    %v4418 = vmax.f32 %v4402, 0.0
    %v4419 = vmax.f32 %v4403, 0.0
    %4420 = vst.msk [vmem:[%s6] sm:$0xff] %vm97, %v4404
    %4421 = vst.msk [vmem:[%s6 + $0x8] sm:$0xff] %vm97, %v4405
    %4422 = vst.msk [vmem:[%s6 + $0x10] sm:$0xff] %vm97, %v4406
    %4423 = vst.msk [vmem:[%s6 + $0x18] sm:$0xff] %vm97, %v4407
    %4424 = vst.msk [vmem:[%s6 + $0x20] sm:$0xff] %vm97, %v4408
    %4425 = vst.msk [vmem:[%s6 + $0x28] sm:$0xff] %vm97, %v4409
    %4426 = vst.msk [vmem:[%s6 + $0x30] sm:$0xff] %vm97, %v4410
    %4427 = vst.msk [vmem:[%s6 + $0x38] sm:$0xff] %vm97, %v4411
    %4428 = vst.msk [vmem:[%s6 + $0x40] sm:$0xff] %vm97, %v4412
    %4429 = vst.msk [vmem:[%s6 + $0x48] sm:$0xff] %vm97, %v4413
    %4430 = vst.msk [vmem:[%s6 + $0x50] sm:$0xff] %vm97, %v4414
    %4431 = vst.msk [vmem:[%s6 + $0x58] sm:$0xff] %vm97, %v4415
    %4432 = vst.msk [vmem:[%s6 + $0x60] sm:$0xff] %vm97, %v4416
    %4433 = vst.msk [vmem:[%s6 + $0x68] sm:$0xff] %vm97, %v4417
    %4434 = vst.msk [vmem:[%s6 + $0x70] sm:$0xff] %vm97, %v4418
    %4435 = vst.msk [vmem:[%s6 + $0x78] sm:$0xff] %vm97, %v4419
    // Predicated region
    $region34: #{tpu_custom_call.1} parent=1 // pred_check
      _
    $region35: #{tpu_custom_call.1} parent=1 // pred_check_branch
      %4437 = sbr.rel (0) target = $region37
    $region36: #{tpu_custom_call.1} parent=1 // pred_region
      _
    $region37: #{tpu_custom_call.1} parent=1 // pred_fallthru
      _
    // Predicated region
    $region38: #{tpu_custom_call.1} parent=1 // pred_check
      _
    $region39: #{tpu_custom_call.1} parent=1 // pred_check_branch
      %4439 = sbr.rel (0) target = $region41
    $region40: #{tpu_custom_call.1} parent=1 // pred_region
      _
    $region41: #{tpu_custom_call.1} parent=1 // pred_fallthru
      _
    %4440 = vsyncpa [#allocation4], 1
    %4441 = vsyncpa [#allocation6], 1

</llo_original>
